<compile_context>
chip_gen: v7x
topology: tpu7x:2x2x1
jax: 0.10.0
libtpu: 0.0.40
codegen_flags: <defaults>
</compile_context>

<pallas_src>
import jax
import jax.numpy as jnp
from jax import lax
from jax.experimental import pallas as pl
from jax.experimental.pallas import tpu as pltpu


def _round_up(x, m):
    return (x + m - 1) // m * m


def _pick_tile_h(H, tile_h):
    """Largest multiple of 8 (<= min(tile_h, H)) that divides H; fallback: whole image."""
    cand = min(tile_h, H)
    cand -= cand % 8
    while cand >= 8:
        if H % cand == 0:
            return cand
        cand -= 8
    return H


def _vmem_limit_bytes(H, W, Cp, TH):
    """Scoped-VMEM budget derived from the tile math (with generous headroom)."""
    bpe = 2                                                  # bf16
    img = 2 * (H + 4) * (W + 2) * Cp * bpe                   # input block, double-buffered
    outb = 2 * TH * W * Cp * bpe                             # output block, double-buffered
    wts = 2 * 2 * 3 * (3 * Cp) * Cp * bpe                    # w1 + w2, double-buffered
    slabs = ((TH + 4) + (TH + 2)) * W * 3 * Cp * bpe         # dx-fused scratch slabs
    accs = ((TH + 2) + TH) * W * Cp * 4 * 2                  # f32 accumulators / temporaries
    need = img + outb + wts + slabs + accs
    return int(min(64 * 1024 * 1024, max(2 * need + (8 << 20), 32 << 20)))


def _residual_block_kernel(xpad_ref, w1_ref, s1_ref, b1_ref, alpha_ref,
                           w2_ref, s2_ref, b2_ref, o_ref,
                           slab1_ref, slab2_ref):
    # xpad_ref  : (H+4, W+2, Cp) bf16   padded image (resident across row blocks)
    # w1/w2     : (3, 3*Cp, Cp) bf16    dx-fused HWIO conv weights (zero-padded channels)
    # s*/b*     : (1, Cp) f32           folded conv-bias + eval-mode BN scale / bias
    # alpha     : (1,) f32 in SMEM      PReLU slope
    # o_ref     : (TH, W, Cp) bf16      output row block
    # slab1_ref : (TH+4, W, 3*Cp) bf16  dx-fused conv1 input slab (scratch)
    # slab2_ref : (TH+2, W, 3*Cp) bf16  dx-fused conv2 input slab (scratch)
    TH, W, Cp = o_ref.shape
    K = 3 * Cp
    hb = pl.program_id(1)
    nh = pl.num_programs(1)
    row0 = hb * TH
    if TH % 8 == 0:                       # static: aligned dynamic row slices
        row0 = pl.multiple_of(row0, 8)

    # ---- build the dx-fused conv1 slab (3 shifted copies) -------------------------
    for dx in range(3):
        slab1_ref[:, :, dx * Cp:(dx + 1) * Cp] = \
            xpad_ref[pl.ds(row0, TH + 4), dx:dx + W, :]

    # ---- conv1 over TH+2 rows (1-row halo for conv2): 3 deep matmuls (K = 3*Cp) ---
    M1 = (TH + 2) * W
    acc = jnp.zeros((M1, Cp), jnp.float32)
    for dy in range(3):
        a = slab1_ref[dy:dy + TH + 2, :, :].reshape(M1, K)     # contiguous row slice
        acc = acc + jnp.dot(a, w1_ref[dy], preferred_element_type=jnp.float32)

    # ---- BatchNorm1 (folded scale/bias) + PReLU in f32, one cast to bf16 ----------
    y = acc * s1_ref[...] + b1_ref[...]
    alpha = alpha_ref[0]                                       # scalar from SMEM
    y = jnp.where(y >= 0.0, y, alpha * y).astype(jnp.bfloat16).reshape(TH + 2, W, Cp)

    # ---- stage conv1 output directly in dx-fused layout (conv2's zero W-padding) --
    slab2_ref[:, :, Cp:2 * Cp] = y                             # dx = 1 (center)
    slab2_ref[:, 1:W, 0:Cp] = y[:, :W - 1, :]                  # dx = 0
    slab2_ref[:, 0:W - 1, 2 * Cp:3 * Cp] = y[:, 1:W, :]        # dx = 2
    zcol = jnp.zeros((TH + 2, 1, Cp), jnp.bfloat16)
    slab2_ref[:, 0:1, 0:Cp] = zcol                             # left image edge
    slab2_ref[:, W - 1:W, 2 * Cp:3 * Cp] = zcol                # right image edge

    @pl.when(hb == 0)
    def _():   # conv2 zero-padding row above the image
        slab2_ref[0:1, :, :] = jnp.zeros((1, W, K), jnp.bfloat16)

    @pl.when(hb == nh - 1)
    def _():   # conv2 zero-padding row below the image
        slab2_ref[TH + 1:TH + 2, :, :] = jnp.zeros((1, W, K), jnp.bfloat16)

    # ---- conv2 over the TH output rows: 3 deep matmuls -----------------------------
    M2 = TH * W
    acc2 = jnp.zeros((M2, Cp), jnp.float32)
    for dy in range(3):
        a = slab2_ref[dy:dy + TH, :, :].reshape(M2, K)
        acc2 = acc2 + jnp.dot(a, w2_ref[dy], preferred_element_type=jnp.float32)

    # ---- BatchNorm2 (folded) + residual add (read from the padded-input interior) --
    y2 = (acc2 * s2_ref[...] + b2_ref[...]).reshape(TH, W, Cp)
    xres = xpad_ref[pl.ds(row0 + 2, TH), 1:1 + W, :].astype(jnp.float32)
    o_ref[...] = (y2 + xres).astype(o_ref.dtype)


def residual_block_nhwc(x_nhwc, params, *, tile_h=32):
    N, H, W, C = x_nhwc.shape
    w1, s1, b1, alpha, w2, s2, b2 = params
    Cp = w1.shape[-1]
    TH = _pick_tile_h(H, tile_h)
    nh = H // TH

    # Single padded, bf16, lane-dense copy of x.  The residual is read from the
    # interior of the same buffer inside the kernel (no duplicate HBM read).
    x_pad = jnp.pad(x_nhwc, ((0, 0), (2, 2), (1, 1), (0, Cp - C))).astype(jnp.bfloat16)

    def bcast_spec(shape):
        zeros = (0,) * len(shape)
        return pl.BlockSpec(shape, lambda n, h: zeros)

    grid_spec = pltpu.PrefetchScalarGridSpec(
        num_scalar_prefetch=0,
        grid=(N, nh),
        in_specs=[
            # Full padded image per batch element: block index changes only with n,
            # so the HBM->VMEM DMA happens once per image and stays resident across
            # the inner row-block axis.
            pl.BlockSpec((None, H + 4, W + 2, Cp), lambda n, h: (n, 0, 0, 0)),
            bcast_spec((3, 3 * Cp, Cp)),   # w1 (dx-fused, bf16)
            bcast_spec((1, Cp)),           # s1
            bcast_spec((1, Cp)),           # b1
            pl.BlockSpec(memory_space=pltpu.MemorySpace.SMEM),   # PReLU alpha scalar
            bcast_spec((3, 3 * Cp, Cp)),   # w2 (dx-fused, bf16)
            bcast_spec((1, Cp)),           # s2
            bcast_spec((1, Cp)),           # b2
        ],
        out_specs=pl.BlockSpec((None, TH, W, Cp), lambda n, h: (n, h, 0, 0)),
        scratch_shapes=[
            pltpu.VMEM((TH + 4, W, 3 * Cp), jnp.bfloat16),   # conv1 dx-fused slab
            pltpu.VMEM((TH + 2, W, 3 * Cp), jnp.bfloat16),   # conv2 dx-fused slab
        ],
    )

    out = pl.pallas_call(
        _residual_block_kernel,
        out_shape=jax.ShapeDtypeStruct((N, H, W, Cp), jnp.bfloat16),
        grid_spec=grid_spec,
        compiler_params=pltpu.CompilerParams(
            # Both axes carry no cross-step state (scratch fully rewritten each step),
            # so both may be split across TensorCores (helps v7x even when N == 1).
            dimension_semantics=("parallel", "parallel"),
            vmem_limit_bytes=_vmem_limit_bytes(H, W, Cp, TH),
        ),
    )(x_pad, w1, s1, b1, alpha, w2, s2, b2)
    return out


def residual_block(x_nchw, params):
    """NCHW in / NCHW out, matching the PyTorch module.
    NOTE: in a full network, keep the padded NHWC bf16 tensor between layers instead of
    paying this slice + transpose per block."""
    C = x_nchw.shape[1]
    x_nhwc = jnp.transpose(x_nchw, (0, 2, 3, 1))
    out = residual_block_nhwc(x_nhwc, params)            # (N, H, W, Cp) bf16
    return jnp.transpose(out[..., :C], (0, 3, 1, 2))


def make_raw_params(key, cin, cout):
    ks = jax.random.split(key, 12)
    p = {}
    p["w1"] = jax.random.normal(ks[0], (cout, cin, 3, 3), jnp.float32) * 0.1   # OIHW
    p["bc1"] = jax.random.normal(ks[1], (cout,), jnp.float32) * 0.1
    p["gamma1"] = 1.0 + 0.1 * jax.random.normal(ks[2], (cout,), jnp.float32)
    p["beta1"] = 0.1 * jax.random.normal(ks[3], (cout,), jnp.float32)
    p["mean1"] = 0.1 * jax.random.normal(ks[4], (cout,), jnp.float32)
    p["var1"] = jax.random.uniform(ks[5], (cout,), jnp.float32, 0.5, 1.5)
    p["alpha"] = jnp.float32(0.25)                                             # PReLU default
    p["w2"] = jax.random.normal(ks[6], (cout, cout, 3, 3), jnp.float32) * 0.1  # OIHW
    p["bc2"] = jax.random.normal(ks[7], (cout,), jnp.float32) * 0.1
    p["gamma2"] = 1.0 + 0.1 * jax.random.normal(ks[8], (cout,), jnp.float32)
    p["beta2"] = 0.1 * jax.random.normal(ks[9], (cout,), jnp.float32)
    p["mean2"] = 0.1 * jax.random.normal(ks[10], (cout,), jnp.float32)
    p["var2"] = jax.random.uniform(ks[11], (cout,), jnp.float32, 0.5, 1.5)
    return p


def fold_params(p, c_pad, eps=1e-5):
    """Fold conv bias + eval-mode BN into per-channel scale/bias; OIHW -> dx-fused
    (3, 3*Cp, Cp) bf16 weights with channels zero-padded to the lane-dense width c_pad."""
    cout, cin = p["w1"].shape[0], p["w1"].shape[1]
    s1 = p["gamma1"] / jnp.sqrt(p["var1"] + eps)
    b1 = (p["bc1"] - p["mean1"]) * s1 + p["beta1"]
    s2 = p["gamma2"] / jnp.sqrt(p["var2"] + eps)
    b2 = (p["bc2"] - p["mean2"]) * s2 + p["beta2"]
    w1 = jnp.transpose(p["w1"], (2, 3, 1, 0))   # HWIO
    w2 = jnp.transpose(p["w2"], (2, 3, 1, 0))
    w1p = jnp.zeros((3, 3, c_pad, c_pad), jnp.float32).at[:, :, :cin, :cout].set(w1)
    w2p = jnp.zeros((3, 3, c_pad, c_pad), jnp.float32).at[:, :, :cout, :cout].set(w2)
    # dx-fused layout: row index = dx * Cp + input_channel, matching the slab lanes.
    w1f = w1p.reshape(3, 3 * c_pad, c_pad).astype(jnp.bfloat16)
    w2f = w2p.reshape(3, 3 * c_pad, c_pad).astype(jnp.bfloat16)

    def padvec(v):
        return jnp.zeros((1, c_pad), jnp.float32).at[0, :cout].set(v)

    return (w1f, padvec(s1), padvec(b1),
            jnp.asarray(p["alpha"], jnp.float32).reshape(1),
            w2f, padvec(s2), padvec(b2))


def reference_nchw(x_nchw, p, eps=1e-5, matmul_dtype=jnp.float32, bf16_io=False):
    """Pure-JAX reference with the exact (unfolded) PyTorch math, eval-mode BN.
    matmul_dtype=bfloat16 + bf16_io=True mirrors the kernel's bf16 storage / MXU
    precision (f32 accumulation)."""
    x = jnp.transpose(x_nchw, (0, 2, 3, 1))  # NHWC
    if bf16_io:
        x = x.astype(jnp.bfloat16).astype(jnp.float32)
    dn = ("NHWC", "HWIO", "NHWC")
    w1 = jnp.transpose(p["w1"], (2, 3, 1, 0)).astype(matmul_dtype)
    w2 = jnp.transpose(p["w2"], (2, 3, 1, 0)).astype(matmul_dtype)
    y = lax.conv_general_dilated(x.astype(matmul_dtype), w1, (1, 1), "SAME",
                                 dimension_numbers=dn,
                                 preferred_element_type=jnp.float32) + p["bc1"]
    y = (y - p["mean1"]) / jnp.sqrt(p["var1"] + eps) * p["gamma1"] + p["beta1"]
    y = jnp.where(y >= 0, y, p["alpha"] * y)
    y2 = lax.conv_general_dilated(y.astype(matmul_dtype), w2, (1, 1), "SAME",
                                  dimension_numbers=dn,
                                  preferred_element_type=jnp.float32) + p["bc2"]
    y2 = (y2 - p["mean2"]) / jnp.sqrt(p["var2"] + eps) * p["gamma2"] + p["beta2"]
    out = y2 + x
    return jnp.transpose(out, (0, 3, 1, 2))


if __name__ == "__main__":
    N, C, H, W = 2, 4, 16, 16   # residual add requires input_dim == output_dim
    key = jax.random.PRNGKey(0)
    kx, kp = jax.random.split(key)
    x = jax.random.normal(kx, (N, C, H, W), jnp.float32)

    raw = make_raw_params(kp, C, C)
    c_pad = _round_up(max(C, 1), 128)            # lane-dense channel width (>= 128)
    kernel_params = fold_params(raw, c_pad)

    out = jax.block_until_ready(residual_block(x, kernel_params))
    assert out.shape == (N, C, H, W)
    out = out.astype(jnp.float32)

    # Matched-precision reference (bf16 storage / matmul operands, f32 accumulation).
    # Tolerance covers the final bf16 output rounding of the kernel.
    ref_bf16 = reference_nchw(x, raw, matmul_dtype=jnp.bfloat16, bf16_io=True)
    err_matched = float(jnp.max(jnp.abs(out - ref_bf16)))
    assert err_matched < 0.1, f"mismatch vs bf16-matched reference: {err_matched}"

    # Sanity bound vs the full-f32 reference (bf16 rounding dominates the error).
    ref_f32 = reference_nchw(x, raw, matmul_dtype=jnp.float32)
    err_f32 = float(jnp.max(jnp.abs(out - ref_f32)))
    assert err_f32 < 0.5, f"mismatch vs f32 reference too large: {err_f32}"

    print("KERNEL_OK")
</pallas_src>

<mosaic_0001>
module attributes {stable_mosaic.version = 11 : i64} {
  func.func @_residual_block_kernel(%arg0: i32, %arg1: i32, %arg2: memref<1x20x18x128xbf16, #tpu.memory_space<vmem>>, %arg3: memref<3x384x128xbf16, #tpu.memory_space<vmem>>, %arg4: memref<1x128xf32, #tpu.memory_space<vmem>>, %arg5: memref<1x128xf32, #tpu.memory_space<vmem>>, %arg6: memref<1xf32, #tpu.memory_space<smem>>, %arg7: memref<3x384x128xbf16, #tpu.memory_space<vmem>>, %arg8: memref<1x128xf32, #tpu.memory_space<vmem>>, %arg9: memref<1x128xf32, #tpu.memory_space<vmem>>, %arg10: memref<1x16x16x128xbf16, #tpu.memory_space<vmem>>, %arg11: memref<20x16x384xbf16, #tpu.memory_space<vmem>>, %arg12: memref<18x16x384xbf16, #tpu.memory_space<vmem>>) attributes {dimension_semantics = [#tpu.dimension_semantics<parallel>, #tpu.dimension_semantics<parallel>], iteration_bounds = array<i64: 2, 1>, scalar_prefetch = 0 : i64, scratch_operands = 2 : i64, tpu.core_type = #tpu.core_type<tc>, window_params = [{transform_indices = @transform_0, window_bounds = array<i64: 1, 20, 18, 128>}, {pipeline_mode = #tpu.pipeline_mode<synchronous>, transform_indices = @transform_1, window_bounds = array<i64: 3, 384, 128>}, {pipeline_mode = #tpu.pipeline_mode<synchronous>, transform_indices = @transform_2, window_bounds = array<i64: 1, 128>}, {pipeline_mode = #tpu.pipeline_mode<synchronous>, transform_indices = @transform_3, window_bounds = array<i64: 1, 128>}, {transform_indices = @transform_4, window_bounds = array<i64: 1>}, {pipeline_mode = #tpu.pipeline_mode<synchronous>, transform_indices = @transform_5, window_bounds = array<i64: 3, 384, 128>}, {pipeline_mode = #tpu.pipeline_mode<synchronous>, transform_indices = @transform_6, window_bounds = array<i64: 1, 128>}, {pipeline_mode = #tpu.pipeline_mode<synchronous>, transform_indices = @transform_7, window_bounds = array<i64: 1, 128>}, {transform_indices = @transform_8, window_bounds = array<i64: 1, 16, 16, 128>}]} {
    %c16_i32 = arith.constant 16 : i32
    %0 = arith.muli %arg1, %c16_i32 : i32
    %1 = tpu.assume_multiple %0, 8 : i32
    %c0 = arith.constant 0 : index
    %2 = arith.index_cast %1 : i32 to index
    %c0_0 = arith.constant 0 : index
    %c0_1 = arith.constant 0 : index
    %3 = vector.load %arg2[%c0, %2, %c0_0, %c0_1] : memref<1x20x18x128xbf16, #tpu.memory_space<vmem>>, vector<1x20x16x128xbf16>
    %4 = vector.shape_cast %3 : vector<1x20x16x128xbf16> to vector<20x16x128xbf16>
    %c0_2 = arith.constant 0 : index
    %c0_3 = arith.constant 0 : index
    %c0_4 = arith.constant 0 : index
    %5 = vector.load %arg11[%c0_2, %c0_3, %c0_4] : memref<20x16x384xbf16, #tpu.memory_space<vmem>>, vector<20x16x128xbf16>
    tpu.vector_store %arg11[%c0_2, %c0_3, %c0_4], %4 {strides = array<i32>} : memref<20x16x384xbf16, #tpu.memory_space<vmem>>, vector<20x16x128xbf16>,
    %c0_5 = arith.constant 0 : index
    %6 = arith.index_cast %1 : i32 to index
    %c1 = arith.constant 1 : index
    %c0_6 = arith.constant 0 : index
    %7 = vector.load %arg2[%c0_5, %6, %c1, %c0_6] : memref<1x20x18x128xbf16, #tpu.memory_space<vmem>>, vector<1x20x16x128xbf16>
    %8 = vector.shape_cast %7 : vector<1x20x16x128xbf16> to vector<20x16x128xbf16>
    %c0_7 = arith.constant 0 : index
    %c0_8 = arith.constant 0 : index
    %c128 = arith.constant 128 : index
    %9 = vector.load %arg11[%c0_7, %c0_8, %c128] : memref<20x16x384xbf16, #tpu.memory_space<vmem>>, vector<20x16x128xbf16>
    tpu.vector_store %arg11[%c0_7, %c0_8, %c128], %8 {strides = array<i32>} : memref<20x16x384xbf16, #tpu.memory_space<vmem>>, vector<20x16x128xbf16>,
    %c0_9 = arith.constant 0 : index
    %10 = arith.index_cast %1 : i32 to index
    %c2 = arith.constant 2 : index
    %c0_10 = arith.constant 0 : index
    %11 = vector.load %arg2[%c0_9, %10, %c2, %c0_10] : memref<1x20x18x128xbf16, #tpu.memory_space<vmem>>, vector<1x20x16x128xbf16>
    %12 = vector.shape_cast %11 : vector<1x20x16x128xbf16> to vector<20x16x128xbf16>
    %c0_11 = arith.constant 0 : index
    %c0_12 = arith.constant 0 : index
    %c256 = arith.constant 256 : index
    %13 = vector.load %arg11[%c0_11, %c0_12, %c256] : memref<20x16x384xbf16, #tpu.memory_space<vmem>>, vector<20x16x128xbf16>
    tpu.vector_store %arg11[%c0_11, %c0_12, %c256], %12 {strides = array<i32>} : memref<20x16x384xbf16, #tpu.memory_space<vmem>>, vector<20x16x128xbf16>,
    %cst = arith.constant 0.000000e+00 : f32
    %14 = vector.broadcast %cst : f32 to vector<288x128xf32>
    %c0_13 = arith.constant 0 : index
    %c0_14 = arith.constant 0 : index
    %c0_15 = arith.constant 0 : index
    %15 = vector.load %arg11[%c0_13, %c0_14, %c0_15] : memref<20x16x384xbf16, #tpu.memory_space<vmem>>, vector<18x16x384xbf16>
    %16 = vector.shape_cast %15 : vector<18x16x384xbf16> to vector<288x384xbf16>
    %c0_16 = arith.constant 0 : index
    %c0_17 = arith.constant 0 : index
    %c0_18 = arith.constant 0 : index
    %17 = vector.load %arg3[%c0_16, %c0_17, %c0_18] : memref<3x384x128xbf16, #tpu.memory_space<vmem>>, vector<1x384x128xbf16>
    %18 = vector.shape_cast %17 : vector<1x384x128xbf16> to vector<384x128xbf16>
    %cst_19 = arith.constant dense<0.000000e+00> : vector<288x128xf32>
    %19 = tpu.matmul %16, %18, %cst_19 {dimension_numbers = #tpu.dot_dimension_numbers<[1], [0], [0], [1], [0, 0, 1, 1], [], []>} : vector<288x384xbf16>, vector<384x128xbf16>, vector<288x128xf32> -> vector<288x128xf32>
    %20 = arith.addf %14, %19 : vector<288x128xf32>
    %c1_20 = arith.constant 1 : index
    %c0_21 = arith.constant 0 : index
    %c0_22 = arith.constant 0 : index
    %21 = vector.load %arg11[%c1_20, %c0_21, %c0_22] : memref<20x16x384xbf16, #tpu.memory_space<vmem>>, vector<18x16x384xbf16>
    %22 = vector.shape_cast %21 : vector<18x16x384xbf16> to vector<288x384xbf16>
    %c1_23 = arith.constant 1 : index
    %c0_24 = arith.constant 0 : index
    %c0_25 = arith.constant 0 : index
    %23 = vector.load %arg3[%c1_23, %c0_24, %c0_25] : memref<3x384x128xbf16, #tpu.memory_space<vmem>>, vector<1x384x128xbf16>
    %24 = vector.shape_cast %23 : vector<1x384x128xbf16> to vector<384x128xbf16>
    %cst_26 = arith.constant dense<0.000000e+00> : vector<288x128xf32>
    %25 = tpu.matmul %22, %24, %cst_26 {dimension_numbers = #tpu.dot_dimension_numbers<[1], [0], [0], [1], [0, 0, 1, 1], [], []>} : vector<288x384xbf16>, vector<384x128xbf16>, vector<288x128xf32> -> vector<288x128xf32>
    %26 = arith.addf %20, %25 : vector<288x128xf32>
    %c2_27 = arith.constant 2 : index
    %c0_28 = arith.constant 0 : index
    %c0_29 = arith.constant 0 : index
    %27 = vector.load %arg11[%c2_27, %c0_28, %c0_29] : memref<20x16x384xbf16, #tpu.memory_space<vmem>>, vector<18x16x384xbf16>
    %28 = vector.shape_cast %27 : vector<18x16x384xbf16> to vector<288x384xbf16>
    %c2_30 = arith.constant 2 : index
    %c0_31 = arith.constant 0 : index
    %c0_32 = arith.constant 0 : index
    %29 = vector.load %arg3[%c2_30, %c0_31, %c0_32] : memref<3x384x128xbf16, #tpu.memory_space<vmem>>, vector<1x384x128xbf16>
    %30 = vector.shape_cast %29 : vector<1x384x128xbf16> to vector<384x128xbf16>
    %cst_33 = arith.constant dense<0.000000e+00> : vector<288x128xf32>
    %31 = tpu.matmul %28, %30, %cst_33 {dimension_numbers = #tpu.dot_dimension_numbers<[1], [0], [0], [1], [0, 0, 1, 1], [], []>} : vector<288x384xbf16>, vector<384x128xbf16>, vector<288x128xf32> -> vector<288x128xf32>
    %32 = arith.addf %26, %31 : vector<288x128xf32>
    %c0_34 = arith.constant 0 : index
    %c0_35 = arith.constant 0 : index
    %33 = vector.load %arg4[%c0_34, %c0_35] : memref<1x128xf32, #tpu.memory_space<vmem>>, vector<1x128xf32>
    %34 = vector.broadcast %33 : vector<1x128xf32> to vector<288x128xf32>
    %35 = arith.mulf %32, %34 : vector<288x128xf32>
    %c0_36 = arith.constant 0 : index
    %c0_37 = arith.constant 0 : index
    %36 = vector.load %arg5[%c0_36, %c0_37] : memref<1x128xf32, #tpu.memory_space<vmem>>, vector<1x128xf32>
    %37 = vector.broadcast %36 : vector<1x128xf32> to vector<288x128xf32>
    %38 = arith.addf %35, %37 : vector<288x128xf32>
    %c0_38 = arith.constant 0 : index
    %39 = memref.load %arg6[%c0_38] : memref<1xf32, #tpu.memory_space<smem>>
    %cst_39 = arith.constant 0.000000e+00 : f32
    %40 = vector.broadcast %cst_39 : f32 to vector<288x128xf32>
    %41 = arith.cmpf oge, %38, %40 : vector<288x128xf32>
    %42 = vector.broadcast %39 : f32 to vector<288x128xf32>
    %43 = arith.mulf %42, %38 : vector<288x128xf32>
    %44 = arith.select %41, %38, %43 : vector<288x128xi1>, vector<288x128xf32>
    %45 = arith.truncf %44 : vector<288x128xf32> to vector<288x128xbf16>
    %46 = vector.shape_cast %45 : vector<288x128xbf16> to vector<18x16x128xbf16>
    %c0_40 = arith.constant 0 : index
    %c0_41 = arith.constant 0 : index
    %c128_42 = arith.constant 128 : index
    %47 = vector.load %arg12[%c0_40, %c0_41, %c128_42] : memref<18x16x384xbf16, #tpu.memory_space<vmem>>, vector<18x16x128xbf16>
    tpu.vector_store %arg12[%c0_40, %c0_41, %c128_42], %46 {strides = array<i32>} : memref<18x16x384xbf16, #tpu.memory_space<vmem>>, vector<18x16x128xbf16>,
    %48 = vector.extract_strided_slice %46 {offsets = [0, 0, 0], sizes = [18, 15, 128], strides = [1, 1, 1]} : vector<18x16x128xbf16> to vector<18x15x128xbf16>
    %c0_43 = arith.constant 0 : index
    %c1_44 = arith.constant 1 : index
    %c0_45 = arith.constant 0 : index
    %49 = vector.load %arg12[%c0_43, %c1_44, %c0_45] : memref<18x16x384xbf16, #tpu.memory_space<vmem>>, vector<18x15x128xbf16>
    tpu.vector_store %arg12[%c0_43, %c1_44, %c0_45], %48 {strides = array<i32>} : memref<18x16x384xbf16, #tpu.memory_space<vmem>>, vector<18x15x128xbf16>,
    %50 = vector.extract_strided_slice %46 {offsets = [0, 1, 0], sizes = [18, 15, 128], strides = [1, 1, 1]} : vector<18x16x128xbf16> to vector<18x15x128xbf16>
    %c0_46 = arith.constant 0 : index
    %c0_47 = arith.constant 0 : index
    %c256_48 = arith.constant 256 : index
    %51 = vector.load %arg12[%c0_46, %c0_47, %c256_48] : memref<18x16x384xbf16, #tpu.memory_space<vmem>>, vector<18x15x128xbf16>
    tpu.vector_store %arg12[%c0_46, %c0_47, %c256_48], %50 {strides = array<i32>} : memref<18x16x384xbf16, #tpu.memory_space<vmem>>, vector<18x15x128xbf16>,
    %cst_49 = arith.constant 0.000000e+00 : bf16
    %52 = vector.broadcast %cst_49 : bf16 to vector<18x1x128xbf16>
    %c0_50 = arith.constant 0 : index
    %c0_51 = arith.constant 0 : index
    %c0_52 = arith.constant 0 : index
    %53 = vector.load %arg12[%c0_50, %c0_51, %c0_52] : memref<18x16x384xbf16, #tpu.memory_space<vmem>>, vector<18x1x128xbf16>
    tpu.vector_store %arg12[%c0_50, %c0_51, %c0_52], %52 {strides = array<i32>} : memref<18x16x384xbf16, #tpu.memory_space<vmem>>, vector<18x1x128xbf16>,
    %c0_53 = arith.constant 0 : index
    %c15 = arith.constant 15 : index
    %c256_54 = arith.constant 256 : index
    %54 = vector.load %arg12[%c0_53, %c15, %c256_54] : memref<18x16x384xbf16, #tpu.memory_space<vmem>>, vector<18x1x128xbf16>
    tpu.vector_store %arg12[%c0_53, %c15, %c256_54], %52 {strides = array<i32>} : memref<18x16x384xbf16, #tpu.memory_space<vmem>>, vector<18x1x128xbf16>,
    %c0_i32 = arith.constant 0 : i32
    %55 = arith.cmpi eq, %arg1, %c0_i32 : i32
    %56 = arith.extui %55 : i1 to i32
    %c0_i32_55 = arith.constant 0 : i32
    %57 = arith.cmpi ne, %56, %c0_i32_55 : i32
    scf.if %57 {
      %cst_91 = arith.constant 0.000000e+00 : bf16
      %97 = vector.broadcast %cst_91 : bf16 to vector<1x16x384xbf16>
      %c0_92 = arith.constant 0 : index
      %c0_93 = arith.constant 0 : index
      %c0_94 = arith.constant 0 : index
      %98 = vector.load %arg12[%c0_92, %c0_93, %c0_94] : memref<18x16x384xbf16, #tpu.memory_space<vmem>>, vector<1x16x384xbf16>
      tpu.vector_store %arg12[%c0_92, %c0_93, %c0_94], %97 {strides = array<i32>} : memref<18x16x384xbf16, #tpu.memory_space<vmem>>, vector<1x16x384xbf16>,
    } else {
    }
    %c0_i32_56 = arith.constant 0 : i32
    %58 = arith.cmpi eq, %arg1, %c0_i32_56 : i32
    %59 = arith.extui %58 : i1 to i32
    %c0_i32_57 = arith.constant 0 : i32
    %60 = arith.cmpi ne, %59, %c0_i32_57 : i32
    scf.if %60 {
      %cst_91 = arith.constant 0.000000e+00 : bf16
      %97 = vector.broadcast %cst_91 : bf16 to vector<1x16x384xbf16>
      %c17 = arith.constant 17 : index
      %c0_92 = arith.constant 0 : index
      %c0_93 = arith.constant 0 : index
      %98 = vector.load %arg12[%c17, %c0_92, %c0_93] : memref<18x16x384xbf16, #tpu.memory_space<vmem>>, vector<1x16x384xbf16>
      tpu.vector_store %arg12[%c17, %c0_92, %c0_93], %97 {strides = array<i32>} : memref<18x16x384xbf16, #tpu.memory_space<vmem>>, vector<1x16x384xbf16>,
    } else {
    }
    %cst_58 = arith.constant 0.000000e+00 : f32
    %61 = vector.broadcast %cst_58 : f32 to vector<256x128xf32>
    %c0_59 = arith.constant 0 : index
    %c0_60 = arith.constant 0 : index
    %c0_61 = arith.constant 0 : index
    %62 = vector.load %arg12[%c0_59, %c0_60, %c0_61] : memref<18x16x384xbf16, #tpu.memory_space<vmem>>, vector<16x16x384xbf16>
    %63 = vector.shape_cast %62 : vector<16x16x384xbf16> to vector<256x384xbf16>
    %c0_62 = arith.constant 0 : index
    %c0_63 = arith.constant 0 : index
    %c0_64 = arith.constant 0 : index
    %64 = vector.load %arg7[%c0_62, %c0_63, %c0_64] : memref<3x384x128xbf16, #tpu.memory_space<vmem>>, vector<1x384x128xbf16>
    %65 = vector.shape_cast %64 : vector<1x384x128xbf16> to vector<384x128xbf16>
    %cst_65 = arith.constant dense<0.000000e+00> : vector<256x128xf32>
    %66 = tpu.matmul %63, %65, %cst_65 {dimension_numbers = #tpu.dot_dimension_numbers<[1], [0], [0], [1], [0, 0, 1, 1], [], []>} : vector<256x384xbf16>, vector<384x128xbf16>, vector<256x128xf32> -> vector<256x128xf32>
    %67 = arith.addf %61, %66 : vector<256x128xf32>
    %c1_66 = arith.constant 1 : index
    %c0_67 = arith.constant 0 : index
    %c0_68 = arith.constant 0 : index
    %68 = vector.load %arg12[%c1_66, %c0_67, %c0_68] : memref<18x16x384xbf16, #tpu.memory_space<vmem>>, vector<16x16x384xbf16>
    %69 = vector.shape_cast %68 : vector<16x16x384xbf16> to vector<256x384xbf16>
    %c1_69 = arith.constant 1 : index
    %c0_70 = arith.constant 0 : index
    %c0_71 = arith.constant 0 : index
    %70 = vector.load %arg7[%c1_69, %c0_70, %c0_71] : memref<3x384x128xbf16, #tpu.memory_space<vmem>>, vector<1x384x128xbf16>
    %71 = vector.shape_cast %70 : vector<1x384x128xbf16> to vector<384x128xbf16>
    %cst_72 = arith.constant dense<0.000000e+00> : vector<256x128xf32>
    %72 = tpu.matmul %69, %71, %cst_72 {dimension_numbers = #tpu.dot_dimension_numbers<[1], [0], [0], [1], [0, 0, 1, 1], [], []>} : vector<256x384xbf16>, vector<384x128xbf16>, vector<256x128xf32> -> vector<256x128xf32>
    %73 = arith.addf %67, %72 : vector<256x128xf32>
    %c2_73 = arith.constant 2 : index
    %c0_74 = arith.constant 0 : index
    %c0_75 = arith.constant 0 : index
    %74 = vector.load %arg12[%c2_73, %c0_74, %c0_75] : memref<18x16x384xbf16, #tpu.memory_space<vmem>>, vector<16x16x384xbf16>
    %75 = vector.shape_cast %74 : vector<16x16x384xbf16> to vector<256x384xbf16>
    %c2_76 = arith.constant 2 : index
    %c0_77 = arith.constant 0 : index
    %c0_78 = arith.constant 0 : index
    %76 = vector.load %arg7[%c2_76, %c0_77, %c0_78] : memref<3x384x128xbf16, #tpu.memory_space<vmem>>, vector<1x384x128xbf16>
    %77 = vector.shape_cast %76 : vector<1x384x128xbf16> to vector<384x128xbf16>
    %cst_79 = arith.constant dense<0.000000e+00> : vector<256x128xf32>
    %78 = tpu.matmul %75, %77, %cst_79 {dimension_numbers = #tpu.dot_dimension_numbers<[1], [0], [0], [1], [0, 0, 1, 1], [], []>} : vector<256x384xbf16>, vector<384x128xbf16>, vector<256x128xf32> -> vector<256x128xf32>
    %79 = arith.addf %73, %78 : vector<256x128xf32>
    %c0_80 = arith.constant 0 : index
    %c0_81 = arith.constant 0 : index
    %80 = vector.load %arg8[%c0_80, %c0_81] : memref<1x128xf32, #tpu.memory_space<vmem>>, vector<1x128xf32>
    %81 = vector.broadcast %80 : vector<1x128xf32> to vector<256x128xf32>
    %82 = arith.mulf %79, %81 : vector<256x128xf32>
    %c0_82 = arith.constant 0 : index
    %c0_83 = arith.constant 0 : index
    %83 = vector.load %arg9[%c0_82, %c0_83] : memref<1x128xf32, #tpu.memory_space<vmem>>, vector<1x128xf32>
    %84 = vector.broadcast %83 : vector<1x128xf32> to vector<256x128xf32>
    %85 = arith.addf %82, %84 : vector<256x128xf32>
    %86 = vector.shape_cast %85 : vector<256x128xf32> to vector<16x16x128xf32>
    %c2_i32 = arith.constant 2 : i32
    %87 = arith.addi %1, %c2_i32 : i32
    %c0_84 = arith.constant 0 : index
    %88 = arith.index_cast %87 : i32 to index
    %c1_85 = arith.constant 1 : index
    %c0_86 = arith.constant 0 : index
    %89 = vector.load %arg2[%c0_84, %88, %c1_85, %c0_86] : memref<1x20x18x128xbf16, #tpu.memory_space<vmem>>, vector<1x16x16x128xbf16>
    %90 = vector.shape_cast %89 : vector<1x16x16x128xbf16> to vector<16x16x128xbf16>
    %91 = arith.extf %90 : vector<16x16x128xbf16> to vector<16x16x128xf32>
    %92 = arith.addf %86, %91 : vector<16x16x128xf32>
    %93 = arith.truncf %92 : vector<16x16x128xf32> to vector<16x16x128xbf16>
    %c0_87 = arith.constant 0 : index
    %c0_88 = arith.constant 0 : index
    %c0_89 = arith.constant 0 : index
    %c0_90 = arith.constant 0 : index
    %94 = vector.load %arg10[%c0_87, %c0_88, %c0_89, %c0_90] : memref<1x16x16x128xbf16, #tpu.memory_space<vmem>>, vector<1x16x16x128xbf16>
    %95 = vector.shape_cast %94 : vector<1x16x16x128xbf16> to vector<16x16x128xbf16>
    %96 = vector.shape_cast %93 : vector<16x16x128xbf16> to vector<1x16x16x128xbf16>
    tpu.vector_store %arg10[%c0_87, %c0_88, %c0_89, %c0_90], %96 {strides = array<i32>} : memref<1x16x16x128xbf16, #tpu.memory_space<vmem>>, vector<1x16x16x128xbf16>,
    return
  }
  func.func @transform_0(%arg0: i32, %arg1: i32) -> (i32, i32, i32, i32) {
    %c0_i32 = arith.constant 0 : i32
    %c0_i32_0 = arith.constant 0 : i32
    %c0_i32_1 = arith.constant 0 : i32
    %c0_i32_2 = arith.constant 0 : i32
    return %arg0, %c0_i32, %c0_i32_0, %c0_i32_1 : i32, i32, i32, i32
  }
  func.func @transform_1(%arg0: i32, %arg1: i32) -> (i32, i32, i32) {
    %c0_i32 = arith.constant 0 : i32
    %c0_i32_0 = arith.constant 0 : i32
    %c0_i32_1 = arith.constant 0 : i32
    %c0_i32_2 = arith.constant 0 : i32
    return %c0_i32, %c0_i32_0, %c0_i32_1 : i32, i32, i32
  }
  func.func @transform_2(%arg0: i32, %arg1: i32) -> (i32, i32) {
    %c0_i32 = arith.constant 0 : i32
    %c0_i32_0 = arith.constant 0 : i32
    %c0_i32_1 = arith.constant 0 : i32
    return %c0_i32, %c0_i32_0 : i32, i32
  }
  func.func @transform_3(%arg0: i32, %arg1: i32) -> (i32, i32) {
    %c0_i32 = arith.constant 0 : i32
    %c0_i32_0 = arith.constant 0 : i32
    %c0_i32_1 = arith.constant 0 : i32
    return %c0_i32, %c0_i32_0 : i32, i32
  }
  func.func @transform_4(%arg0: i32, %arg1: i32) -> i32 {
    %c0_i32 = arith.constant 0 : i32
    %c0_i32_0 = arith.constant 0 : i32
    return %c0_i32 : i32
  }
  func.func @transform_5(%arg0: i32, %arg1: i32) -> (i32, i32, i32) {
    %c0_i32 = arith.constant 0 : i32
    %c0_i32_0 = arith.constant 0 : i32
    %c0_i32_1 = arith.constant 0 : i32
    %c0_i32_2 = arith.constant 0 : i32
    return %c0_i32, %c0_i32_0, %c0_i32_1 : i32, i32, i32
  }
  func.func @transform_6(%arg0: i32, %arg1: i32) -> (i32, i32) {
    %c0_i32 = arith.constant 0 : i32
    %c0_i32_0 = arith.constant 0 : i32
    %c0_i32_1 = arith.constant 0 : i32
    return %c0_i32, %c0_i32_0 : i32, i32
  }
  func.func @transform_7(%arg0: i32, %arg1: i32) -> (i32, i32) {
    %c0_i32 = arith.constant 0 : i32
    %c0_i32_0 = arith.constant 0 : i32
    %c0_i32_1 = arith.constant 0 : i32
    return %c0_i32, %c0_i32_0 : i32, i32
  }
  func.func @transform_8(%arg0: i32, %arg1: i32) -> (i32, i32, i32, i32) {
    %c0_i32 = arith.constant 0 : i32
    %c0_i32_0 = arith.constant 0 : i32
    %c0_i32_1 = arith.constant 0 : i32
    return %arg0, %arg1, %c0_i32, %c0_i32_0 : i32, i32, i32, i32
  }
}

</mosaic_0001>

<llo_original>
// kernel: tpu_custom_call.1
$region0: #{tpu_custom_call.1}
  #allocation0 [shape = 'u32[]', space=smem, size = 0x4, offset = 0x4, fixed_abs, tag = 'smem constant byte address 0x4 - core index']
  #allocation1 [shape = 'u32[144,128]{1,0:T(1,128)}', space=vmem, size = 0x12000, scoped, tag = 'internal scratch']
  #allocation2 [shape = 'bf16[20,16,384]{2,1,0:T(16,128)(2,1)}', space=vmem, size = 0x3c000, scoped, tag = 'scratch operand']
  #allocation3 [shape = 'bf16[18,16,384]{2,1,0:T(16,128)(2,1)}', space=vmem, size = 0x36000, scoped, tag = 'scratch operand']
  #allocation4 [shape = 'f32[1]{0:T(128)S(6)}', space=smem, size = 0x200, scoped, tag = 'scoped memory for tpu_custom_call.1']
  %s0 = inlined_call_operand.vmem [shape: bf16[2,20,18,128], index: 0, kind: input, shape index: {}]
  %s1 = inlined_call_operand.vmem [shape: bf16[3,384,128], index: 1, kind: input, shape index: {}]
  %s2 = inlined_call_operand.vmem [shape: f32[1,128], index: 2, kind: input, shape index: {}]
  %s3 = inlined_call_operand.vmem [shape: f32[1,128], index: 3, kind: input, shape index: {}]
  %s4 = inlined_call_operand.<no memory space> [shape: f32[1], index: 4, kind: input, shape index: {}]
  %s5 = inlined_call_operand.hbm [shape: bf16[3,384,128], index: 5, kind: input, shape index: {}]
  %s6 = inlined_call_operand.vmem [shape: f32[1,128], index: 6, kind: input, shape index: {}]
  %s7 = inlined_call_operand.vmem [shape: f32[1,128], index: 7, kind: input, shape index: {}]
  %s8 = inlined_call_operand.hbm [shape: bf16[2,16,16,128], index: 8, kind: output, shape index: {}]
  %s9 = sld [smem:[#allocation0]]
  $region73: #{tpu_custom_call.1} parent=0
    _
  %s11 = ssub.s32 1, %s9
  %s12 = scalar_select 0, %s11, %s9
  %13 = sst [smem:[#allocation4]] %s4
  $region1: #{tpu_custom_call.1} parent=0
    #allocation5 [shape = 'u8[294912]{0}', space=vmem, size = 0x48000, scoped, tag = 'input window, operand 5, single buffered']
    #allocation6 [shape = 's32[2]{0}', space=sflag, size = 0x8, scoped, tag = 'scoped memory for tpu_custom_call.1']
    #allocation7 [shape = 's32[2]{0}', space=sflag, size = 0x8, scoped, tag = 'scoped memory for tpu_custom_call.1']
    #allocation8 [shape = 'u8[131072]{0}', space=vmem, size = 0x20000, scoped, tag = 'output window, operand 0']
    %14 = vsyncpa [#allocation6], 0
    %15 = vsyncpa [#allocation7], 0
    %s16 = scalar_lea.sflag [#allocation7], 1
    %17 = vsyncpa %s16, 0
    loop: start=0, step=1, limit=4
    $region2: #{tpu_custom_call.1} parent=1 // loop_pre_header
      _
    $region3: #{tpu_custom_call.1} parent=1 // loop_header
      %s19 = sphi 0, %s23
      %p20 = scmp.ge.s32.totalorder %s19, 4
      %s26 = sphi 0, %s38
      %s27 = sphi 0, %s34
      %s28 = sphi 0, %s26
      %s29 = sphi 0, %s27
      %s30 = sphi 0, %s28
      %s31 = sphi 0, %s29
      %s41 = sphi 0, %s43
      %s44 = sphi 0, %s41
      %s45 = sphi 0, %s44
      %s61 = sphi 0, %s45
      %s65 = sphi 0, %s65
      %s67 = sphi 0, %s65
      %s68 = sphi 0, %s67
      %s82 = sphi 0, %s68
      %s86 = sphi 0, %s86
      %s88 = sphi 0, %s86
      %s89 = sphi 0, %s88
      %s103 = sphi 0, %s89
      %s107 = sphi 0, %s107
      %s109 = sphi 0, %s107
      %s110 = sphi 0, %s109
      %s124 = sphi 0, %s110
      %s128 = sphi 0, %s128
      %s130 = sphi 0, %s128
      %s131 = sphi 0, %s130
      %s145 = sphi 0, %s131
      %s149 = sphi 0, %s149
      %s151 = sphi 0, %s149
      %s152 = sphi 0, %s151
      %s166 = sphi 0, %s152
      %s170 = sphi 0, %s170
      %s172 = sphi 0, %s170
      %s173 = sphi 0, %s172
      %s187 = sphi 0, %s173
      %s191 = sphi 0, %s191
      %s193 = sphi 0, %s191
      %s194 = sphi 0, %s193
      %s208 = sphi 0, %s194
      %s216 = sphi 0, %s218
      %s219 = sphi 0, %s216
      %s220 = sphi 0, %s219
      %s236 = sphi 0, %s220
    $region4: #{tpu_custom_call.1} parent=1 // loop_header_branch
      %22 = sbr.rel (%p20) target = $region8
    $region5: #{tpu_custom_call.1} parent=1 // loop_body
      %s24 = ssub.s32 %s19, 1
      %s25 = ssub.s32 %s19, 2
      %s32 = sadd.s32 1, %s27
      %p33 = scmp.ge.s32.totalorder %s32, 1
      %s34 = scalar_select %p33, 0, %s32
      %s35 = sadd.s32 1, %s26
      %s36 = scalar_select %p33, %s35, %s26
      %p37 = scmp.ge.s32.totalorder %s36, 2
      %s38 = scalar_select %p37, 0, %s36
      %s39 = ssub.s32 %s26, %s38
      %p40 = scmp.eq.s32.totalorder %s39, 0
      %s42 = sadd.s32 %s41, 1
      %s43 = scalar_select %p40, %s41, %s42
      %p46 = pneg %p40
      %p47 = scmp.eq.s32.totalorder %s19, 1
      %p48 = por %p46, %p47
      %p49 = scmp.ne.s32.totalorder %s41, %s44
      %p50 = scmp.eq.s32.totalorder %s19, 0
      %p51 = por %p49, %p50
      %p52 = scmp.ne.s32.totalorder %s41, %s44
      %p53 = scmp.eq.s32.totalorder %s24, 1
      %p54 = por %p52, %p53
      %p55 = scmp.ne.s32.totalorder %s44, %s45
      %p56 = scmp.eq.s32.totalorder %s24, 0
      %p57 = por %p55, %p56
      %p58 = scmp.ne.s32.totalorder %s44, %s45
      %p59 = scmp.eq.s32.totalorder %s25, 1
      %p60 = por %p58, %p59
      %p62 = scmp.ne.s32.totalorder %s45, %s61
      %p63 = scmp.eq.s32.totalorder %s25, 0
      %p64 = por %p62, %p63
      %s66 = sadd.s32 %s65, 1
      %p69 = scmp.eq.s32.totalorder %s19, 1
      %p70 = scmp.ne.s32.totalorder %s65, %s67
      %p71 = scmp.eq.s32.totalorder %s19, 0
      %p72 = por %p70, %p71
      %p73 = scmp.ne.s32.totalorder %s65, %s67
      %p74 = scmp.eq.s32.totalorder %s24, 1
      %p75 = por %p73, %p74
      %p76 = scmp.ne.s32.totalorder %s67, %s68
      %p77 = scmp.eq.s32.totalorder %s24, 0
      %p78 = por %p76, %p77
      %p79 = scmp.ne.s32.totalorder %s67, %s68
      %p80 = scmp.eq.s32.totalorder %s25, 1
      %p81 = por %p79, %p80
      %p83 = scmp.ne.s32.totalorder %s68, %s82
      %p84 = scmp.eq.s32.totalorder %s25, 0
      %p85 = por %p83, %p84
      %s87 = sadd.s32 %s86, 1
      %p90 = scmp.eq.s32.totalorder %s19, 1
      %p91 = scmp.ne.s32.totalorder %s86, %s88
      %p92 = scmp.eq.s32.totalorder %s19, 0
      %p93 = por %p91, %p92
      %p94 = scmp.ne.s32.totalorder %s86, %s88
      %p95 = scmp.eq.s32.totalorder %s24, 1
      %p96 = por %p94, %p95
      %p97 = scmp.ne.s32.totalorder %s88, %s89
      %p98 = scmp.eq.s32.totalorder %s24, 0
      %p99 = por %p97, %p98
      %p100 = scmp.ne.s32.totalorder %s88, %s89
      %p101 = scmp.eq.s32.totalorder %s25, 1
      %p102 = por %p100, %p101
      %p104 = scmp.ne.s32.totalorder %s89, %s103
      %p105 = scmp.eq.s32.totalorder %s25, 0
      %p106 = por %p104, %p105
      %s108 = sadd.s32 %s107, 1
      %p111 = scmp.eq.s32.totalorder %s19, 1
      %p112 = scmp.ne.s32.totalorder %s107, %s109
      %p113 = scmp.eq.s32.totalorder %s19, 0
      %p114 = por %p112, %p113
      %p115 = scmp.ne.s32.totalorder %s107, %s109
      %p116 = scmp.eq.s32.totalorder %s24, 1
      %p117 = por %p115, %p116
      %p118 = scmp.ne.s32.totalorder %s109, %s110
      %p119 = scmp.eq.s32.totalorder %s24, 0
      %p120 = por %p118, %p119
      %p121 = scmp.ne.s32.totalorder %s109, %s110
      %p122 = scmp.eq.s32.totalorder %s25, 1
      %p123 = por %p121, %p122
      %p125 = scmp.ne.s32.totalorder %s110, %s124
      %p126 = scmp.eq.s32.totalorder %s25, 0
      %p127 = por %p125, %p126
      %s129 = sadd.s32 %s128, 1
      %p132 = scmp.eq.s32.totalorder %s19, 1
      %p133 = scmp.ne.s32.totalorder %s128, %s130
      %p134 = scmp.eq.s32.totalorder %s19, 0
      %p135 = por %p133, %p134
      %p136 = scmp.ne.s32.totalorder %s128, %s130
      %p137 = scmp.eq.s32.totalorder %s24, 1
      %p138 = por %p136, %p137
      %p139 = scmp.ne.s32.totalorder %s130, %s131
      %p140 = scmp.eq.s32.totalorder %s24, 0
      %p141 = por %p139, %p140
      %p142 = scmp.ne.s32.totalorder %s130, %s131
      %p143 = scmp.eq.s32.totalorder %s25, 1
      %p144 = por %p142, %p143
      %p146 = scmp.ne.s32.totalorder %s131, %s145
      %p147 = scmp.eq.s32.totalorder %s25, 0
      %p148 = por %p146, %p147
      %s150 = sadd.s32 %s149, 1
      %p153 = scmp.eq.s32.totalorder %s19, 1
      %p154 = scmp.ne.s32.totalorder %s149, %s151
      %p155 = scmp.eq.s32.totalorder %s19, 0
      %p156 = por %p154, %p155
      %p157 = scmp.ne.s32.totalorder %s149, %s151
      %p158 = scmp.eq.s32.totalorder %s24, 1
      %p159 = por %p157, %p158
      %p160 = scmp.ne.s32.totalorder %s151, %s152
      %p161 = scmp.eq.s32.totalorder %s24, 0
      %p162 = por %p160, %p161
      %p163 = scmp.ne.s32.totalorder %s151, %s152
      %p164 = scmp.eq.s32.totalorder %s25, 1
      %p165 = por %p163, %p164
      %p167 = scmp.ne.s32.totalorder %s152, %s166
      %p168 = scmp.eq.s32.totalorder %s25, 0
      %p169 = por %p167, %p168
      %s171 = sadd.s32 %s170, 1
      %p174 = scmp.eq.s32.totalorder %s19, 1
      %p175 = scmp.ne.s32.totalorder %s170, %s172
      %p176 = scmp.eq.s32.totalorder %s19, 0
      %p177 = por %p175, %p176
      %p178 = scmp.ne.s32.totalorder %s170, %s172
      %p179 = scmp.eq.s32.totalorder %s24, 1
      %p180 = por %p178, %p179
      %p181 = scmp.ne.s32.totalorder %s172, %s173
      %p182 = scmp.eq.s32.totalorder %s24, 0
      %p183 = por %p181, %p182
      %p184 = scmp.ne.s32.totalorder %s172, %s173
      %p185 = scmp.eq.s32.totalorder %s25, 1
      %p186 = por %p184, %p185
      %p188 = scmp.ne.s32.totalorder %s173, %s187
      %p189 = scmp.eq.s32.totalorder %s25, 0
      %p190 = por %p188, %p189
      %s192 = sadd.s32 %s191, 1
      %p195 = scmp.eq.s32.totalorder %s19, 1
      %p196 = scmp.ne.s32.totalorder %s191, %s193
      %p197 = scmp.eq.s32.totalorder %s19, 0
      %p198 = por %p196, %p197
      %p199 = scmp.ne.s32.totalorder %s191, %s193
      %p200 = scmp.eq.s32.totalorder %s24, 1
      %p201 = por %p199, %p200
      %p202 = scmp.ne.s32.totalorder %s193, %s194
      %p203 = scmp.eq.s32.totalorder %s24, 0
      %p204 = por %p202, %p203
      %p205 = scmp.ne.s32.totalorder %s193, %s194
      %p206 = scmp.eq.s32.totalorder %s25, 1
      %p207 = por %p205, %p206
      %p209 = scmp.ne.s32.totalorder %s194, %s208
      %p210 = scmp.eq.s32.totalorder %s25, 0
      %p211 = por %p209, %p210
      %s212 = ssub.s32 %s26, %s38
      %s213 = ssub.s32 %s27, %s34
      %s214 = sor.u32 %s212, %s213
      %p215 = scmp.eq.s32.totalorder %s214, 0
      %s217 = sadd.s32 %s216, 1
      %s218 = scalar_select %p215, %s216, %s217
      %p221 = pneg %p215
      %p222 = scmp.eq.s32.totalorder %s19, 1
      %p223 = por %p221, %p222
      %p224 = scmp.ne.s32.totalorder %s216, %s219
      %p225 = scmp.eq.s32.totalorder %s19, 0
      %p226 = por %p224, %p225
      %p227 = scmp.ne.s32.totalorder %s216, %s219
      %p228 = scmp.eq.s32.totalorder %s24, 1
      %p229 = por %p227, %p228
      %p230 = scmp.ne.s32.totalorder %s219, %s220
      %p231 = scmp.eq.s32.totalorder %s24, 0
      %p232 = por %p230, %p231
      %p233 = scmp.ne.s32.totalorder %s219, %s220
      %p234 = scmp.eq.s32.totalorder %s25, 1
      %p235 = por %p233, %p234
      %p237 = scmp.ne.s32.totalorder %s220, %s236
      %p238 = scmp.eq.s32.totalorder %s25, 0
      %p239 = por %p237, %p238
      %p240 = scmp.le.s32.totalorder 1, %s19
      %p241 = scmp.lt.s32.totalorder %s19, 3
      %p242 = pnand %p240, %p241
      %p243 = pneg %p242
      // Predicated region
      $region9: #{tpu_custom_call.1} parent=5 // pred_check
        _
      $region10: #{tpu_custom_call.1} parent=5 // pred_check_branch
        %245 = sbr.rel (%p242) target = $region12
      $region11: #{tpu_custom_call.1} parent=5 // pred_region
        %s246 = ssub.s32 %s19, 1
        // Predicated region
        $region13: #{tpu_custom_call.1} parent=11 // pred_check
          %p247 = pneg %p78
        $region14: #{tpu_custom_call.1} parent=11 // pred_check_branch
          %249 = sbr.rel (%p247) target = $region16
        $region15: #{tpu_custom_call.1} parent=11 // pred_region
          _
        $region16: #{tpu_custom_call.1} parent=11 // pred_fallthru
          _
        // Predicated region
        $region17: #{tpu_custom_call.1} parent=11 // pred_check
          %p250 = pneg %p99
        $region18: #{tpu_custom_call.1} parent=11 // pred_check_branch
          %252 = sbr.rel (%p250) target = $region20
        $region19: #{tpu_custom_call.1} parent=11 // pred_region
          _
        $region20: #{tpu_custom_call.1} parent=11 // pred_fallthru
          _
        // Predicated region
        $region21: #{tpu_custom_call.1} parent=11 // pred_check
          %p253 = pneg %p120
        $region22: #{tpu_custom_call.1} parent=11 // pred_check_branch
          %255 = sbr.rel (%p253) target = $region24
        $region23: #{tpu_custom_call.1} parent=11 // pred_region
          _
        $region24: #{tpu_custom_call.1} parent=11 // pred_fallthru
          _
        // Predicated region
        $region25: #{tpu_custom_call.1} parent=11 // pred_check
          %p256 = pneg %p141
        $region26: #{tpu_custom_call.1} parent=11 // pred_check_branch
          %258 = sbr.rel (%p256) target = $region28
        $region27: #{tpu_custom_call.1} parent=11 // pred_region
          _
        $region28: #{tpu_custom_call.1} parent=11 // pred_fallthru
          _
        // Predicated region
        $region29: #{tpu_custom_call.1} parent=11 // pred_check
          %p259 = pneg %p162
        $region30: #{tpu_custom_call.1} parent=11 // pred_check_branch
          %261 = sbr.rel (%p259) target = $region32
        $region31: #{tpu_custom_call.1} parent=11 // pred_region
          %s263 = ssub.s32 9216, 9216
          %264 = vsyncadd [#allocation6], %s263
          %s265 = sshll.u32 [#allocation5], 4
          %s266 = int_to_ptr.vmem [resolvable:$true] %s265
          %271 = dma.hbm_to_vmem [thread:$0]  %s5, 9216, %s266, [#allocation6], 64, 64, 4
        $region32: #{tpu_custom_call.1} parent=11 // pred_fallthru
          _
        // Predicated region
        $region33: #{tpu_custom_call.1} parent=11 // pred_check
          %p272 = pneg %p183
        $region34: #{tpu_custom_call.1} parent=11 // pred_check_branch
          %274 = sbr.rel (%p272) target = $region36
        $region35: #{tpu_custom_call.1} parent=11 // pred_region
          _
        $region36: #{tpu_custom_call.1} parent=11 // pred_fallthru
          _
        // Predicated region
        $region37: #{tpu_custom_call.1} parent=11 // pred_check
          %p275 = pneg %p204
        $region38: #{tpu_custom_call.1} parent=11 // pred_check_branch
          %277 = sbr.rel (%p275) target = $region40
        $region39: #{tpu_custom_call.1} parent=11 // pred_region
          _
        $region40: #{tpu_custom_call.1} parent=11 // pred_fallthru
          _
      $region12: #{tpu_custom_call.1} parent=5 // pred_fallthru
        _
      %p278 = scmp.lt.s32.totalorder %s19, 2
      // Predicated region
      $region41: #{tpu_custom_call.1} parent=5 // pred_check
        %p279 = pneg %p278
      $region42: #{tpu_custom_call.1} parent=5 // pred_check_branch
        %281 = sbr.rel (%p279) target = $region44
      $region43: #{tpu_custom_call.1} parent=5 // pred_region
        // Predicated region
        $region45: #{tpu_custom_call.1} parent=43 // pred_check
          %p282 = pneg %p51
        $region46: #{tpu_custom_call.1} parent=43 // pred_check_branch
          %284 = sbr.rel (%p282) target = $region48
        $region47: #{tpu_custom_call.1} parent=43 // pred_region
          %p285 = scmp.lt.s32.totalorder %s26, 1
          %s286 = scalar_select %p285, %s26, 1
          %s287 = smul.addr %s286, 60
          %s288 = smul.addr %s287, 4
          %s289 = scalar_lea.vmem %s0, %s288
        $region48: #{tpu_custom_call.1} parent=43 // pred_fallthru
          _
      $region44: #{tpu_custom_call.1} parent=5 // pred_fallthru
        _
      %p290 = scmp.le.s32.totalorder 1, %s19
      %p291 = scmp.lt.s32.totalorder %s19, 3
      %p292 = pnand %p290, %p291
      %p293 = pneg %p292
      // Predicated region
      $region49: #{tpu_custom_call.1} parent=5 // pred_check
        _
      $region50: #{tpu_custom_call.1} parent=5 // pred_check_branch
        %295 = sbr.rel (%p292) target = $region52
      $region51: #{tpu_custom_call.1} parent=5 // pred_region
        %s296 = ssub.s32 %s19, 1
        // Predicated region
        $region53: #{tpu_custom_call.1} parent=51 // pred_check
          %p297 = pneg %p162
        $region54: #{tpu_custom_call.1} parent=51 // pred_check_branch
          %299 = sbr.rel (%p297) target = $region56
        $region55: #{tpu_custom_call.1} parent=51 // pred_region
          %300 = dma.done [#allocation6], 9216
        $region56: #{tpu_custom_call.1} parent=51 // pred_fallthru
          _
        %p301 = scmp.lt.s32.totalorder %s28, 1
        %s302 = scalar_select %p301, %s28, 1
        %s303 = smul.addr %s302, 60
        %s304 = smul.addr %s303, 4
        %s305 = scalar_lea.vmem %s0, %s304
        %p306 = pneg %p57
        %p307 = pneg %p54
        %p308 = pneg %p78
        %p309 = pneg %p75
        %p310 = pneg %p99
        %p311 = pneg %p96
        %p312 = pneg %p120
        %p313 = pneg %p117
        %p314 = pneg %p141
        %p315 = pneg %p138
        %p316 = pneg %p162
        %p317 = pneg %p159
        %p318 = pneg %p183
        %p319 = pneg %p180
        %p320 = pneg %p204
        %p321 = pneg %p201
        %p322 = pneg %p232
        %p323 = pneg %p229
        %s324 = sand.u32 %s219, 1
        %s325 = scalar_lea.sflag [#allocation7], %s324
        %s326 = sand.u32 %s219, 1
        %s327 = smul.addr %s326, 128
        %s328 = scalar_lea.vmem [#allocation8], %s327
        %p329 = scmp.lt.s32.totalorder %s28, 1
        %s330 = scalar_select %p329, %s28, 1
        %s331 = smul.addr %s330, 60
        %s332 = smul.addr %s331, 4
        %s333 = scalar_lea.vmem %s0, %s332
        %s334 = smul.u32 16, %s29
        %s336 = smul.u32 %s29, 16
        %s337 = smul.u32 %s336, 3
        %s338 = smul.addr %s337, 4
        %s339 = scalar_lea.vmem %s333, %s338
        %v340 = vld [vmem:[%s339] sm:$0xf]
        %v341 = vld [vmem:[%s339 + $0x4] sm:$0xf]
        %v342 = vld [vmem:[%s339 + $0xc] sm:$0xf]
        %v343 = vld [vmem:[%s339 + $0x10] sm:$0xf]
        %v344 = vld [vmem:[%s339 + $0x18] sm:$0xf]
        %v345 = vld [vmem:[%s339 + $0x1c] sm:$0xf]
        %v346 = vld [vmem:[%s339 + $0x24] sm:$0xf]
        %v347 = vld [vmem:[%s339 + $0x28] sm:$0xf]
        %v348 = vld [vmem:[%s339 + $0x30] sm:$0xf]
        %v349 = vld [vmem:[%s339 + $0x34] sm:$0xf]
        %v350 = vld [vmem:[%s339 + $0x3c] sm:$0xf]
        %v351 = vld [vmem:[%s339 + $0x40] sm:$0xf]
        %v352 = vld [vmem:[%s339 + $0x48] sm:$0xf]
        %v353 = vld [vmem:[%s339 + $0x4c] sm:$0xf]
        %v354 = vld [vmem:[%s339 + $0x54] sm:$0xf]
        %v355 = vld [vmem:[%s339 + $0x58] sm:$0xf]
        %v356 = vld [vmem:[%s339 + $0x60] sm:$0xf]
        %v357 = vld [vmem:[%s339 + $0x64] sm:$0xf]
        %v358 = vld [vmem:[%s339 + $0x6c] sm:$0xf]
        %v359 = vld [vmem:[%s339 + $0x70] sm:$0xf]
        %v360 = vld [vmem:[%s339 + $0x78] sm:$0xf]
        %v361 = vld [vmem:[%s339 + $0x7c] sm:$0xf]
        %v362 = vld [vmem:[%s339 + $0x84] sm:$0xf]
        %v363 = vld [vmem:[%s339 + $0x88] sm:$0xf]
        %v364 = vld [vmem:[%s339 + $0x90] sm:$0xf]
        %v365 = vld [vmem:[%s339 + $0x94] sm:$0xf]
        %v366 = vld [vmem:[%s339 + $0x9c] sm:$0xf]
        %v367 = vld [vmem:[%s339 + $0xa0] sm:$0xf]
        %v368 = vld [vmem:[%s339 + $0xa8] sm:$0xf]
        %v369 = vld [vmem:[%s339 + $0xac] sm:$0xf]
        %v370 = vld [vmem:[%s339 + $0xb4] sm:$0xf]
        %v371 = vld [vmem:[%s339 + $0xb8] sm:$0xf]
        %v372 = vld [vmem:[%s339 + $0xc0] sm:$0xf]
        %v373 = vld [vmem:[%s339 + $0xc4] sm:$0xf]
        %v374 = vld [vmem:[%s339 + $0xcc] sm:$0xf]
        %v375 = vld [vmem:[%s339 + $0xd0] sm:$0xf]
        %v376 = vld [vmem:[%s339 + $0xd8] sm:$0xf]
        %v377 = vld [vmem:[%s339 + $0xdc] sm:$0xf]
        %v378 = vld [vmem:[%s339 + $0xe4] sm:$0xf]
        %v379 = vld [vmem:[%s339 + $0xe8] sm:$0xf]
        %v420 = vunpack.c.l.b16 %v340
        %v421 = vunpack.c.l.b16 %v341
        %v422 = vunpack.c.l.b16 %v342
        %v423 = vunpack.c.l.b16 %v343
        %v424 = vunpack.c.l.b16 %v344
        %v425 = vunpack.c.l.b16 %v345
        %v426 = vunpack.c.l.b16 %v346
        %v427 = vunpack.c.l.b16 %v347
        %v428 = vunpack.c.l.b16 %v348
        %v429 = vunpack.c.l.b16 %v349
        %v430 = vunpack.c.l.b16 %v350
        %v431 = vunpack.c.l.b16 %v351
        %v432 = vunpack.c.l.b16 %v352
        %v433 = vunpack.c.l.b16 %v353
        %v434 = vunpack.c.l.b16 %v354
        %v435 = vunpack.c.l.b16 %v355
        %v436 = vunpack.c.l.b16 %v356
        %v437 = vunpack.c.l.b16 %v357
        %v438 = vunpack.c.l.b16 %v358
        %v439 = vunpack.c.l.b16 %v359
        %v440 = vunpack.c.l.b16 %v360
        %v441 = vunpack.c.l.b16 %v361
        %v442 = vunpack.c.l.b16 %v362
        %v443 = vunpack.c.l.b16 %v363
        %v444 = vunpack.c.l.b16 %v364
        %v445 = vunpack.c.l.b16 %v365
        %v446 = vunpack.c.l.b16 %v366
        %v447 = vunpack.c.l.b16 %v367
        %v448 = vunpack.c.l.b16 %v368
        %v449 = vunpack.c.l.b16 %v369
        %v450 = vunpack.c.l.b16 %v370
        %v451 = vunpack.c.l.b16 %v371
        %v452 = vunpack.c.l.b16 %v372
        %v453 = vunpack.c.l.b16 %v373
        %v454 = vunpack.c.l.b16 %v374
        %v455 = vunpack.c.l.b16 %v375
        %v456 = vunpack.c.l.b16 %v376
        %v457 = vunpack.c.l.b16 %v377
        %v458 = vunpack.c.l.b16 %v378
        %v459 = vunpack.c.l.b16 %v379
        %v460 = vpack.c.b16 %v421, %v420
        %v461 = vpack.c.b16 %v423, %v422
        %v462 = vpack.c.b16 %v425, %v424
        %v463 = vpack.c.b16 %v427, %v426
        %v464 = vpack.c.b16 %v429, %v428
        %v465 = vpack.c.b16 %v431, %v430
        %v466 = vpack.c.b16 %v433, %v432
        %v467 = vpack.c.b16 %v435, %v434
        %v468 = vpack.c.b16 %v437, %v436
        %v469 = vpack.c.b16 %v439, %v438
        %v470 = vpack.c.b16 %v441, %v440
        %v471 = vpack.c.b16 %v443, %v442
        %v472 = vpack.c.b16 %v445, %v444
        %v473 = vpack.c.b16 %v447, %v446
        %v474 = vpack.c.b16 %v449, %v448
        %v475 = vpack.c.b16 %v451, %v450
        %v476 = vpack.c.b16 %v453, %v452
        %v477 = vpack.c.b16 %v455, %v454
        %v478 = vpack.c.b16 %v457, %v456
        %v479 = vpack.c.b16 %v459, %v458
        %500 = vst [vmem:[#allocation2] sm:$0xff] %v460
        %501 = vst [vmem:[#allocation2 + $0x18] sm:$0xff] %v461
        %502 = vst [vmem:[#allocation2 + $0x30] sm:$0xff] %v462
        %503 = vst [vmem:[#allocation2 + $0x48] sm:$0xff] %v463
        %504 = vst [vmem:[#allocation2 + $0x60] sm:$0xff] %v464
        %505 = vst [vmem:[#allocation2 + $0x78] sm:$0xff] %v465
        %506 = vst [vmem:[#allocation2 + $0x90] sm:$0xff] %v466
        %507 = vst [vmem:[#allocation2 + $0xa8] sm:$0xff] %v467
        %508 = vst [vmem:[#allocation2 + $0xc0] sm:$0xff] %v468
        %509 = vst [vmem:[#allocation2 + $0xd8] sm:$0xff] %v469
        %510 = vst [vmem:[#allocation2 + $0xf0] sm:$0xff] %v470
        %511 = vst [vmem:[#allocation2 + $0x108] sm:$0xff] %v471
        %512 = vst [vmem:[#allocation2 + $0x120] sm:$0xff] %v472
        %513 = vst [vmem:[#allocation2 + $0x138] sm:$0xff] %v473
        %514 = vst [vmem:[#allocation2 + $0x150] sm:$0xff] %v474
        %515 = vst [vmem:[#allocation2 + $0x168] sm:$0xff] %v475
        %516 = vst [vmem:[#allocation2 + $0x180] sm:$0xff] %v476
        %517 = vst [vmem:[#allocation2 + $0x198] sm:$0xff] %v477
        %518 = vst [vmem:[#allocation2 + $0x1b0] sm:$0xff] %v478
        %519 = vst [vmem:[#allocation2 + $0x1c8] sm:$0xff] %v479
        %v520 = vld [vmem:[%s339] sm:$0xf]
        %v521 = vld [vmem:[%s339 + $0x4] sm:$0xf]
        %v522 = vld [vmem:[%s339 + $0x8] sm:$0x1]
        %v523 = vld [vmem:[%s339 + $0xc] sm:$0xf]
        %v524 = vld [vmem:[%s339 + $0x10] sm:$0xf]
        %v525 = vld [vmem:[%s339 + $0x14] sm:$0x1]
        %v526 = vld [vmem:[%s339 + $0x18] sm:$0xf]
        %v527 = vld [vmem:[%s339 + $0x1c] sm:$0xf]
        %v528 = vld [vmem:[%s339 + $0x20] sm:$0x1]
        %v529 = vld [vmem:[%s339 + $0x24] sm:$0xf]
        %v530 = vld [vmem:[%s339 + $0x28] sm:$0xf]
        %v531 = vld [vmem:[%s339 + $0x2c] sm:$0x1]
        %v532 = vld [vmem:[%s339 + $0x30] sm:$0xf]
        %v533 = vld [vmem:[%s339 + $0x34] sm:$0xf]
        %v534 = vld [vmem:[%s339 + $0x38] sm:$0x1]
        %v535 = vld [vmem:[%s339 + $0x3c] sm:$0xf]
        %v536 = vld [vmem:[%s339 + $0x40] sm:$0xf]
        %v537 = vld [vmem:[%s339 + $0x44] sm:$0x1]
        %v538 = vld [vmem:[%s339 + $0x48] sm:$0xf]
        %v539 = vld [vmem:[%s339 + $0x4c] sm:$0xf]
        %v540 = vld [vmem:[%s339 + $0x50] sm:$0x1]
        %v541 = vld [vmem:[%s339 + $0x54] sm:$0xf]
        %v542 = vld [vmem:[%s339 + $0x58] sm:$0xf]
        %v543 = vld [vmem:[%s339 + $0x5c] sm:$0x1]
        %v544 = vld [vmem:[%s339 + $0x60] sm:$0xf]
        %v545 = vld [vmem:[%s339 + $0x64] sm:$0xf]
        %v546 = vld [vmem:[%s339 + $0x68] sm:$0x1]
        %v547 = vld [vmem:[%s339 + $0x6c] sm:$0xf]
        %v548 = vld [vmem:[%s339 + $0x70] sm:$0xf]
        %v549 = vld [vmem:[%s339 + $0x74] sm:$0x1]
        %v550 = vld [vmem:[%s339 + $0x78] sm:$0xf]
        %v551 = vld [vmem:[%s339 + $0x7c] sm:$0xf]
        %v552 = vld [vmem:[%s339 + $0x80] sm:$0x1]
        %v553 = vld [vmem:[%s339 + $0x84] sm:$0xf]
        %v554 = vld [vmem:[%s339 + $0x88] sm:$0xf]
        %v555 = vld [vmem:[%s339 + $0x8c] sm:$0x1]
        %v556 = vld [vmem:[%s339 + $0x90] sm:$0xf]
        %v557 = vld [vmem:[%s339 + $0x94] sm:$0xf]
        %v558 = vld [vmem:[%s339 + $0x98] sm:$0x1]
        %v559 = vld [vmem:[%s339 + $0x9c] sm:$0xf]
        %v560 = vld [vmem:[%s339 + $0xa0] sm:$0xf]
        %v561 = vld [vmem:[%s339 + $0xa4] sm:$0x1]
        %v562 = vld [vmem:[%s339 + $0xa8] sm:$0xf]
        %v563 = vld [vmem:[%s339 + $0xac] sm:$0xf]
        %v564 = vld [vmem:[%s339 + $0xb0] sm:$0x1]
        %v565 = vld [vmem:[%s339 + $0xb4] sm:$0xf]
        %v566 = vld [vmem:[%s339 + $0xb8] sm:$0xf]
        %v567 = vld [vmem:[%s339 + $0xbc] sm:$0x1]
        %v568 = vld [vmem:[%s339 + $0xc0] sm:$0xf]
        %v569 = vld [vmem:[%s339 + $0xc4] sm:$0xf]
        %v570 = vld [vmem:[%s339 + $0xc8] sm:$0x1]
        %v571 = vld [vmem:[%s339 + $0xcc] sm:$0xf]
        %v572 = vld [vmem:[%s339 + $0xd0] sm:$0xf]
        %v573 = vld [vmem:[%s339 + $0xd4] sm:$0x1]
        %v574 = vld [vmem:[%s339 + $0xd8] sm:$0xf]
        %v575 = vld [vmem:[%s339 + $0xdc] sm:$0xf]
        %v576 = vld [vmem:[%s339 + $0xe0] sm:$0x1]
        %v577 = vld [vmem:[%s339 + $0xe4] sm:$0xf]
        %v578 = vld [vmem:[%s339 + $0xe8] sm:$0xf]
        %v579 = vld [vmem:[%s339 + $0xec] sm:$0x1]
        %v640 = vunpack.c.l.b16 %v520
        %v641 = vunpack.c.l.b16 %v521
        %v642 = vunpack.c.l.b16 %v522
        %v643 = vunpack.c.l.b16 %v523
        %v644 = vunpack.c.l.b16 %v524
        %v645 = vunpack.c.l.b16 %v525
        %v646 = vunpack.c.l.b16 %v526
        %v647 = vunpack.c.l.b16 %v527
        %v648 = vunpack.c.l.b16 %v528
        %v649 = vunpack.c.l.b16 %v529
        %v650 = vunpack.c.l.b16 %v530
        %v651 = vunpack.c.l.b16 %v531
        %v652 = vunpack.c.l.b16 %v532
        %v653 = vunpack.c.l.b16 %v533
        %v654 = vunpack.c.l.b16 %v534
        %v655 = vunpack.c.l.b16 %v535
        %v656 = vunpack.c.l.b16 %v536
        %v657 = vunpack.c.l.b16 %v537
        %v658 = vunpack.c.l.b16 %v538
        %v659 = vunpack.c.l.b16 %v539
        %v660 = vunpack.c.l.b16 %v540
        %v661 = vunpack.c.l.b16 %v541
        %v662 = vunpack.c.l.b16 %v542
        %v663 = vunpack.c.l.b16 %v543
        %v664 = vunpack.c.l.b16 %v544
        %v665 = vunpack.c.l.b16 %v545
        %v666 = vunpack.c.l.b16 %v546
        %v667 = vunpack.c.l.b16 %v547
        %v668 = vunpack.c.l.b16 %v548
        %v669 = vunpack.c.l.b16 %v549
        %v670 = vunpack.c.l.b16 %v550
        %v671 = vunpack.c.l.b16 %v551
        %v672 = vunpack.c.l.b16 %v552
        %v673 = vunpack.c.l.b16 %v553
        %v674 = vunpack.c.l.b16 %v554
        %v675 = vunpack.c.l.b16 %v555
        %v676 = vunpack.c.l.b16 %v556
        %v677 = vunpack.c.l.b16 %v557
        %v678 = vunpack.c.l.b16 %v558
        %v679 = vunpack.c.l.b16 %v559
        %v680 = vunpack.c.l.b16 %v560
        %v681 = vunpack.c.l.b16 %v561
        %v682 = vunpack.c.l.b16 %v562
        %v683 = vunpack.c.l.b16 %v563
        %v684 = vunpack.c.l.b16 %v564
        %v685 = vunpack.c.l.b16 %v565
        %v686 = vunpack.c.l.b16 %v566
        %v687 = vunpack.c.l.b16 %v567
        %v688 = vunpack.c.l.b16 %v568
        %v689 = vunpack.c.l.b16 %v569
        %v690 = vunpack.c.l.b16 %v570
        %v691 = vunpack.c.l.b16 %v571
        %v692 = vunpack.c.l.b16 %v572
        %v693 = vunpack.c.l.b16 %v573
        %v694 = vunpack.c.l.b16 %v574
        %v695 = vunpack.c.l.b16 %v575
        %v696 = vunpack.c.l.b16 %v576
        %v697 = vunpack.c.l.b16 %v577
        %v698 = vunpack.c.l.b16 %v578
        %v699 = vunpack.c.l.b16 %v579
        %v700 = vpack.c.b16 %v641, %v640
        %v701 = vpack.c.b16 %v642, %v642
        %v702 = vpack.c.b16 %v644, %v643
        %v703 = vpack.c.b16 %v645, %v645
        %v704 = vpack.c.b16 %v647, %v646
        %v705 = vpack.c.b16 %v648, %v648
        %v706 = vpack.c.b16 %v650, %v649
        %v707 = vpack.c.b16 %v651, %v651
        %v708 = vpack.c.b16 %v653, %v652
        %v709 = vpack.c.b16 %v654, %v654
        %v710 = vpack.c.b16 %v656, %v655
        %v711 = vpack.c.b16 %v657, %v657
        %v712 = vpack.c.b16 %v659, %v658
        %v713 = vpack.c.b16 %v660, %v660
        %v714 = vpack.c.b16 %v662, %v661
        %v715 = vpack.c.b16 %v663, %v663
        %v716 = vpack.c.b16 %v665, %v664
        %v717 = vpack.c.b16 %v666, %v666
        %v718 = vpack.c.b16 %v668, %v667
        %v719 = vpack.c.b16 %v669, %v669
        %v720 = vpack.c.b16 %v671, %v670
        %v721 = vpack.c.b16 %v672, %v672
        %v722 = vpack.c.b16 %v674, %v673
        %v723 = vpack.c.b16 %v675, %v675
        %v724 = vpack.c.b16 %v677, %v676
        %v725 = vpack.c.b16 %v678, %v678
        %v726 = vpack.c.b16 %v680, %v679
        %v727 = vpack.c.b16 %v681, %v681
        %v728 = vpack.c.b16 %v683, %v682
        %v729 = vpack.c.b16 %v684, %v684
        %v730 = vpack.c.b16 %v686, %v685
        %v731 = vpack.c.b16 %v687, %v687
        %v732 = vpack.c.b16 %v689, %v688
        %v733 = vpack.c.b16 %v690, %v690
        %v734 = vpack.c.b16 %v692, %v691
        %v735 = vpack.c.b16 %v693, %v693
        %v736 = vpack.c.b16 %v695, %v694
        %v737 = vpack.c.b16 %v696, %v696
        %v738 = vpack.c.b16 %v698, %v697
        %v739 = vpack.c.b16 %v699, %v699
        %vm740 = vsmask.f32 7424
        %v742 = vshrl.u32 %v700, 16
        %v744 = vshll.u32 %v700, 16
        %v746 = vrot.slane %v744, 1
        %v747 = vor.u32 %v742, %v746
        %v749 = vshll.u32 %v701, 16
        %v751 = vrot.slane %v749, 1
        %v752 = vsel %vm740, %v747, %v751
        %v754 = vshrl.u32 %v702, 16
        %v756 = vshll.u32 %v702, 16
        %v758 = vrot.slane %v756, 1
        %v759 = vor.u32 %v754, %v758
        %v761 = vshll.u32 %v703, 16
        %v763 = vrot.slane %v761, 1
        %v764 = vsel %vm740, %v759, %v763
        %v766 = vshrl.u32 %v704, 16
        %v768 = vshll.u32 %v704, 16
        %v770 = vrot.slane %v768, 1
        %v771 = vor.u32 %v766, %v770
        %v773 = vshll.u32 %v705, 16
        %v775 = vrot.slane %v773, 1
        %v776 = vsel %vm740, %v771, %v775
        %v778 = vshrl.u32 %v706, 16
        %v780 = vshll.u32 %v706, 16
        %v782 = vrot.slane %v780, 1
        %v783 = vor.u32 %v778, %v782
        %v785 = vshll.u32 %v707, 16
        %v787 = vrot.slane %v785, 1
        %v788 = vsel %vm740, %v783, %v787
        %v790 = vshrl.u32 %v708, 16
        %v792 = vshll.u32 %v708, 16
        %v794 = vrot.slane %v792, 1
        %v795 = vor.u32 %v790, %v794
        %v797 = vshll.u32 %v709, 16
        %v799 = vrot.slane %v797, 1
        %v800 = vsel %vm740, %v795, %v799
        %v802 = vshrl.u32 %v710, 16
        %v804 = vshll.u32 %v710, 16
        %v806 = vrot.slane %v804, 1
        %v807 = vor.u32 %v802, %v806
        %v809 = vshll.u32 %v711, 16
        %v811 = vrot.slane %v809, 1
        %v812 = vsel %vm740, %v807, %v811
        %v814 = vshrl.u32 %v712, 16
        %v816 = vshll.u32 %v712, 16
        %v818 = vrot.slane %v816, 1
        %v819 = vor.u32 %v814, %v818
        %v821 = vshll.u32 %v713, 16
        %v823 = vrot.slane %v821, 1
        %v824 = vsel %vm740, %v819, %v823
        %v826 = vshrl.u32 %v714, 16
        %v828 = vshll.u32 %v714, 16
        %v830 = vrot.slane %v828, 1
        %v831 = vor.u32 %v826, %v830
        %v833 = vshll.u32 %v715, 16
        %v835 = vrot.slane %v833, 1
        %v836 = vsel %vm740, %v831, %v835
        %v838 = vshrl.u32 %v716, 16
        %v840 = vshll.u32 %v716, 16
        %v842 = vrot.slane %v840, 1
        %v843 = vor.u32 %v838, %v842
        %v845 = vshll.u32 %v717, 16
        %v847 = vrot.slane %v845, 1
        %v848 = vsel %vm740, %v843, %v847
        %v850 = vshrl.u32 %v718, 16
        %v852 = vshll.u32 %v718, 16
        %v854 = vrot.slane %v852, 1
        %v855 = vor.u32 %v850, %v854
        %v857 = vshll.u32 %v719, 16
        %v859 = vrot.slane %v857, 1
        %v860 = vsel %vm740, %v855, %v859
        %v862 = vshrl.u32 %v720, 16
        %v864 = vshll.u32 %v720, 16
        %v866 = vrot.slane %v864, 1
        %v867 = vor.u32 %v862, %v866
        %v869 = vshll.u32 %v721, 16
        %v871 = vrot.slane %v869, 1
        %v872 = vsel %vm740, %v867, %v871
        %v874 = vshrl.u32 %v722, 16
        %v876 = vshll.u32 %v722, 16
        %v878 = vrot.slane %v876, 1
        %v879 = vor.u32 %v874, %v878
        %v881 = vshll.u32 %v723, 16
        %v883 = vrot.slane %v881, 1
        %v884 = vsel %vm740, %v879, %v883
        %v886 = vshrl.u32 %v724, 16
        %v888 = vshll.u32 %v724, 16
        %v890 = vrot.slane %v888, 1
        %v891 = vor.u32 %v886, %v890
        %v893 = vshll.u32 %v725, 16
        %v895 = vrot.slane %v893, 1
        %v896 = vsel %vm740, %v891, %v895
        %v898 = vshrl.u32 %v726, 16
        %v900 = vshll.u32 %v726, 16
        %v902 = vrot.slane %v900, 1
        %v903 = vor.u32 %v898, %v902
        %v905 = vshll.u32 %v727, 16
        %v907 = vrot.slane %v905, 1
        %v908 = vsel %vm740, %v903, %v907
        %v910 = vshrl.u32 %v728, 16
        %v912 = vshll.u32 %v728, 16
        %v914 = vrot.slane %v912, 1
        %v915 = vor.u32 %v910, %v914
        %v917 = vshll.u32 %v729, 16
        %v919 = vrot.slane %v917, 1
        %v920 = vsel %vm740, %v915, %v919
        %v922 = vshrl.u32 %v730, 16
        %v924 = vshll.u32 %v730, 16
        %v926 = vrot.slane %v924, 1
        %v927 = vor.u32 %v922, %v926
        %v929 = vshll.u32 %v731, 16
        %v931 = vrot.slane %v929, 1
        %v932 = vsel %vm740, %v927, %v931
        %v934 = vshrl.u32 %v732, 16
        %v936 = vshll.u32 %v732, 16
        %v938 = vrot.slane %v936, 1
        %v939 = vor.u32 %v934, %v938
        %v941 = vshll.u32 %v733, 16
        %v943 = vrot.slane %v941, 1
        %v944 = vsel %vm740, %v939, %v943
        %v946 = vshrl.u32 %v734, 16
        %v948 = vshll.u32 %v734, 16
        %v950 = vrot.slane %v948, 1
        %v951 = vor.u32 %v946, %v950
        %v953 = vshll.u32 %v735, 16
        %v955 = vrot.slane %v953, 1
        %v956 = vsel %vm740, %v951, %v955
        %v958 = vshrl.u32 %v736, 16
        %v960 = vshll.u32 %v736, 16
        %v962 = vrot.slane %v960, 1
        %v963 = vor.u32 %v958, %v962
        %v965 = vshll.u32 %v737, 16
        %v967 = vrot.slane %v965, 1
        %v968 = vsel %vm740, %v963, %v967
        %v970 = vshrl.u32 %v738, 16
        %v972 = vshll.u32 %v738, 16
        %v974 = vrot.slane %v972, 1
        %v975 = vor.u32 %v970, %v974
        %v977 = vshll.u32 %v739, 16
        %v979 = vrot.slane %v977, 1
        %v980 = vsel %vm740, %v975, %v979
        %1001 = vst [vmem:[#allocation2 + $0x8] sm:$0xff] %v752
        %1002 = vst [vmem:[#allocation2 + $0x20] sm:$0xff] %v764
        %1003 = vst [vmem:[#allocation2 + $0x38] sm:$0xff] %v776
        %1004 = vst [vmem:[#allocation2 + $0x50] sm:$0xff] %v788
        %1005 = vst [vmem:[#allocation2 + $0x68] sm:$0xff] %v800
        %1006 = vst [vmem:[#allocation2 + $0x80] sm:$0xff] %v812
        %1007 = vst [vmem:[#allocation2 + $0x98] sm:$0xff] %v824
        %1008 = vst [vmem:[#allocation2 + $0xb0] sm:$0xff] %v836
        %1009 = vst [vmem:[#allocation2 + $0xc8] sm:$0xff] %v848
        %1010 = vst [vmem:[#allocation2 + $0xe0] sm:$0xff] %v860
        %1011 = vst [vmem:[#allocation2 + $0xf8] sm:$0xff] %v872
        %1012 = vst [vmem:[#allocation2 + $0x110] sm:$0xff] %v884
        %1013 = vst [vmem:[#allocation2 + $0x128] sm:$0xff] %v896
        %1014 = vst [vmem:[#allocation2 + $0x140] sm:$0xff] %v908
        %1015 = vst [vmem:[#allocation2 + $0x158] sm:$0xff] %v920
        %1016 = vst [vmem:[#allocation2 + $0x170] sm:$0xff] %v932
        %1017 = vst [vmem:[#allocation2 + $0x188] sm:$0xff] %v944
        %1018 = vst [vmem:[#allocation2 + $0x1a0] sm:$0xff] %v956
        %1019 = vst [vmem:[#allocation2 + $0x1b8] sm:$0xff] %v968
        %1020 = vst [vmem:[#allocation2 + $0x1d0] sm:$0xff] %v980
        %v1021 = vld [vmem:[%s339] sm:$0xe]
        %v1022 = vld [vmem:[%s339 + $0x4] sm:$0xf]
        %v1023 = vld [vmem:[%s339 + $0x8] sm:$0x1]
        %v1024 = vld [vmem:[%s339 + $0xc] sm:$0xe]
        %v1025 = vld [vmem:[%s339 + $0x10] sm:$0xf]
        %v1026 = vld [vmem:[%s339 + $0x14] sm:$0x1]
        %v1027 = vld [vmem:[%s339 + $0x18] sm:$0xe]
        %v1028 = vld [vmem:[%s339 + $0x1c] sm:$0xf]
        %v1029 = vld [vmem:[%s339 + $0x20] sm:$0x1]
        %v1030 = vld [vmem:[%s339 + $0x24] sm:$0xe]
        %v1031 = vld [vmem:[%s339 + $0x28] sm:$0xf]
        %v1032 = vld [vmem:[%s339 + $0x2c] sm:$0x1]
        %v1033 = vld [vmem:[%s339 + $0x30] sm:$0xe]
        %v1034 = vld [vmem:[%s339 + $0x34] sm:$0xf]
        %v1035 = vld [vmem:[%s339 + $0x38] sm:$0x1]
        %v1036 = vld [vmem:[%s339 + $0x3c] sm:$0xe]
        %v1037 = vld [vmem:[%s339 + $0x40] sm:$0xf]
        %v1038 = vld [vmem:[%s339 + $0x44] sm:$0x1]
        %v1039 = vld [vmem:[%s339 + $0x48] sm:$0xe]
        %v1040 = vld [vmem:[%s339 + $0x4c] sm:$0xf]
        %v1041 = vld [vmem:[%s339 + $0x50] sm:$0x1]
        %v1042 = vld [vmem:[%s339 + $0x54] sm:$0xe]
        %v1043 = vld [vmem:[%s339 + $0x58] sm:$0xf]
        %v1044 = vld [vmem:[%s339 + $0x5c] sm:$0x1]
        %v1045 = vld [vmem:[%s339 + $0x60] sm:$0xe]
        %v1046 = vld [vmem:[%s339 + $0x64] sm:$0xf]
        %v1047 = vld [vmem:[%s339 + $0x68] sm:$0x1]
        %v1048 = vld [vmem:[%s339 + $0x6c] sm:$0xe]
        %v1049 = vld [vmem:[%s339 + $0x70] sm:$0xf]
        %v1050 = vld [vmem:[%s339 + $0x74] sm:$0x1]
        %v1051 = vld [vmem:[%s339 + $0x78] sm:$0xe]
        %v1052 = vld [vmem:[%s339 + $0x7c] sm:$0xf]
        %v1053 = vld [vmem:[%s339 + $0x80] sm:$0x1]
        %v1054 = vld [vmem:[%s339 + $0x84] sm:$0xe]
        %v1055 = vld [vmem:[%s339 + $0x88] sm:$0xf]
        %v1056 = vld [vmem:[%s339 + $0x8c] sm:$0x1]
        %v1057 = vld [vmem:[%s339 + $0x90] sm:$0xe]
        %v1058 = vld [vmem:[%s339 + $0x94] sm:$0xf]
        %v1059 = vld [vmem:[%s339 + $0x98] sm:$0x1]
        %v1060 = vld [vmem:[%s339 + $0x9c] sm:$0xe]
        %v1061 = vld [vmem:[%s339 + $0xa0] sm:$0xf]
        %v1062 = vld [vmem:[%s339 + $0xa4] sm:$0x1]
        %v1063 = vld [vmem:[%s339 + $0xa8] sm:$0xe]
        %v1064 = vld [vmem:[%s339 + $0xac] sm:$0xf]
        %v1065 = vld [vmem:[%s339 + $0xb0] sm:$0x1]
        %v1066 = vld [vmem:[%s339 + $0xb4] sm:$0xe]
        %v1067 = vld [vmem:[%s339 + $0xb8] sm:$0xf]
        %v1068 = vld [vmem:[%s339 + $0xbc] sm:$0x1]
        %v1069 = vld [vmem:[%s339 + $0xc0] sm:$0xe]
        %v1070 = vld [vmem:[%s339 + $0xc4] sm:$0xf]
        %v1071 = vld [vmem:[%s339 + $0xc8] sm:$0x1]
        %v1072 = vld [vmem:[%s339 + $0xcc] sm:$0xe]
        %v1073 = vld [vmem:[%s339 + $0xd0] sm:$0xf]
        %v1074 = vld [vmem:[%s339 + $0xd4] sm:$0x1]
        %v1075 = vld [vmem:[%s339 + $0xd8] sm:$0xe]
        %v1076 = vld [vmem:[%s339 + $0xdc] sm:$0xf]
        %v1077 = vld [vmem:[%s339 + $0xe0] sm:$0x1]
        %v1078 = vld [vmem:[%s339 + $0xe4] sm:$0xe]
        %v1079 = vld [vmem:[%s339 + $0xe8] sm:$0xf]
        %v1080 = vld [vmem:[%s339 + $0xec] sm:$0x1]
        %v1141 = vunpack.c.l.b16 %v1021
        %v1142 = vunpack.c.l.b16 %v1022
        %v1143 = vunpack.c.l.b16 %v1023
        %v1144 = vunpack.c.l.b16 %v1024
        %v1145 = vunpack.c.l.b16 %v1025
        %v1146 = vunpack.c.l.b16 %v1026
        %v1147 = vunpack.c.l.b16 %v1027
        %v1148 = vunpack.c.l.b16 %v1028
        %v1149 = vunpack.c.l.b16 %v1029
        %v1150 = vunpack.c.l.b16 %v1030
        %v1151 = vunpack.c.l.b16 %v1031
        %v1152 = vunpack.c.l.b16 %v1032
        %v1153 = vunpack.c.l.b16 %v1033
        %v1154 = vunpack.c.l.b16 %v1034
        %v1155 = vunpack.c.l.b16 %v1035
        %v1156 = vunpack.c.l.b16 %v1036
        %v1157 = vunpack.c.l.b16 %v1037
        %v1158 = vunpack.c.l.b16 %v1038
        %v1159 = vunpack.c.l.b16 %v1039
        %v1160 = vunpack.c.l.b16 %v1040
        %v1161 = vunpack.c.l.b16 %v1041
        %v1162 = vunpack.c.l.b16 %v1042
        %v1163 = vunpack.c.l.b16 %v1043
        %v1164 = vunpack.c.l.b16 %v1044
        %v1165 = vunpack.c.l.b16 %v1045
        %v1166 = vunpack.c.l.b16 %v1046
        %v1167 = vunpack.c.l.b16 %v1047
        %v1168 = vunpack.c.l.b16 %v1048
        %v1169 = vunpack.c.l.b16 %v1049
        %v1170 = vunpack.c.l.b16 %v1050
        %v1171 = vunpack.c.l.b16 %v1051
        %v1172 = vunpack.c.l.b16 %v1052
        %v1173 = vunpack.c.l.b16 %v1053
        %v1174 = vunpack.c.l.b16 %v1054
        %v1175 = vunpack.c.l.b16 %v1055
        %v1176 = vunpack.c.l.b16 %v1056
        %v1177 = vunpack.c.l.b16 %v1057
        %v1178 = vunpack.c.l.b16 %v1058
        %v1179 = vunpack.c.l.b16 %v1059
        %v1180 = vunpack.c.l.b16 %v1060
        %v1181 = vunpack.c.l.b16 %v1061
        %v1182 = vunpack.c.l.b16 %v1062
        %v1183 = vunpack.c.l.b16 %v1063
        %v1184 = vunpack.c.l.b16 %v1064
        %v1185 = vunpack.c.l.b16 %v1065
        %v1186 = vunpack.c.l.b16 %v1066
        %v1187 = vunpack.c.l.b16 %v1067
        %v1188 = vunpack.c.l.b16 %v1068
        %v1189 = vunpack.c.l.b16 %v1069
        %v1190 = vunpack.c.l.b16 %v1070
        %v1191 = vunpack.c.l.b16 %v1071
        %v1192 = vunpack.c.l.b16 %v1072
        %v1193 = vunpack.c.l.b16 %v1073
        %v1194 = vunpack.c.l.b16 %v1074
        %v1195 = vunpack.c.l.b16 %v1075
        %v1196 = vunpack.c.l.b16 %v1076
        %v1197 = vunpack.c.l.b16 %v1077
        %v1198 = vunpack.c.l.b16 %v1078
        %v1199 = vunpack.c.l.b16 %v1079
        %v1200 = vunpack.c.l.b16 %v1080
        %v1201 = vpack.c.b16 %v1142, %v1141
        %v1202 = vpack.c.b16 %v1143, %v1143
        %v1203 = vpack.c.b16 %v1145, %v1144
        %v1204 = vpack.c.b16 %v1146, %v1146
        %v1205 = vpack.c.b16 %v1148, %v1147
        %v1206 = vpack.c.b16 %v1149, %v1149
        %v1207 = vpack.c.b16 %v1151, %v1150
        %v1208 = vpack.c.b16 %v1152, %v1152
        %v1209 = vpack.c.b16 %v1154, %v1153
        %v1210 = vpack.c.b16 %v1155, %v1155
        %v1211 = vpack.c.b16 %v1157, %v1156
        %v1212 = vpack.c.b16 %v1158, %v1158
        %v1213 = vpack.c.b16 %v1160, %v1159
        %v1214 = vpack.c.b16 %v1161, %v1161
        %v1215 = vpack.c.b16 %v1163, %v1162
        %v1216 = vpack.c.b16 %v1164, %v1164
        %v1217 = vpack.c.b16 %v1166, %v1165
        %v1218 = vpack.c.b16 %v1167, %v1167
        %v1219 = vpack.c.b16 %v1169, %v1168
        %v1220 = vpack.c.b16 %v1170, %v1170
        %v1221 = vpack.c.b16 %v1172, %v1171
        %v1222 = vpack.c.b16 %v1173, %v1173
        %v1223 = vpack.c.b16 %v1175, %v1174
        %v1224 = vpack.c.b16 %v1176, %v1176
        %v1225 = vpack.c.b16 %v1178, %v1177
        %v1226 = vpack.c.b16 %v1179, %v1179
        %v1227 = vpack.c.b16 %v1181, %v1180
        %v1228 = vpack.c.b16 %v1182, %v1182
        %v1229 = vpack.c.b16 %v1184, %v1183
        %v1230 = vpack.c.b16 %v1185, %v1185
        %v1231 = vpack.c.b16 %v1187, %v1186
        %v1232 = vpack.c.b16 %v1188, %v1188
        %v1233 = vpack.c.b16 %v1190, %v1189
        %v1234 = vpack.c.b16 %v1191, %v1191
        %v1235 = vpack.c.b16 %v1193, %v1192
        %v1236 = vpack.c.b16 %v1194, %v1194
        %v1237 = vpack.c.b16 %v1196, %v1195
        %v1238 = vpack.c.b16 %v1197, %v1197
        %v1239 = vpack.c.b16 %v1199, %v1198
        %v1240 = vpack.c.b16 %v1200, %v1200
        %vm1241 = vcmask 1046528
        %v1242 = vrot.slane %v1201, 1
        %v1243 = vrot.slane %v1202, 1
        %v1244 = vsel %vm1241, %v1242, %v1243
        %v1245 = vrot.slane %v1203, 1
        %v1246 = vrot.slane %v1204, 1
        %v1247 = vsel %vm1241, %v1245, %v1246
        %v1248 = vrot.slane %v1205, 1
        %v1249 = vrot.slane %v1206, 1
        %v1250 = vsel %vm1241, %v1248, %v1249
        %v1251 = vrot.slane %v1207, 1
        %v1252 = vrot.slane %v1208, 1
        %v1253 = vsel %vm1241, %v1251, %v1252
        %v1254 = vrot.slane %v1209, 1
        %v1255 = vrot.slane %v1210, 1
        %v1256 = vsel %vm1241, %v1254, %v1255
        %v1257 = vrot.slane %v1211, 1
        %v1258 = vrot.slane %v1212, 1
        %v1259 = vsel %vm1241, %v1257, %v1258
        %v1260 = vrot.slane %v1213, 1
        %v1261 = vrot.slane %v1214, 1
        %v1262 = vsel %vm1241, %v1260, %v1261
        %v1263 = vrot.slane %v1215, 1
        %v1264 = vrot.slane %v1216, 1
        %v1265 = vsel %vm1241, %v1263, %v1264
        %v1266 = vrot.slane %v1217, 1
        %v1267 = vrot.slane %v1218, 1
        %v1268 = vsel %vm1241, %v1266, %v1267
        %v1269 = vrot.slane %v1219, 1
        %v1270 = vrot.slane %v1220, 1
        %v1271 = vsel %vm1241, %v1269, %v1270
        %v1272 = vrot.slane %v1221, 1
        %v1273 = vrot.slane %v1222, 1
        %v1274 = vsel %vm1241, %v1272, %v1273
        %v1275 = vrot.slane %v1223, 1
        %v1276 = vrot.slane %v1224, 1
        %v1277 = vsel %vm1241, %v1275, %v1276
        %v1278 = vrot.slane %v1225, 1
        %v1279 = vrot.slane %v1226, 1
        %v1280 = vsel %vm1241, %v1278, %v1279
        %v1281 = vrot.slane %v1227, 1
        %v1282 = vrot.slane %v1228, 1
        %v1283 = vsel %vm1241, %v1281, %v1282
        %v1284 = vrot.slane %v1229, 1
        %v1285 = vrot.slane %v1230, 1
        %v1286 = vsel %vm1241, %v1284, %v1285
        %v1287 = vrot.slane %v1231, 1
        %v1288 = vrot.slane %v1232, 1
        %v1289 = vsel %vm1241, %v1287, %v1288
        %v1290 = vrot.slane %v1233, 1
        %v1291 = vrot.slane %v1234, 1
        %v1292 = vsel %vm1241, %v1290, %v1291
        %v1293 = vrot.slane %v1235, 1
        %v1294 = vrot.slane %v1236, 1
        %v1295 = vsel %vm1241, %v1293, %v1294
        %v1296 = vrot.slane %v1237, 1
        %v1297 = vrot.slane %v1238, 1
        %v1298 = vsel %vm1241, %v1296, %v1297
        %v1299 = vrot.slane %v1239, 1
        %v1300 = vrot.slane %v1240, 1
        %v1301 = vsel %vm1241, %v1299, %v1300
        %1322 = vst [vmem:[#allocation2 + $0x10] sm:$0xff] %v1244
        %1323 = vst [vmem:[#allocation2 + $0x28] sm:$0xff] %v1247
        %1324 = vst [vmem:[#allocation2 + $0x40] sm:$0xff] %v1250
        %1325 = vst [vmem:[#allocation2 + $0x58] sm:$0xff] %v1253
        %1326 = vst [vmem:[#allocation2 + $0x70] sm:$0xff] %v1256
        %1327 = vst [vmem:[#allocation2 + $0x88] sm:$0xff] %v1259
        %1328 = vst [vmem:[#allocation2 + $0xa0] sm:$0xff] %v1262
        %1329 = vst [vmem:[#allocation2 + $0xb8] sm:$0xff] %v1265
        %1330 = vst [vmem:[#allocation2 + $0xd0] sm:$0xff] %v1268
        %1331 = vst [vmem:[#allocation2 + $0xe8] sm:$0xff] %v1271
        %1332 = vst [vmem:[#allocation2 + $0x100] sm:$0xff] %v1274
        %1333 = vst [vmem:[#allocation2 + $0x118] sm:$0xff] %v1277
        %1334 = vst [vmem:[#allocation2 + $0x130] sm:$0xff] %v1280
        %1335 = vst [vmem:[#allocation2 + $0x148] sm:$0xff] %v1283
        %1336 = vst [vmem:[#allocation2 + $0x160] sm:$0xff] %v1286
        %1337 = vst [vmem:[#allocation2 + $0x178] sm:$0xff] %v1289
        %1338 = vst [vmem:[#allocation2 + $0x190] sm:$0xff] %v1292
        %1339 = vst [vmem:[#allocation2 + $0x1a8] sm:$0xff] %v1295
        %1340 = vst [vmem:[#allocation2 + $0x1c0] sm:$0xff] %v1298
        %1341 = vst [vmem:[#allocation2 + $0x1d8] sm:$0xff] %v1301
        %v1342 = vld [vmem:[#allocation2] sm:$0xff]
        %v1343 = vld [vmem:[#allocation2 + $0x8] sm:$0xff]
        %v1344 = vld [vmem:[#allocation2 + $0x10] sm:$0xff]
        %v1345 = vld [vmem:[#allocation2 + $0x18] sm:$0xff]
        %v1346 = vld [vmem:[#allocation2 + $0x20] sm:$0xff]
        %v1347 = vld [vmem:[#allocation2 + $0x28] sm:$0xff]
        %v1348 = vld [vmem:[#allocation2 + $0x30] sm:$0xff]
        %v1349 = vld [vmem:[#allocation2 + $0x38] sm:$0xff]
        %v1350 = vld [vmem:[#allocation2 + $0x40] sm:$0xff]
        %v1351 = vld [vmem:[#allocation2 + $0x48] sm:$0xff]
        %v1352 = vld [vmem:[#allocation2 + $0x50] sm:$0xff]
        %v1353 = vld [vmem:[#allocation2 + $0x58] sm:$0xff]
        %v1354 = vld [vmem:[#allocation2 + $0x60] sm:$0xff]
        %v1355 = vld [vmem:[#allocation2 + $0x68] sm:$0xff]
        %v1356 = vld [vmem:[#allocation2 + $0x70] sm:$0xff]
        %v1357 = vld [vmem:[#allocation2 + $0x78] sm:$0xff]
        %v1358 = vld [vmem:[#allocation2 + $0x80] sm:$0xff]
        %v1359 = vld [vmem:[#allocation2 + $0x88] sm:$0xff]
        %v1360 = vld [vmem:[#allocation2 + $0x90] sm:$0xff]
        %v1361 = vld [vmem:[#allocation2 + $0x98] sm:$0xff]
        %v1362 = vld [vmem:[#allocation2 + $0xa0] sm:$0xff]
        %v1363 = vld [vmem:[#allocation2 + $0xa8] sm:$0xff]
        %v1364 = vld [vmem:[#allocation2 + $0xb0] sm:$0xff]
        %v1365 = vld [vmem:[#allocation2 + $0xb8] sm:$0xff]
        %v1366 = vld [vmem:[#allocation2 + $0xc0] sm:$0xff]
        %v1367 = vld [vmem:[#allocation2 + $0xc8] sm:$0xff]
        %v1368 = vld [vmem:[#allocation2 + $0xd0] sm:$0xff]
        %v1369 = vld [vmem:[#allocation2 + $0xd8] sm:$0xff]
        %v1370 = vld [vmem:[#allocation2 + $0xe0] sm:$0xff]
        %v1371 = vld [vmem:[#allocation2 + $0xe8] sm:$0xff]
        %v1372 = vld [vmem:[#allocation2 + $0xf0] sm:$0xff]
        %v1373 = vld [vmem:[#allocation2 + $0xf8] sm:$0xff]
        %v1374 = vld [vmem:[#allocation2 + $0x100] sm:$0xff]
        %v1375 = vld [vmem:[#allocation2 + $0x108] sm:$0xff]
        %v1376 = vld [vmem:[#allocation2 + $0x110] sm:$0xff]
        %v1377 = vld [vmem:[#allocation2 + $0x118] sm:$0xff]
        %v1378 = vld [vmem:[#allocation2 + $0x120] sm:$0xff]
        %v1379 = vld [vmem:[#allocation2 + $0x128] sm:$0xff]
        %v1380 = vld [vmem:[#allocation2 + $0x130] sm:$0xff]
        %v1381 = vld [vmem:[#allocation2 + $0x138] sm:$0xff]
        %v1382 = vld [vmem:[#allocation2 + $0x140] sm:$0xff]
        %v1383 = vld [vmem:[#allocation2 + $0x148] sm:$0xff]
        %v1384 = vld [vmem:[#allocation2 + $0x150] sm:$0xff]
        %v1385 = vld [vmem:[#allocation2 + $0x158] sm:$0xff]
        %v1386 = vld [vmem:[#allocation2 + $0x160] sm:$0xff]
        %v1387 = vld [vmem:[#allocation2 + $0x168] sm:$0xff]
        %v1388 = vld [vmem:[#allocation2 + $0x170] sm:$0xff]
        %v1389 = vld [vmem:[#allocation2 + $0x178] sm:$0xff]
        %v1390 = vld [vmem:[#allocation2 + $0x180] sm:$0xff]
        %v1391 = vld [vmem:[#allocation2 + $0x188] sm:$0xff]
        %v1392 = vld [vmem:[#allocation2 + $0x190] sm:$0xff]
        %v1393 = vld [vmem:[#allocation2 + $0x198] sm:$0xff]
        %v1394 = vld [vmem:[#allocation2 + $0x1a0] sm:$0xff]
        %v1395 = vld [vmem:[#allocation2 + $0x1a8] sm:$0xff]
        %v1396 = vld [vmem:[%s1] sm:$0xf]
        %v1397 = vld [vmem:[%s1 + $0x4] sm:$0xf]
        %v1398 = vld [vmem:[%s1 + $0x8] sm:$0xf]
        %v1399 = vld [vmem:[%s1 + $0xc] sm:$0xf]
        %v1400 = vld [vmem:[%s1 + $0x10] sm:$0xf]
        %v1401 = vld [vmem:[%s1 + $0x14] sm:$0xf]
        %v1402 = vld [vmem:[%s1 + $0x18] sm:$0xf]
        %v1403 = vld [vmem:[%s1 + $0x1c] sm:$0xf]
        %v1404 = vld [vmem:[%s1 + $0x20] sm:$0xf]
        %v1405 = vld [vmem:[%s1 + $0x24] sm:$0xf]
        %v1406 = vld [vmem:[%s1 + $0x28] sm:$0xf]
        %v1407 = vld [vmem:[%s1 + $0x2c] sm:$0xf]
        %v1408 = vld [vmem:[%s1 + $0x30] sm:$0xf]
        %v1409 = vld [vmem:[%s1 + $0x34] sm:$0xf]
        %v1410 = vld [vmem:[%s1 + $0x38] sm:$0xf]
        %v1411 = vld [vmem:[%s1 + $0x3c] sm:$0xf]
        %v1412 = vld [vmem:[%s1 + $0x40] sm:$0xf]
        %v1413 = vld [vmem:[%s1 + $0x44] sm:$0xf]
        %v1414 = vld [vmem:[%s1 + $0x48] sm:$0xf]
        %v1415 = vld [vmem:[%s1 + $0x4c] sm:$0xf]
        %v1416 = vld [vmem:[%s1 + $0x50] sm:$0xf]
        %v1417 = vld [vmem:[%s1 + $0x54] sm:$0xf]
        %v1418 = vld [vmem:[%s1 + $0x58] sm:$0xf]
        %v1419 = vld [vmem:[%s1 + $0x5c] sm:$0xf]
        %v1420 = vld [vmem:[%s1 + $0x60] sm:$0xf]
        %v1421 = vld [vmem:[%s1 + $0x64] sm:$0xf]
        %v1422 = vld [vmem:[%s1 + $0x68] sm:$0xf]
        %v1423 = vld [vmem:[%s1 + $0x6c] sm:$0xf]
        %v1424 = vld [vmem:[%s1 + $0x70] sm:$0xf]
        %v1425 = vld [vmem:[%s1 + $0x74] sm:$0xf]
        %v1426 = vld [vmem:[%s1 + $0x78] sm:$0xf]
        %v1427 = vld [vmem:[%s1 + $0x7c] sm:$0xf]
        %v1428 = vld [vmem:[%s1 + $0x80] sm:$0xf]
        %v1429 = vld [vmem:[%s1 + $0x84] sm:$0xf]
        %v1430 = vld [vmem:[%s1 + $0x88] sm:$0xf]
        %v1431 = vld [vmem:[%s1 + $0x8c] sm:$0xf]
        %v1432 = vld [vmem:[%s1 + $0x90] sm:$0xf]
        %v1433 = vld [vmem:[%s1 + $0x94] sm:$0xf]
        %v1434 = vld [vmem:[%s1 + $0x98] sm:$0xf]
        %v1435 = vld [vmem:[%s1 + $0x9c] sm:$0xf]
        %v1436 = vld [vmem:[%s1 + $0xa0] sm:$0xf]
        %v1437 = vld [vmem:[%s1 + $0xa4] sm:$0xf]
        %v1438 = vld [vmem:[%s1 + $0xa8] sm:$0xf]
        %v1439 = vld [vmem:[%s1 + $0xac] sm:$0xf]
        %v1440 = vld [vmem:[%s1 + $0xb0] sm:$0xf]
        %v1441 = vld [vmem:[%s1 + $0xb4] sm:$0xf]
        %v1442 = vld [vmem:[%s1 + $0xb8] sm:$0xf]
        %v1443 = vld [vmem:[%s1 + $0xbc] sm:$0xf]
        %s1444 = scalar_lea.vmem [#allocation2], 24
        %v1445 = vld [vmem:[%s1444] sm:$0xff]
        %v1446 = vld [vmem:[%s1444 + $0x8] sm:$0xff]
        %v1447 = vld [vmem:[%s1444 + $0x10] sm:$0xff]
        %v1448 = vld [vmem:[%s1444 + $0x18] sm:$0xff]
        %v1449 = vld [vmem:[%s1444 + $0x20] sm:$0xff]
        %v1450 = vld [vmem:[%s1444 + $0x28] sm:$0xff]
        %v1451 = vld [vmem:[%s1444 + $0x30] sm:$0xff]
        %v1452 = vld [vmem:[%s1444 + $0x38] sm:$0xff]
        %v1453 = vld [vmem:[%s1444 + $0x40] sm:$0xff]
        %v1454 = vld [vmem:[%s1444 + $0x48] sm:$0xff]
        %v1455 = vld [vmem:[%s1444 + $0x50] sm:$0xff]
        %v1456 = vld [vmem:[%s1444 + $0x58] sm:$0xff]
        %v1457 = vld [vmem:[%s1444 + $0x60] sm:$0xff]
        %v1458 = vld [vmem:[%s1444 + $0x68] sm:$0xff]
        %v1459 = vld [vmem:[%s1444 + $0x70] sm:$0xff]
        %v1460 = vld [vmem:[%s1444 + $0x78] sm:$0xff]
        %v1461 = vld [vmem:[%s1444 + $0x80] sm:$0xff]
        %v1462 = vld [vmem:[%s1444 + $0x88] sm:$0xff]
        %v1463 = vld [vmem:[%s1444 + $0x90] sm:$0xff]
        %v1464 = vld [vmem:[%s1444 + $0x98] sm:$0xff]
        %v1465 = vld [vmem:[%s1444 + $0xa0] sm:$0xff]
        %v1466 = vld [vmem:[%s1444 + $0xa8] sm:$0xff]
        %v1467 = vld [vmem:[%s1444 + $0xb0] sm:$0xff]
        %v1468 = vld [vmem:[%s1444 + $0xb8] sm:$0xff]
        %v1469 = vld [vmem:[%s1444 + $0xc0] sm:$0xff]
        %v1470 = vld [vmem:[%s1444 + $0xc8] sm:$0xff]
        %v1471 = vld [vmem:[%s1444 + $0xd0] sm:$0xff]
        %v1472 = vld [vmem:[%s1444 + $0xd8] sm:$0xff]
        %v1473 = vld [vmem:[%s1444 + $0xe0] sm:$0xff]
        %v1474 = vld [vmem:[%s1444 + $0xe8] sm:$0xff]
        %v1475 = vld [vmem:[%s1444 + $0xf0] sm:$0xff]
        %v1476 = vld [vmem:[%s1444 + $0xf8] sm:$0xff]
        %v1477 = vld [vmem:[%s1444 + $0x100] sm:$0xff]
        %v1478 = vld [vmem:[%s1444 + $0x108] sm:$0xff]
        %v1479 = vld [vmem:[%s1444 + $0x110] sm:$0xff]
        %v1480 = vld [vmem:[%s1444 + $0x118] sm:$0xff]
        %v1481 = vld [vmem:[%s1444 + $0x120] sm:$0xff]
        %v1482 = vld [vmem:[%s1444 + $0x128] sm:$0xff]
        %v1483 = vld [vmem:[%s1444 + $0x130] sm:$0xff]
        %v1484 = vld [vmem:[%s1444 + $0x138] sm:$0xff]
        %v1485 = vld [vmem:[%s1444 + $0x140] sm:$0xff]
        %v1486 = vld [vmem:[%s1444 + $0x148] sm:$0xff]
        %v1487 = vld [vmem:[%s1444 + $0x150] sm:$0xff]
        %v1488 = vld [vmem:[%s1444 + $0x158] sm:$0xff]
        %v1489 = vld [vmem:[%s1444 + $0x160] sm:$0xff]
        %v1490 = vld [vmem:[%s1444 + $0x168] sm:$0xff]
        %v1491 = vld [vmem:[%s1444 + $0x170] sm:$0xff]
        %v1492 = vld [vmem:[%s1444 + $0x178] sm:$0xff]
        %v1493 = vld [vmem:[%s1444 + $0x180] sm:$0xff]
        %v1494 = vld [vmem:[%s1444 + $0x188] sm:$0xff]
        %v1495 = vld [vmem:[%s1444 + $0x190] sm:$0xff]
        %v1496 = vld [vmem:[%s1444 + $0x198] sm:$0xff]
        %v1497 = vld [vmem:[%s1444 + $0x1a0] sm:$0xff]
        %v1498 = vld [vmem:[%s1444 + $0x1a8] sm:$0xff]
        %s1499 = scalar_lea.vmem %s1, 192
        %v1500 = vld [vmem:[%s1499] sm:$0xf]
        %v1501 = vld [vmem:[%s1499 + $0x4] sm:$0xf]
        %v1502 = vld [vmem:[%s1499 + $0x8] sm:$0xf]
        %v1503 = vld [vmem:[%s1499 + $0xc] sm:$0xf]
        %v1504 = vld [vmem:[%s1499 + $0x10] sm:$0xf]
        %v1505 = vld [vmem:[%s1499 + $0x14] sm:$0xf]
        %v1506 = vld [vmem:[%s1499 + $0x18] sm:$0xf]
        %v1507 = vld [vmem:[%s1499 + $0x1c] sm:$0xf]
        %v1508 = vld [vmem:[%s1499 + $0x20] sm:$0xf]
        %v1509 = vld [vmem:[%s1499 + $0x24] sm:$0xf]
        %v1510 = vld [vmem:[%s1499 + $0x28] sm:$0xf]
        %v1511 = vld [vmem:[%s1499 + $0x2c] sm:$0xf]
        %v1512 = vld [vmem:[%s1499 + $0x30] sm:$0xf]
        %v1513 = vld [vmem:[%s1499 + $0x34] sm:$0xf]
        %v1514 = vld [vmem:[%s1499 + $0x38] sm:$0xf]
        %v1515 = vld [vmem:[%s1499 + $0x3c] sm:$0xf]
        %v1516 = vld [vmem:[%s1499 + $0x40] sm:$0xf]
        %v1517 = vld [vmem:[%s1499 + $0x44] sm:$0xf]
        %v1518 = vld [vmem:[%s1499 + $0x48] sm:$0xf]
        %v1519 = vld [vmem:[%s1499 + $0x4c] sm:$0xf]
        %v1520 = vld [vmem:[%s1499 + $0x50] sm:$0xf]
        %v1521 = vld [vmem:[%s1499 + $0x54] sm:$0xf]
        %v1522 = vld [vmem:[%s1499 + $0x58] sm:$0xf]
        %v1523 = vld [vmem:[%s1499 + $0x5c] sm:$0xf]
        %v1524 = vld [vmem:[%s1499 + $0x60] sm:$0xf]
        %v1525 = vld [vmem:[%s1499 + $0x64] sm:$0xf]
        %v1526 = vld [vmem:[%s1499 + $0x68] sm:$0xf]
        %v1527 = vld [vmem:[%s1499 + $0x6c] sm:$0xf]
        %v1528 = vld [vmem:[%s1499 + $0x70] sm:$0xf]
        %v1529 = vld [vmem:[%s1499 + $0x74] sm:$0xf]
        %v1530 = vld [vmem:[%s1499 + $0x78] sm:$0xf]
        %v1531 = vld [vmem:[%s1499 + $0x7c] sm:$0xf]
        %v1532 = vld [vmem:[%s1499 + $0x80] sm:$0xf]
        %v1533 = vld [vmem:[%s1499 + $0x84] sm:$0xf]
        %v1534 = vld [vmem:[%s1499 + $0x88] sm:$0xf]
        %v1535 = vld [vmem:[%s1499 + $0x8c] sm:$0xf]
        %v1536 = vld [vmem:[%s1499 + $0x90] sm:$0xf]
        %v1537 = vld [vmem:[%s1499 + $0x94] sm:$0xf]
        %v1538 = vld [vmem:[%s1499 + $0x98] sm:$0xf]
        %v1539 = vld [vmem:[%s1499 + $0x9c] sm:$0xf]
        %v1540 = vld [vmem:[%s1499 + $0xa0] sm:$0xf]
        %v1541 = vld [vmem:[%s1499 + $0xa4] sm:$0xf]
        %v1542 = vld [vmem:[%s1499 + $0xa8] sm:$0xf]
        %v1543 = vld [vmem:[%s1499 + $0xac] sm:$0xf]
        %v1544 = vld [vmem:[%s1499 + $0xb0] sm:$0xf]
        %v1545 = vld [vmem:[%s1499 + $0xb4] sm:$0xf]
        %v1546 = vld [vmem:[%s1499 + $0xb8] sm:$0xf]
        %v1547 = vld [vmem:[%s1499 + $0xbc] sm:$0xf]
        %v1596 = vunpack.c.l.b16 %v1500
        %v1597 = vunpack.c.l.b16 %v1501
        %v1598 = vunpack.c.l.b16 %v1502
        %v1599 = vunpack.c.l.b16 %v1503
        %v1600 = vunpack.c.l.b16 %v1504
        %v1601 = vunpack.c.l.b16 %v1505
        %v1602 = vunpack.c.l.b16 %v1506
        %v1603 = vunpack.c.l.b16 %v1507
        %v1604 = vunpack.c.l.b16 %v1508
        %v1605 = vunpack.c.l.b16 %v1509
        %v1606 = vunpack.c.l.b16 %v1510
        %v1607 = vunpack.c.l.b16 %v1511
        %v1608 = vunpack.c.l.b16 %v1512
        %v1609 = vunpack.c.l.b16 %v1513
        %v1610 = vunpack.c.l.b16 %v1514
        %v1611 = vunpack.c.l.b16 %v1515
        %v1612 = vunpack.c.l.b16 %v1516
        %v1613 = vunpack.c.l.b16 %v1517
        %v1614 = vunpack.c.l.b16 %v1518
        %v1615 = vunpack.c.l.b16 %v1519
        %v1616 = vunpack.c.l.b16 %v1520
        %v1617 = vunpack.c.l.b16 %v1521
        %v1618 = vunpack.c.l.b16 %v1522
        %v1619 = vunpack.c.l.b16 %v1523
        %v1620 = vunpack.c.l.b16 %v1524
        %v1621 = vunpack.c.l.b16 %v1525
        %v1622 = vunpack.c.l.b16 %v1526
        %v1623 = vunpack.c.l.b16 %v1527
        %v1624 = vunpack.c.l.b16 %v1528
        %v1625 = vunpack.c.l.b16 %v1529
        %v1626 = vunpack.c.l.b16 %v1530
        %v1627 = vunpack.c.l.b16 %v1531
        %v1628 = vunpack.c.l.b16 %v1532
        %v1629 = vunpack.c.l.b16 %v1533
        %v1630 = vunpack.c.l.b16 %v1534
        %v1631 = vunpack.c.l.b16 %v1535
        %v1632 = vunpack.c.l.b16 %v1536
        %v1633 = vunpack.c.l.b16 %v1537
        %v1634 = vunpack.c.l.b16 %v1538
        %v1635 = vunpack.c.l.b16 %v1539
        %v1636 = vunpack.c.l.b16 %v1540
        %v1637 = vunpack.c.l.b16 %v1541
        %v1638 = vunpack.c.l.b16 %v1542
        %v1639 = vunpack.c.l.b16 %v1543
        %v1640 = vunpack.c.l.b16 %v1544
        %v1641 = vunpack.c.l.b16 %v1545
        %v1642 = vunpack.c.l.b16 %v1546
        %v1643 = vunpack.c.l.b16 %v1547
        %v1644 = vpack.c.b16 %v1597, %v1596
        %v1645 = vpack.c.b16 %v1599, %v1598
        %v1646 = vpack.c.b16 %v1601, %v1600
        %v1647 = vpack.c.b16 %v1603, %v1602
        %v1648 = vpack.c.b16 %v1605, %v1604
        %v1649 = vpack.c.b16 %v1607, %v1606
        %v1650 = vpack.c.b16 %v1609, %v1608
        %v1651 = vpack.c.b16 %v1611, %v1610
        %v1652 = vpack.c.b16 %v1613, %v1612
        %v1653 = vpack.c.b16 %v1615, %v1614
        %v1654 = vpack.c.b16 %v1617, %v1616
        %v1655 = vpack.c.b16 %v1619, %v1618
        %v1656 = vpack.c.b16 %v1621, %v1620
        %v1657 = vpack.c.b16 %v1623, %v1622
        %v1658 = vpack.c.b16 %v1625, %v1624
        %v1659 = vpack.c.b16 %v1627, %v1626
        %v1660 = vpack.c.b16 %v1629, %v1628
        %v1661 = vpack.c.b16 %v1631, %v1630
        %v1662 = vpack.c.b16 %v1633, %v1632
        %v1663 = vpack.c.b16 %v1635, %v1634
        %v1664 = vpack.c.b16 %v1637, %v1636
        %v1665 = vpack.c.b16 %v1639, %v1638
        %v1666 = vpack.c.b16 %v1641, %v1640
        %v1667 = vpack.c.b16 %v1643, %v1642
        %1692 = vmatprep.subr.bf16.mxu0 0
        %1693 = vmatpush1.bf16.msra.mxu0 %v1644
        %1694 = vmatprep.subr.bf16.mxu0 0
        %1695 = vmatpush1.bf16.msra.mxu0 %v1645
        %1696 = vmatprep.subr.bf16.mxu0 0
        %1697 = vmatpush1.bf16.msra.mxu0 %v1646
        %1698 = vmatprep.subr.bf16.mxu0 0
        %1699 = vmatpush1.bf16.msra.mxu0 %v1647
        %1700 = vmatprep.subr.bf16.mxu0 0
        %1701 = vmatpush1.bf16.msra.mxu0 %v1648
        %1702 = vmatprep.subr.bf16.mxu0 0
        %1703 = vmatpush1.bf16.msra.mxu0 %v1649
        %1704 = vmatprep.subr.bf16.mxu0 0
        %1705 = vmatpush1.bf16.msra.mxu0 %v1650
        %1706 = vmatprep.subr.bf16.mxu0 0
        %1707 = vmatpush1.bf16.msra.mxu0 %v1651
        %1708 = vmatprep.subr.bf16.mxu0 0
        %1709 = vmatpush1.bf16.msra.mxu0 %v1652
        %1710 = vmatprep.subr.bf16.mxu0 0
        %1711 = vmatpush1.bf16.msra.mxu0 %v1653
        %1712 = vmatprep.subr.bf16.mxu0 0
        %1713 = vmatpush1.bf16.msra.mxu0 %v1654
        %1714 = vmatprep.subr.bf16.mxu0 0
        %1715 = vmatpush1.bf16.msra.mxu0 %v1655
        %1716 = vmatprep.subr.bf16.mxu0 0
        %1717 = vmatpush1.bf16.msra.mxu0 %v1656
        %1718 = vmatprep.subr.bf16.mxu0 0
        %1719 = vmatpush1.bf16.msra.mxu0 %v1657
        %1720 = vmatprep.subr.bf16.mxu0 0
        %1721 = vmatpush1.bf16.msra.mxu0 %v1658
        %1722 = vmatprep.subr.bf16.mxu0 0
        %1723 = vmatpush1.bf16.msra.mxu0 %v1659
        %1724 = vmatprep.mubr.bf16.mxu0 %v1446
        %1725 = vmatmul.mubr.bf16.gmra.mrb[0].mxu0 %v1445
        %v1726 = vpop.f32.mrb[0].mxu0
        %v1727 = vadd.f32 0.0, %v1726
        %v1728 = vpop.f32.mrb[0].mxu0
        %v1729 = vpop.f32.mrb[0].mxu0
        %v1730 = vadd.f32 0.0, %v1729
        %v1731 = vpop.f32.mrb[0].mxu0
        %1732 = vmatprep.mubr.bf16.mxu0 %v1449
        %1733 = vmatmul.mubr.bf16.gmra.mrb[0].mxu0 %v1448
        %v1734 = vpop.f32.mrb[0].mxu0
        %v1735 = vadd.f32 0.0, %v1734
        %v1736 = vpop.f32.mrb[0].mxu0
        %v1737 = vpop.f32.mrb[0].mxu0
        %v1738 = vadd.f32 0.0, %v1737
        %v1739 = vpop.f32.mrb[0].mxu0
        %1740 = vmatprep.mubr.bf16.mxu0 %v1452
        %1741 = vmatmul.mubr.bf16.gmra.mrb[0].mxu0 %v1451
        %v1742 = vpop.f32.mrb[0].mxu0
        %v1743 = vadd.f32 0.0, %v1742
        %v1744 = vpop.f32.mrb[0].mxu0
        %v1745 = vpop.f32.mrb[0].mxu0
        %v1746 = vadd.f32 0.0, %v1745
        %v1747 = vpop.f32.mrb[0].mxu0
        %1748 = vmatprep.mubr.bf16.mxu0 %v1455
        %1749 = vmatmul.mubr.bf16.gmra.mrb[0].mxu0 %v1454
        %v1750 = vpop.f32.mrb[0].mxu0
        %v1751 = vadd.f32 0.0, %v1750
        %v1752 = vpop.f32.mrb[0].mxu0
        %v1753 = vpop.f32.mrb[0].mxu0
        %v1754 = vadd.f32 0.0, %v1753
        %v1755 = vpop.f32.mrb[0].mxu0
        %1756 = vmatprep.mubr.bf16.mxu0 %v1458
        %1757 = vmatmul.mubr.bf16.gmra.mrb[0].mxu0 %v1457
        %v1758 = vpop.f32.mrb[0].mxu0
        %v1759 = vadd.f32 0.0, %v1758
        %v1760 = vpop.f32.mrb[0].mxu0
        %v1761 = vpop.f32.mrb[0].mxu0
        %v1762 = vadd.f32 0.0, %v1761
        %v1763 = vpop.f32.mrb[0].mxu0
        %1764 = vmatprep.mubr.bf16.mxu0 %v1461
        %1765 = vmatmul.mubr.bf16.gmra.mrb[0].mxu0 %v1460
        %v1766 = vpop.f32.mrb[0].mxu0
        %v1767 = vadd.f32 0.0, %v1766
        %v1768 = vpop.f32.mrb[0].mxu0
        %v1769 = vpop.f32.mrb[0].mxu0
        %v1770 = vadd.f32 0.0, %v1769
        %v1771 = vpop.f32.mrb[0].mxu0
        %1772 = vmatprep.mubr.bf16.mxu0 %v1464
        %1773 = vmatmul.mubr.bf16.gmra.mrb[0].mxu0 %v1463
        %v1774 = vpop.f32.mrb[0].mxu0
        %v1775 = vadd.f32 0.0, %v1774
        %v1776 = vpop.f32.mrb[0].mxu0
        %v1777 = vpop.f32.mrb[0].mxu0
        %v1778 = vadd.f32 0.0, %v1777
        %v1779 = vpop.f32.mrb[0].mxu0
        %1780 = vmatprep.mubr.bf16.mxu0 %v1467
        %1781 = vmatmul.mubr.bf16.gmra.mrb[0].mxu0 %v1466
        %v1782 = vpop.f32.mrb[0].mxu0
        %v1783 = vadd.f32 0.0, %v1782
        %v1784 = vpop.f32.mrb[0].mxu0
        %v1785 = vpop.f32.mrb[0].mxu0
        %v1786 = vadd.f32 0.0, %v1785
        %v1787 = vpop.f32.mrb[0].mxu0
        %1788 = vmatprep.mubr.bf16.mxu0 %v1470
        %1789 = vmatmul.mubr.bf16.gmra.mrb[0].mxu0 %v1469
        %v1790 = vpop.f32.mrb[0].mxu0
        %v1791 = vadd.f32 0.0, %v1790
        %v1792 = vpop.f32.mrb[0].mxu0
        %v1793 = vpop.f32.mrb[0].mxu0
        %v1794 = vadd.f32 0.0, %v1793
        %v1795 = vpop.f32.mrb[0].mxu0
        %1796 = vmatprep.mubr.bf16.mxu0 %v1473
        %1797 = vmatmul.mubr.bf16.gmra.mrb[0].mxu0 %v1472
        %v1798 = vpop.f32.mrb[0].mxu0
        %v1799 = vadd.f32 0.0, %v1798
        %v1800 = vpop.f32.mrb[0].mxu0
        %v1801 = vpop.f32.mrb[0].mxu0
        %v1802 = vadd.f32 0.0, %v1801
        %v1803 = vpop.f32.mrb[0].mxu0
        %1804 = vmatprep.mubr.bf16.mxu0 %v1476
        %1805 = vmatmul.mubr.bf16.gmra.mrb[0].mxu0 %v1475
        %v1806 = vpop.f32.mrb[0].mxu0
        %v1807 = vadd.f32 0.0, %v1806
        %v1808 = vpop.f32.mrb[0].mxu0
        %v1809 = vpop.f32.mrb[0].mxu0
        %v1810 = vadd.f32 0.0, %v1809
        %v1811 = vpop.f32.mrb[0].mxu0
        %1812 = vmatprep.mubr.bf16.mxu0 %v1479
        %1813 = vmatmul.mubr.bf16.gmra.mrb[0].mxu0 %v1478
        %v1814 = vpop.f32.mrb[0].mxu0
        %v1815 = vadd.f32 0.0, %v1814
        %v1816 = vpop.f32.mrb[0].mxu0
        %v1817 = vpop.f32.mrb[0].mxu0
        %v1818 = vadd.f32 0.0, %v1817
        %v1819 = vpop.f32.mrb[0].mxu0
        %1820 = vmatprep.mubr.bf16.mxu0 %v1482
        %1821 = vmatmul.mubr.bf16.gmra.mrb[0].mxu0 %v1481
        %v1822 = vpop.f32.mrb[0].mxu0
        %v1823 = vadd.f32 0.0, %v1822
        %v1824 = vpop.f32.mrb[0].mxu0
        %v1825 = vpop.f32.mrb[0].mxu0
        %v1826 = vadd.f32 0.0, %v1825
        %v1827 = vpop.f32.mrb[0].mxu0
        %1828 = vmatprep.mubr.bf16.mxu0 %v1485
        %1829 = vmatmul.mubr.bf16.gmra.mrb[0].mxu0 %v1484
        %v1830 = vpop.f32.mrb[0].mxu0
        %v1831 = vadd.f32 0.0, %v1830
        %v1832 = vpop.f32.mrb[0].mxu0
        %v1833 = vpop.f32.mrb[0].mxu0
        %v1834 = vadd.f32 0.0, %v1833
        %v1835 = vpop.f32.mrb[0].mxu0
        %1836 = vmatprep.mubr.bf16.mxu0 %v1488
        %1837 = vmatmul.mubr.bf16.gmra.mrb[0].mxu0 %v1487
        %v1838 = vpop.f32.mrb[0].mxu0
        %v1839 = vadd.f32 0.0, %v1838
        %v1840 = vpop.f32.mrb[0].mxu0
        %v1841 = vpop.f32.mrb[0].mxu0
        %v1842 = vadd.f32 0.0, %v1841
        %v1843 = vpop.f32.mrb[0].mxu0
        %1844 = vmatprep.mubr.bf16.mxu0 %v1491
        %1845 = vmatmul.mubr.bf16.gmra.mrb[0].mxu0 %v1490
        %v1846 = vpop.f32.mrb[0].mxu0
        %v1847 = vadd.f32 0.0, %v1846
        %v1848 = vpop.f32.mrb[0].mxu0
        %v1849 = vpop.f32.mrb[0].mxu0
        %v1850 = vadd.f32 0.0, %v1849
        %v1851 = vpop.f32.mrb[0].mxu0
        %1852 = vmatprep.mubr.bf16.mxu0 %v1494
        %1853 = vmatmul.mubr.bf16.gmra.mrb[0].mxu0 %v1493
        %v1854 = vpop.f32.mrb[0].mxu0
        %v1855 = vadd.f32 0.0, %v1854
        %v1856 = vpop.f32.mrb[0].mxu0
        %v1857 = vpop.f32.mrb[0].mxu0
        %v1858 = vadd.f32 0.0, %v1857
        %v1859 = vpop.f32.mrb[0].mxu0
        %1860 = vmatprep.mubr.bf16.mxu0 %v1497
        %1861 = vmatmul.mubr.bf16.gmra.mrb[0].mxu0 %v1496
        %v1862 = vpop.f32.mrb[0].mxu0
        %v1863 = vadd.f32 0.0, %v1862
        %v1864 = vpop.f32.mrb[0].mxu0
        %v1865 = vpop.f32.mrb[0].mxu0
        %v1866 = vadd.f32 0.0, %v1865
        %v1867 = vpop.f32.mrb[0].mxu0
        %1868 = vdwg.mxu0
        %1869 = vmatprep.subr.bf16.mxu0 0
        %1870 = vmatpush1.bf16.msra.mxu0 %v1660
        %1871 = vmatprep.subr.bf16.mxu0 0
        %1872 = vmatpush1.bf16.msra.mxu0 %v1661
        %1873 = vmatprep.subr.bf16.mxu0 0
        %1874 = vmatpush1.bf16.msra.mxu0 %v1662
        %1875 = vmatprep.subr.bf16.mxu0 0
        %1876 = vmatpush1.bf16.msra.mxu0 %v1663
        %1877 = vmatprep.subr.bf16.mxu0 0
        %1878 = vmatpush1.bf16.msra.mxu0 %v1664
        %1879 = vmatprep.subr.bf16.mxu0 0
        %1880 = vmatpush1.bf16.msra.mxu0 %v1665
        %1881 = vmatprep.subr.bf16.mxu0 0
        %1882 = vmatpush1.bf16.msra.mxu0 %v1666
        %1883 = vmatprep.subr.bf16.mxu0 0
        %1884 = vmatpush1.bf16.msra.mxu0 %v1667
        %1885 = vmatprep.subr.bf16.mxu0 0
        %1886 = vmatpush1.bf16.msra.mxu0 0
        %1887 = vmatprep.subr.bf16.mxu0 0
        %1888 = vmatpush1.bf16.msra.mxu0 0
        %1889 = vmatprep.subr.bf16.mxu0 0
        %1890 = vmatpush1.bf16.msra.mxu0 0
        %1891 = vmatprep.subr.bf16.mxu0 0
        %1892 = vmatpush1.bf16.msra.mxu0 0
        %1893 = vmatprep.subr.bf16.mxu0 0
        %1894 = vmatpush1.bf16.msra.mxu0 0
        %1895 = vmatprep.subr.bf16.mxu0 0
        %1896 = vmatpush1.bf16.msra.mxu0 0
        %1897 = vmatprep.subr.bf16.mxu0 0
        %1898 = vmatpush1.bf16.msra.mxu0 0
        %1899 = vmatprep.subr.bf16.mxu0 0
        %1900 = vmatpush1.bf16.msra.mxu0 0
        %1901 = vmatprep.mubr.bf16.mxu0 0
        %1902 = vmatmul.mubr.bf16.gmra.mrb[0].mxu0 %v1447
        %v1903 = vpop.f32.mrb[0].mxu0
        %v1904 = vadd.f32 %v1727, %v1903
        %v1905 = vpop.f32.mrb[0].mxu0
        %v1906 = vpop.f32.mrb[0].mxu0
        %v1907 = vadd.f32 %v1730, %v1906
        %v1908 = vpop.f32.mrb[0].mxu0
        %1909 = vmatprep.mubr.bf16.mxu0 0
        %1910 = vmatmul.mubr.bf16.gmra.mrb[0].mxu0 %v1450
        %v1911 = vpop.f32.mrb[0].mxu0
        %v1912 = vadd.f32 %v1735, %v1911
        %v1913 = vpop.f32.mrb[0].mxu0
        %v1914 = vpop.f32.mrb[0].mxu0
        %v1915 = vadd.f32 %v1738, %v1914
        %v1916 = vpop.f32.mrb[0].mxu0
        %1917 = vmatprep.mubr.bf16.mxu0 0
        %1918 = vmatmul.mubr.bf16.gmra.mrb[0].mxu0 %v1453
        %v1919 = vpop.f32.mrb[0].mxu0
        %v1920 = vadd.f32 %v1743, %v1919
        %v1921 = vpop.f32.mrb[0].mxu0
        %v1922 = vpop.f32.mrb[0].mxu0
        %v1923 = vadd.f32 %v1746, %v1922
        %v1924 = vpop.f32.mrb[0].mxu0
        %1925 = vmatprep.mubr.bf16.mxu0 0
        %1926 = vmatmul.mubr.bf16.gmra.mrb[0].mxu0 %v1456
        %v1927 = vpop.f32.mrb[0].mxu0
        %v1928 = vadd.f32 %v1751, %v1927
        %v1929 = vpop.f32.mrb[0].mxu0
        %v1930 = vpop.f32.mrb[0].mxu0
        %v1931 = vadd.f32 %v1754, %v1930
        %v1932 = vpop.f32.mrb[0].mxu0
        %1933 = vmatprep.mubr.bf16.mxu0 0
        %1934 = vmatmul.mubr.bf16.gmra.mrb[0].mxu0 %v1459
        %v1935 = vpop.f32.mrb[0].mxu0
        %v1936 = vadd.f32 %v1759, %v1935
        %v1937 = vpop.f32.mrb[0].mxu0
        %v1938 = vpop.f32.mrb[0].mxu0
        %v1939 = vadd.f32 %v1762, %v1938
        %v1940 = vpop.f32.mrb[0].mxu0
        %1941 = vmatprep.mubr.bf16.mxu0 0
        %1942 = vmatmul.mubr.bf16.gmra.mrb[0].mxu0 %v1462
        %v1943 = vpop.f32.mrb[0].mxu0
        %v1944 = vadd.f32 %v1767, %v1943
        %v1945 = vpop.f32.mrb[0].mxu0
        %v1946 = vpop.f32.mrb[0].mxu0
        %v1947 = vadd.f32 %v1770, %v1946
        %v1948 = vpop.f32.mrb[0].mxu0
        %1949 = vmatprep.mubr.bf16.mxu0 0
        %1950 = vmatmul.mubr.bf16.gmra.mrb[0].mxu0 %v1465
        %v1951 = vpop.f32.mrb[0].mxu0
        %v1952 = vadd.f32 %v1775, %v1951
        %v1953 = vpop.f32.mrb[0].mxu0
        %v1954 = vpop.f32.mrb[0].mxu0
        %v1955 = vadd.f32 %v1778, %v1954
        %v1956 = vpop.f32.mrb[0].mxu0
        %1957 = vmatprep.mubr.bf16.mxu0 0
        %1958 = vmatmul.mubr.bf16.gmra.mrb[0].mxu0 %v1468
        %v1959 = vpop.f32.mrb[0].mxu0
        %v1960 = vadd.f32 %v1783, %v1959
        %v1961 = vpop.f32.mrb[0].mxu0
        %v1962 = vpop.f32.mrb[0].mxu0
        %v1963 = vadd.f32 %v1786, %v1962
        %v1964 = vpop.f32.mrb[0].mxu0
        %1965 = vmatprep.mubr.bf16.mxu0 0
        %1966 = vmatmul.mubr.bf16.gmra.mrb[0].mxu0 %v1471
        %v1967 = vpop.f32.mrb[0].mxu0
        %v1968 = vadd.f32 %v1791, %v1967
        %v1969 = vpop.f32.mrb[0].mxu0
        %v1970 = vpop.f32.mrb[0].mxu0
        %v1971 = vadd.f32 %v1794, %v1970
        %v1972 = vpop.f32.mrb[0].mxu0
        %1973 = vmatprep.mubr.bf16.mxu0 0
        %1974 = vmatmul.mubr.bf16.gmra.mrb[0].mxu0 %v1474
        %v1975 = vpop.f32.mrb[0].mxu0
        %v1976 = vadd.f32 %v1799, %v1975
        %v1977 = vpop.f32.mrb[0].mxu0
        %v1978 = vpop.f32.mrb[0].mxu0
        %v1979 = vadd.f32 %v1802, %v1978
        %v1980 = vpop.f32.mrb[0].mxu0
        %1981 = vmatprep.mubr.bf16.mxu0 0
        %1982 = vmatmul.mubr.bf16.gmra.mrb[0].mxu0 %v1477
        %v1983 = vpop.f32.mrb[0].mxu0
        %v1984 = vadd.f32 %v1807, %v1983
        %v1985 = vpop.f32.mrb[0].mxu0
        %v1986 = vpop.f32.mrb[0].mxu0
        %v1987 = vadd.f32 %v1810, %v1986
        %v1988 = vpop.f32.mrb[0].mxu0
        %1989 = vmatprep.mubr.bf16.mxu0 0
        %1990 = vmatmul.mubr.bf16.gmra.mrb[0].mxu0 %v1480
        %v1991 = vpop.f32.mrb[0].mxu0
        %v1992 = vadd.f32 %v1815, %v1991
        %v1993 = vpop.f32.mrb[0].mxu0
        %v1994 = vpop.f32.mrb[0].mxu0
        %v1995 = vadd.f32 %v1818, %v1994
        %v1996 = vpop.f32.mrb[0].mxu0
        %1997 = vmatprep.mubr.bf16.mxu0 0
        %1998 = vmatmul.mubr.bf16.gmra.mrb[0].mxu0 %v1483
        %v1999 = vpop.f32.mrb[0].mxu0
        %v2000 = vadd.f32 %v1823, %v1999
        %v2001 = vpop.f32.mrb[0].mxu0
        %v2002 = vpop.f32.mrb[0].mxu0
        %v2003 = vadd.f32 %v1826, %v2002
        %v2004 = vpop.f32.mrb[0].mxu0
        %2005 = vmatprep.mubr.bf16.mxu0 0
        %2006 = vmatmul.mubr.bf16.gmra.mrb[0].mxu0 %v1486
        %v2007 = vpop.f32.mrb[0].mxu0
        %v2008 = vadd.f32 %v1831, %v2007
        %v2009 = vpop.f32.mrb[0].mxu0
        %v2010 = vpop.f32.mrb[0].mxu0
        %v2011 = vadd.f32 %v1834, %v2010
        %v2012 = vpop.f32.mrb[0].mxu0
        %2013 = vmatprep.mubr.bf16.mxu0 0
        %2014 = vmatmul.mubr.bf16.gmra.mrb[0].mxu0 %v1489
        %v2015 = vpop.f32.mrb[0].mxu0
        %v2016 = vadd.f32 %v1839, %v2015
        %v2017 = vpop.f32.mrb[0].mxu0
        %v2018 = vpop.f32.mrb[0].mxu0
        %v2019 = vadd.f32 %v1842, %v2018
        %v2020 = vpop.f32.mrb[0].mxu0
        %2021 = vmatprep.mubr.bf16.mxu0 0
        %2022 = vmatmul.mubr.bf16.gmra.mrb[0].mxu0 %v1492
        %v2023 = vpop.f32.mrb[0].mxu0
        %v2024 = vadd.f32 %v1847, %v2023
        %v2025 = vpop.f32.mrb[0].mxu0
        %v2026 = vpop.f32.mrb[0].mxu0
        %v2027 = vadd.f32 %v1850, %v2026
        %v2028 = vpop.f32.mrb[0].mxu0
        %2029 = vmatprep.mubr.bf16.mxu0 0
        %2030 = vmatmul.mubr.bf16.gmra.mrb[0].mxu0 %v1495
        %v2031 = vpop.f32.mrb[0].mxu0
        %v2032 = vadd.f32 %v1855, %v2031
        %v2033 = vpop.f32.mrb[0].mxu0
        %v2034 = vpop.f32.mrb[0].mxu0
        %v2035 = vadd.f32 %v1858, %v2034
        %v2036 = vpop.f32.mrb[0].mxu0
        %2037 = vmatprep.mubr.bf16.mxu0 0
        %2038 = vmatmul.mubr.bf16.gmra.mrb[0].mxu0 %v1498
        %v2039 = vpop.f32.mrb[0].mxu0
        %v2040 = vadd.f32 %v1863, %v2039
        %v2041 = vpop.f32.mrb[0].mxu0
        %v2042 = vpop.f32.mrb[0].mxu0
        %v2043 = vadd.f32 %v1866, %v2042
        %v2044 = vpop.f32.mrb[0].mxu0
        %2045 = vdwg.mxu0
        %v2094 = vunpack.c.l.b16 %v1396
        %v2095 = vunpack.c.l.b16 %v1397
        %v2096 = vunpack.c.l.b16 %v1398
        %v2097 = vunpack.c.l.b16 %v1399
        %v2098 = vunpack.c.l.b16 %v1400
        %v2099 = vunpack.c.l.b16 %v1401
        %v2100 = vunpack.c.l.b16 %v1402
        %v2101 = vunpack.c.l.b16 %v1403
        %v2102 = vunpack.c.l.b16 %v1404
        %v2103 = vunpack.c.l.b16 %v1405
        %v2104 = vunpack.c.l.b16 %v1406
        %v2105 = vunpack.c.l.b16 %v1407
        %v2106 = vunpack.c.l.b16 %v1408
        %v2107 = vunpack.c.l.b16 %v1409
        %v2108 = vunpack.c.l.b16 %v1410
        %v2109 = vunpack.c.l.b16 %v1411
        %v2110 = vunpack.c.l.b16 %v1412
        %v2111 = vunpack.c.l.b16 %v1413
        %v2112 = vunpack.c.l.b16 %v1414
        %v2113 = vunpack.c.l.b16 %v1415
        %v2114 = vunpack.c.l.b16 %v1416
        %v2115 = vunpack.c.l.b16 %v1417
        %v2116 = vunpack.c.l.b16 %v1418
        %v2117 = vunpack.c.l.b16 %v1419
        %v2118 = vunpack.c.l.b16 %v1420
        %v2119 = vunpack.c.l.b16 %v1421
        %v2120 = vunpack.c.l.b16 %v1422
        %v2121 = vunpack.c.l.b16 %v1423
        %v2122 = vunpack.c.l.b16 %v1424
        %v2123 = vunpack.c.l.b16 %v1425
        %v2124 = vunpack.c.l.b16 %v1426
        %v2125 = vunpack.c.l.b16 %v1427
        %v2126 = vunpack.c.l.b16 %v1428
        %v2127 = vunpack.c.l.b16 %v1429
        %v2128 = vunpack.c.l.b16 %v1430
        %v2129 = vunpack.c.l.b16 %v1431
        %v2130 = vunpack.c.l.b16 %v1432
        %v2131 = vunpack.c.l.b16 %v1433
        %v2132 = vunpack.c.l.b16 %v1434
        %v2133 = vunpack.c.l.b16 %v1435
        %v2134 = vunpack.c.l.b16 %v1436
        %v2135 = vunpack.c.l.b16 %v1437
        %v2136 = vunpack.c.l.b16 %v1438
        %v2137 = vunpack.c.l.b16 %v1439
        %v2138 = vunpack.c.l.b16 %v1440
        %v2139 = vunpack.c.l.b16 %v1441
        %v2140 = vunpack.c.l.b16 %v1442
        %v2141 = vunpack.c.l.b16 %v1443
        %v2142 = vpack.c.b16 %v2095, %v2094
        %v2143 = vpack.c.b16 %v2097, %v2096
        %v2144 = vpack.c.b16 %v2099, %v2098
        %v2145 = vpack.c.b16 %v2101, %v2100
        %v2146 = vpack.c.b16 %v2103, %v2102
        %v2147 = vpack.c.b16 %v2105, %v2104
        %v2148 = vpack.c.b16 %v2107, %v2106
        %v2149 = vpack.c.b16 %v2109, %v2108
        %v2150 = vpack.c.b16 %v2111, %v2110
        %v2151 = vpack.c.b16 %v2113, %v2112
        %v2152 = vpack.c.b16 %v2115, %v2114
        %v2153 = vpack.c.b16 %v2117, %v2116
        %v2154 = vpack.c.b16 %v2119, %v2118
        %v2155 = vpack.c.b16 %v2121, %v2120
        %v2156 = vpack.c.b16 %v2123, %v2122
        %v2157 = vpack.c.b16 %v2125, %v2124
        %v2158 = vpack.c.b16 %v2127, %v2126
        %v2159 = vpack.c.b16 %v2129, %v2128
        %v2160 = vpack.c.b16 %v2131, %v2130
        %v2161 = vpack.c.b16 %v2133, %v2132
        %v2162 = vpack.c.b16 %v2135, %v2134
        %v2163 = vpack.c.b16 %v2137, %v2136
        %v2164 = vpack.c.b16 %v2139, %v2138
        %v2165 = vpack.c.b16 %v2141, %v2140
        %2190 = vmatprep.subr.bf16.mxu0 0
        %2191 = vmatpush1.bf16.msra.mxu0 %v2142
        %2192 = vmatprep.subr.bf16.mxu0 0
        %2193 = vmatpush1.bf16.msra.mxu0 %v2143
        %2194 = vmatprep.subr.bf16.mxu0 0
        %2195 = vmatpush1.bf16.msra.mxu0 %v2144
        %2196 = vmatprep.subr.bf16.mxu0 0
        %2197 = vmatpush1.bf16.msra.mxu0 %v2145
        %2198 = vmatprep.subr.bf16.mxu0 0
        %2199 = vmatpush1.bf16.msra.mxu0 %v2146
        %2200 = vmatprep.subr.bf16.mxu0 0
        %2201 = vmatpush1.bf16.msra.mxu0 %v2147
        %2202 = vmatprep.subr.bf16.mxu0 0
        %2203 = vmatpush1.bf16.msra.mxu0 %v2148
        %2204 = vmatprep.subr.bf16.mxu0 0
        %2205 = vmatpush1.bf16.msra.mxu0 %v2149
        %2206 = vmatprep.subr.bf16.mxu0 0
        %2207 = vmatpush1.bf16.msra.mxu0 %v2150
        %2208 = vmatprep.subr.bf16.mxu0 0
        %2209 = vmatpush1.bf16.msra.mxu0 %v2151
        %2210 = vmatprep.subr.bf16.mxu0 0
        %2211 = vmatpush1.bf16.msra.mxu0 %v2152
        %2212 = vmatprep.subr.bf16.mxu0 0
        %2213 = vmatpush1.bf16.msra.mxu0 %v2153
        %2214 = vmatprep.subr.bf16.mxu0 0
        %2215 = vmatpush1.bf16.msra.mxu0 %v2154
        %2216 = vmatprep.subr.bf16.mxu0 0
        %2217 = vmatpush1.bf16.msra.mxu0 %v2155
        %2218 = vmatprep.subr.bf16.mxu0 0
        %2219 = vmatpush1.bf16.msra.mxu0 %v2156
        %2220 = vmatprep.subr.bf16.mxu0 0
        %2221 = vmatpush1.bf16.msra.mxu0 %v2157
        %2222 = vmatprep.mubr.bf16.mxu0 %v1343
        %2223 = vmatmul.mubr.bf16.gmra.mrb[0].mxu0 %v1342
        %v2224 = vpop.f32.mrb[0].mxu0
        %v2225 = vadd.f32 %v1904, %v2224
        %v2226 = vpop.f32.mrb[0].mxu0
        %v2227 = vpop.f32.mrb[0].mxu0
        %v2228 = vadd.f32 %v1907, %v2227
        %v2229 = vpop.f32.mrb[0].mxu0
        %2230 = vmatprep.mubr.bf16.mxu0 %v1346
        %2231 = vmatmul.mubr.bf16.gmra.mrb[0].mxu0 %v1345
        %v2232 = vpop.f32.mrb[0].mxu0
        %v2233 = vadd.f32 %v1912, %v2232
        %v2234 = vpop.f32.mrb[0].mxu0
        %v2235 = vpop.f32.mrb[0].mxu0
        %v2236 = vadd.f32 %v1915, %v2235
        %v2237 = vpop.f32.mrb[0].mxu0
        %2238 = vmatprep.mubr.bf16.mxu0 %v1349
        %2239 = vmatmul.mubr.bf16.gmra.mrb[0].mxu0 %v1348
        %v2240 = vpop.f32.mrb[0].mxu0
        %v2241 = vadd.f32 %v1920, %v2240
        %v2242 = vpop.f32.mrb[0].mxu0
        %v2243 = vpop.f32.mrb[0].mxu0
        %v2244 = vadd.f32 %v1923, %v2243
        %v2245 = vpop.f32.mrb[0].mxu0
        %2246 = vmatprep.mubr.bf16.mxu0 %v1352
        %2247 = vmatmul.mubr.bf16.gmra.mrb[0].mxu0 %v1351
        %v2248 = vpop.f32.mrb[0].mxu0
        %v2249 = vadd.f32 %v1928, %v2248
        %v2250 = vpop.f32.mrb[0].mxu0
        %v2251 = vpop.f32.mrb[0].mxu0
        %v2252 = vadd.f32 %v1931, %v2251
        %v2253 = vpop.f32.mrb[0].mxu0
        %2254 = vmatprep.mubr.bf16.mxu0 %v1355
        %2255 = vmatmul.mubr.bf16.gmra.mrb[0].mxu0 %v1354
        %v2256 = vpop.f32.mrb[0].mxu0
        %v2257 = vadd.f32 %v1936, %v2256
        %v2258 = vpop.f32.mrb[0].mxu0
        %v2259 = vpop.f32.mrb[0].mxu0
        %v2260 = vadd.f32 %v1939, %v2259
        %v2261 = vpop.f32.mrb[0].mxu0
        %2262 = vmatprep.mubr.bf16.mxu0 %v1358
        %2263 = vmatmul.mubr.bf16.gmra.mrb[0].mxu0 %v1357
        %v2264 = vpop.f32.mrb[0].mxu0
        %v2265 = vadd.f32 %v1944, %v2264
        %v2266 = vpop.f32.mrb[0].mxu0
        %v2267 = vpop.f32.mrb[0].mxu0
        %v2268 = vadd.f32 %v1947, %v2267
        %v2269 = vpop.f32.mrb[0].mxu0
        %2270 = vmatprep.mubr.bf16.mxu0 %v1361
        %2271 = vmatmul.mubr.bf16.gmra.mrb[0].mxu0 %v1360
        %v2272 = vpop.f32.mrb[0].mxu0
        %v2273 = vadd.f32 %v1952, %v2272
        %v2274 = vpop.f32.mrb[0].mxu0
        %v2275 = vpop.f32.mrb[0].mxu0
        %v2276 = vadd.f32 %v1955, %v2275
        %v2277 = vpop.f32.mrb[0].mxu0
        %2278 = vmatprep.mubr.bf16.mxu0 %v1364
        %2279 = vmatmul.mubr.bf16.gmra.mrb[0].mxu0 %v1363
        %v2280 = vpop.f32.mrb[0].mxu0
        %v2281 = vadd.f32 %v1960, %v2280
        %v2282 = vpop.f32.mrb[0].mxu0
        %v2283 = vpop.f32.mrb[0].mxu0
        %v2284 = vadd.f32 %v1963, %v2283
        %v2285 = vpop.f32.mrb[0].mxu0
        %2286 = vmatprep.mubr.bf16.mxu0 %v1367
        %2287 = vmatmul.mubr.bf16.gmra.mrb[0].mxu0 %v1366
        %v2288 = vpop.f32.mrb[0].mxu0
        %v2289 = vadd.f32 %v1968, %v2288
        %v2290 = vpop.f32.mrb[0].mxu0
        %v2291 = vpop.f32.mrb[0].mxu0
        %v2292 = vadd.f32 %v1971, %v2291
        %v2293 = vpop.f32.mrb[0].mxu0
        %2294 = vmatprep.mubr.bf16.mxu0 %v1370
        %2295 = vmatmul.mubr.bf16.gmra.mrb[0].mxu0 %v1369
        %v2296 = vpop.f32.mrb[0].mxu0
        %v2297 = vadd.f32 %v1976, %v2296
        %v2298 = vpop.f32.mrb[0].mxu0
        %v2299 = vpop.f32.mrb[0].mxu0
        %v2300 = vadd.f32 %v1979, %v2299
        %v2301 = vpop.f32.mrb[0].mxu0
        %2302 = vmatprep.mubr.bf16.mxu0 %v1373
        %2303 = vmatmul.mubr.bf16.gmra.mrb[0].mxu0 %v1372
        %v2304 = vpop.f32.mrb[0].mxu0
        %v2305 = vadd.f32 %v1984, %v2304
        %v2306 = vpop.f32.mrb[0].mxu0
        %v2307 = vpop.f32.mrb[0].mxu0
        %v2308 = vadd.f32 %v1987, %v2307
        %v2309 = vpop.f32.mrb[0].mxu0
        %2310 = vmatprep.mubr.bf16.mxu0 %v1376
        %2311 = vmatmul.mubr.bf16.gmra.mrb[0].mxu0 %v1375
        %v2312 = vpop.f32.mrb[0].mxu0
        %v2313 = vadd.f32 %v1992, %v2312
        %v2314 = vpop.f32.mrb[0].mxu0
        %v2315 = vpop.f32.mrb[0].mxu0
        %v2316 = vadd.f32 %v1995, %v2315
        %v2317 = vpop.f32.mrb[0].mxu0
        %2318 = vmatprep.mubr.bf16.mxu0 %v1379
        %2319 = vmatmul.mubr.bf16.gmra.mrb[0].mxu0 %v1378
        %v2320 = vpop.f32.mrb[0].mxu0
        %v2321 = vadd.f32 %v2000, %v2320
        %v2322 = vpop.f32.mrb[0].mxu0
        %v2323 = vpop.f32.mrb[0].mxu0
        %v2324 = vadd.f32 %v2003, %v2323
        %v2325 = vpop.f32.mrb[0].mxu0
        %2326 = vmatprep.mubr.bf16.mxu0 %v1382
        %2327 = vmatmul.mubr.bf16.gmra.mrb[0].mxu0 %v1381
        %v2328 = vpop.f32.mrb[0].mxu0
        %v2329 = vadd.f32 %v2008, %v2328
        %v2330 = vpop.f32.mrb[0].mxu0
        %v2331 = vpop.f32.mrb[0].mxu0
        %v2332 = vadd.f32 %v2011, %v2331
        %v2333 = vpop.f32.mrb[0].mxu0
        %2334 = vmatprep.mubr.bf16.mxu0 %v1385
        %2335 = vmatmul.mubr.bf16.gmra.mrb[0].mxu0 %v1384
        %v2336 = vpop.f32.mrb[0].mxu0
        %v2337 = vadd.f32 %v2016, %v2336
        %v2338 = vpop.f32.mrb[0].mxu0
        %v2339 = vpop.f32.mrb[0].mxu0
        %v2340 = vadd.f32 %v2019, %v2339
        %v2341 = vpop.f32.mrb[0].mxu0
        %2342 = vmatprep.mubr.bf16.mxu0 %v1388
        %2343 = vmatmul.mubr.bf16.gmra.mrb[0].mxu0 %v1387
        %v2344 = vpop.f32.mrb[0].mxu0
        %v2345 = vadd.f32 %v2024, %v2344
        %v2346 = vpop.f32.mrb[0].mxu0
        %v2347 = vpop.f32.mrb[0].mxu0
        %v2348 = vadd.f32 %v2027, %v2347
        %v2349 = vpop.f32.mrb[0].mxu0
        %2350 = vmatprep.mubr.bf16.mxu0 %v1391
        %2351 = vmatmul.mubr.bf16.gmra.mrb[0].mxu0 %v1390
        %v2352 = vpop.f32.mrb[0].mxu0
        %v2353 = vadd.f32 %v2032, %v2352
        %v2354 = vpop.f32.mrb[0].mxu0
        %v2355 = vpop.f32.mrb[0].mxu0
        %v2356 = vadd.f32 %v2035, %v2355
        %v2357 = vpop.f32.mrb[0].mxu0
        %2358 = vmatprep.mubr.bf16.mxu0 %v1394
        %2359 = vmatmul.mubr.bf16.gmra.mrb[0].mxu0 %v1393
        %v2360 = vpop.f32.mrb[0].mxu0
        %v2361 = vadd.f32 %v2040, %v2360
        %v2362 = vpop.f32.mrb[0].mxu0
        %v2363 = vpop.f32.mrb[0].mxu0
        %v2364 = vadd.f32 %v2043, %v2363
        %v2365 = vpop.f32.mrb[0].mxu0
        %2366 = vdwg.mxu0
        %2367 = vmatprep.subr.bf16.mxu0 0
        %2368 = vmatpush1.bf16.msra.mxu0 %v2158
        %2369 = vmatprep.subr.bf16.mxu0 0
        %2370 = vmatpush1.bf16.msra.mxu0 %v2159
        %2371 = vmatprep.subr.bf16.mxu0 0
        %2372 = vmatpush1.bf16.msra.mxu0 %v2160
        %2373 = vmatprep.subr.bf16.mxu0 0
        %2374 = vmatpush1.bf16.msra.mxu0 %v2161
        %2375 = vmatprep.subr.bf16.mxu0 0
        %2376 = vmatpush1.bf16.msra.mxu0 %v2162
        %2377 = vmatprep.subr.bf16.mxu0 0
        %2378 = vmatpush1.bf16.msra.mxu0 %v2163
        %2379 = vmatprep.subr.bf16.mxu0 0
        %2380 = vmatpush1.bf16.msra.mxu0 %v2164
        %2381 = vmatprep.subr.bf16.mxu0 0
        %2382 = vmatpush1.bf16.msra.mxu0 %v2165
        %2383 = vmatprep.subr.bf16.mxu0 0
        %2384 = vmatpush1.bf16.msra.mxu0 0
        %2385 = vmatprep.subr.bf16.mxu0 0
        %2386 = vmatpush1.bf16.msra.mxu0 0
        %2387 = vmatprep.subr.bf16.mxu0 0
        %2388 = vmatpush1.bf16.msra.mxu0 0
        %2389 = vmatprep.subr.bf16.mxu0 0
        %2390 = vmatpush1.bf16.msra.mxu0 0
        %2391 = vmatprep.subr.bf16.mxu0 0
        %2392 = vmatpush1.bf16.msra.mxu0 0
        %2393 = vmatprep.subr.bf16.mxu0 0
        %2394 = vmatpush1.bf16.msra.mxu0 0
        %2395 = vmatprep.subr.bf16.mxu0 0
        %2396 = vmatpush1.bf16.msra.mxu0 0
        %2397 = vmatprep.subr.bf16.mxu0 0
        %2398 = vmatpush1.bf16.msra.mxu0 0
        %2399 = vmatprep.mubr.bf16.mxu0 0
        %2400 = vmatmul.mubr.bf16.gmra.mrb[0].mxu0 %v1344
        %v2401 = vpop.f32.mrb[0].mxu0
        %v2402 = vadd.f32 %v2225, %v2401
        %v2403 = vpop.f32.mrb[0].mxu0
        %v2404 = vpop.f32.mrb[0].mxu0
        %v2405 = vadd.f32 %v2228, %v2404
        %v2406 = vpop.f32.mrb[0].mxu0
        %2407 = vmatprep.mubr.bf16.mxu0 0
        %2408 = vmatmul.mubr.bf16.gmra.mrb[0].mxu0 %v1347
        %v2409 = vpop.f32.mrb[0].mxu0
        %v2410 = vadd.f32 %v2233, %v2409
        %v2411 = vpop.f32.mrb[0].mxu0
        %v2412 = vpop.f32.mrb[0].mxu0
        %v2413 = vadd.f32 %v2236, %v2412
        %v2414 = vpop.f32.mrb[0].mxu0
        %2415 = vmatprep.mubr.bf16.mxu0 0
        %2416 = vmatmul.mubr.bf16.gmra.mrb[0].mxu0 %v1350
        %v2417 = vpop.f32.mrb[0].mxu0
        %v2418 = vadd.f32 %v2241, %v2417
        %v2419 = vpop.f32.mrb[0].mxu0
        %v2420 = vpop.f32.mrb[0].mxu0
        %v2421 = vadd.f32 %v2244, %v2420
        %v2422 = vpop.f32.mrb[0].mxu0
        %2423 = vmatprep.mubr.bf16.mxu0 0
        %2424 = vmatmul.mubr.bf16.gmra.mrb[0].mxu0 %v1353
        %v2425 = vpop.f32.mrb[0].mxu0
        %v2426 = vadd.f32 %v2249, %v2425
        %v2427 = vpop.f32.mrb[0].mxu0
        %v2428 = vpop.f32.mrb[0].mxu0
        %v2429 = vadd.f32 %v2252, %v2428
        %v2430 = vpop.f32.mrb[0].mxu0
        %2431 = vmatprep.mubr.bf16.mxu0 0
        %2432 = vmatmul.mubr.bf16.gmra.mrb[0].mxu0 %v1356
        %v2433 = vpop.f32.mrb[0].mxu0
        %v2434 = vadd.f32 %v2257, %v2433
        %v2435 = vpop.f32.mrb[0].mxu0
        %v2436 = vpop.f32.mrb[0].mxu0
        %v2437 = vadd.f32 %v2260, %v2436
        %v2438 = vpop.f32.mrb[0].mxu0
        %2439 = vmatprep.mubr.bf16.mxu0 0
        %2440 = vmatmul.mubr.bf16.gmra.mrb[0].mxu0 %v1359
        %v2441 = vpop.f32.mrb[0].mxu0
        %v2442 = vadd.f32 %v2265, %v2441
        %v2443 = vpop.f32.mrb[0].mxu0
        %v2444 = vpop.f32.mrb[0].mxu0
        %v2445 = vadd.f32 %v2268, %v2444
        %v2446 = vpop.f32.mrb[0].mxu0
        %2447 = vmatprep.mubr.bf16.mxu0 0
        %2448 = vmatmul.mubr.bf16.gmra.mrb[0].mxu0 %v1362
        %v2449 = vpop.f32.mrb[0].mxu0
        %v2450 = vadd.f32 %v2273, %v2449
        %v2451 = vpop.f32.mrb[0].mxu0
        %v2452 = vpop.f32.mrb[0].mxu0
        %v2453 = vadd.f32 %v2276, %v2452
        %v2454 = vpop.f32.mrb[0].mxu0
        %2455 = vmatprep.mubr.bf16.mxu0 0
        %2456 = vmatmul.mubr.bf16.gmra.mrb[0].mxu0 %v1365
        %v2457 = vpop.f32.mrb[0].mxu0
        %v2458 = vadd.f32 %v2281, %v2457
        %v2459 = vpop.f32.mrb[0].mxu0
        %v2460 = vpop.f32.mrb[0].mxu0
        %v2461 = vadd.f32 %v2284, %v2460
        %v2462 = vpop.f32.mrb[0].mxu0
        %2463 = vmatprep.mubr.bf16.mxu0 0
        %2464 = vmatmul.mubr.bf16.gmra.mrb[0].mxu0 %v1368
        %v2465 = vpop.f32.mrb[0].mxu0
        %v2466 = vadd.f32 %v2289, %v2465
        %v2467 = vpop.f32.mrb[0].mxu0
        %v2468 = vpop.f32.mrb[0].mxu0
        %v2469 = vadd.f32 %v2292, %v2468
        %v2470 = vpop.f32.mrb[0].mxu0
        %2471 = vmatprep.mubr.bf16.mxu0 0
        %2472 = vmatmul.mubr.bf16.gmra.mrb[0].mxu0 %v1371
        %v2473 = vpop.f32.mrb[0].mxu0
        %v2474 = vadd.f32 %v2297, %v2473
        %v2475 = vpop.f32.mrb[0].mxu0
        %v2476 = vpop.f32.mrb[0].mxu0
        %v2477 = vadd.f32 %v2300, %v2476
        %v2478 = vpop.f32.mrb[0].mxu0
        %2479 = vmatprep.mubr.bf16.mxu0 0
        %2480 = vmatmul.mubr.bf16.gmra.mrb[0].mxu0 %v1374
        %v2481 = vpop.f32.mrb[0].mxu0
        %v2482 = vadd.f32 %v2305, %v2481
        %v2483 = vpop.f32.mrb[0].mxu0
        %v2484 = vpop.f32.mrb[0].mxu0
        %v2485 = vadd.f32 %v2308, %v2484
        %v2486 = vpop.f32.mrb[0].mxu0
        %2487 = vmatprep.mubr.bf16.mxu0 0
        %2488 = vmatmul.mubr.bf16.gmra.mrb[0].mxu0 %v1377
        %v2489 = vpop.f32.mrb[0].mxu0
        %v2490 = vadd.f32 %v2313, %v2489
        %v2491 = vpop.f32.mrb[0].mxu0
        %v2492 = vpop.f32.mrb[0].mxu0
        %v2493 = vadd.f32 %v2316, %v2492
        %v2494 = vpop.f32.mrb[0].mxu0
        %2495 = vmatprep.mubr.bf16.mxu0 0
        %2496 = vmatmul.mubr.bf16.gmra.mrb[0].mxu0 %v1380
        %v2497 = vpop.f32.mrb[0].mxu0
        %v2498 = vadd.f32 %v2321, %v2497
        %v2499 = vpop.f32.mrb[0].mxu0
        %v2500 = vpop.f32.mrb[0].mxu0
        %v2501 = vadd.f32 %v2324, %v2500
        %v2502 = vpop.f32.mrb[0].mxu0
        %2503 = vmatprep.mubr.bf16.mxu0 0
        %2504 = vmatmul.mubr.bf16.gmra.mrb[0].mxu0 %v1383
        %v2505 = vpop.f32.mrb[0].mxu0
        %v2506 = vadd.f32 %v2329, %v2505
        %v2507 = vpop.f32.mrb[0].mxu0
        %v2508 = vpop.f32.mrb[0].mxu0
        %v2509 = vadd.f32 %v2332, %v2508
        %v2510 = vpop.f32.mrb[0].mxu0
        %2511 = vmatprep.mubr.bf16.mxu0 0
        %2512 = vmatmul.mubr.bf16.gmra.mrb[0].mxu0 %v1386
        %v2513 = vpop.f32.mrb[0].mxu0
        %v2514 = vadd.f32 %v2337, %v2513
        %v2515 = vpop.f32.mrb[0].mxu0
        %v2516 = vpop.f32.mrb[0].mxu0
        %v2517 = vadd.f32 %v2340, %v2516
        %v2518 = vpop.f32.mrb[0].mxu0
        %2519 = vmatprep.mubr.bf16.mxu0 0
        %2520 = vmatmul.mubr.bf16.gmra.mrb[0].mxu0 %v1389
        %v2521 = vpop.f32.mrb[0].mxu0
        %v2522 = vadd.f32 %v2345, %v2521
        %v2523 = vpop.f32.mrb[0].mxu0
        %v2524 = vpop.f32.mrb[0].mxu0
        %v2525 = vadd.f32 %v2348, %v2524
        %v2526 = vpop.f32.mrb[0].mxu0
        %2527 = vmatprep.mubr.bf16.mxu0 0
        %2528 = vmatmul.mubr.bf16.gmra.mrb[0].mxu0 %v1392
        %v2529 = vpop.f32.mrb[0].mxu0
        %v2530 = vadd.f32 %v2353, %v2529
        %v2531 = vpop.f32.mrb[0].mxu0
        %v2532 = vpop.f32.mrb[0].mxu0
        %v2533 = vadd.f32 %v2356, %v2532
        %v2534 = vpop.f32.mrb[0].mxu0
        %2535 = vmatprep.mubr.bf16.mxu0 0
        %2536 = vmatmul.mubr.bf16.gmra.mrb[0].mxu0 %v1395
        %v2537 = vpop.f32.mrb[0].mxu0
        %v2538 = vadd.f32 %v2361, %v2537
        %v2539 = vpop.f32.mrb[0].mxu0
        %v2540 = vpop.f32.mrb[0].mxu0
        %v2541 = vadd.f32 %v2364, %v2540
        %v2542 = vpop.f32.mrb[0].mxu0
        %2543 = vdwg.mxu0
        %s2544 = scalar_lea.vmem [#allocation2], 48
        %v2545 = vld [vmem:[%s2544] sm:$0xff]
        %v2546 = vld [vmem:[%s2544 + $0x8] sm:$0xff]
        %v2547 = vld [vmem:[%s2544 + $0x10] sm:$0xff]
        %v2548 = vld [vmem:[%s2544 + $0x18] sm:$0xff]
        %v2549 = vld [vmem:[%s2544 + $0x20] sm:$0xff]
        %v2550 = vld [vmem:[%s2544 + $0x28] sm:$0xff]
        %v2551 = vld [vmem:[%s2544 + $0x30] sm:$0xff]
        %v2552 = vld [vmem:[%s2544 + $0x38] sm:$0xff]
        %v2553 = vld [vmem:[%s2544 + $0x40] sm:$0xff]
        %v2554 = vld [vmem:[%s2544 + $0x48] sm:$0xff]
        %v2555 = vld [vmem:[%s2544 + $0x50] sm:$0xff]
        %v2556 = vld [vmem:[%s2544 + $0x58] sm:$0xff]
        %v2557 = vld [vmem:[%s2544 + $0x60] sm:$0xff]
        %v2558 = vld [vmem:[%s2544 + $0x68] sm:$0xff]
        %v2559 = vld [vmem:[%s2544 + $0x70] sm:$0xff]
        %v2560 = vld [vmem:[%s2544 + $0x78] sm:$0xff]
        %v2561 = vld [vmem:[%s2544 + $0x80] sm:$0xff]
        %v2562 = vld [vmem:[%s2544 + $0x88] sm:$0xff]
        %v2563 = vld [vmem:[%s2544 + $0x90] sm:$0xff]
        %v2564 = vld [vmem:[%s2544 + $0x98] sm:$0xff]
        %v2565 = vld [vmem:[%s2544 + $0xa0] sm:$0xff]
        %v2566 = vld [vmem:[%s2544 + $0xa8] sm:$0xff]
        %v2567 = vld [vmem:[%s2544 + $0xb0] sm:$0xff]
        %v2568 = vld [vmem:[%s2544 + $0xb8] sm:$0xff]
        %v2569 = vld [vmem:[%s2544 + $0xc0] sm:$0xff]
        %v2570 = vld [vmem:[%s2544 + $0xc8] sm:$0xff]
        %v2571 = vld [vmem:[%s2544 + $0xd0] sm:$0xff]
        %v2572 = vld [vmem:[%s2544 + $0xd8] sm:$0xff]
        %v2573 = vld [vmem:[%s2544 + $0xe0] sm:$0xff]
        %v2574 = vld [vmem:[%s2544 + $0xe8] sm:$0xff]
        %v2575 = vld [vmem:[%s2544 + $0xf0] sm:$0xff]
        %v2576 = vld [vmem:[%s2544 + $0xf8] sm:$0xff]
        %v2577 = vld [vmem:[%s2544 + $0x100] sm:$0xff]
        %v2578 = vld [vmem:[%s2544 + $0x108] sm:$0xff]
        %v2579 = vld [vmem:[%s2544 + $0x110] sm:$0xff]
        %v2580 = vld [vmem:[%s2544 + $0x118] sm:$0xff]
        %v2581 = vld [vmem:[%s2544 + $0x120] sm:$0xff]
        %v2582 = vld [vmem:[%s2544 + $0x128] sm:$0xff]
        %v2583 = vld [vmem:[%s2544 + $0x130] sm:$0xff]
        %v2584 = vld [vmem:[%s2544 + $0x138] sm:$0xff]
        %v2585 = vld [vmem:[%s2544 + $0x140] sm:$0xff]
        %v2586 = vld [vmem:[%s2544 + $0x148] sm:$0xff]
        %v2587 = vld [vmem:[%s2544 + $0x150] sm:$0xff]
        %v2588 = vld [vmem:[%s2544 + $0x158] sm:$0xff]
        %v2589 = vld [vmem:[%s2544 + $0x160] sm:$0xff]
        %v2590 = vld [vmem:[%s2544 + $0x168] sm:$0xff]
        %v2591 = vld [vmem:[%s2544 + $0x170] sm:$0xff]
        %v2592 = vld [vmem:[%s2544 + $0x178] sm:$0xff]
        %v2593 = vld [vmem:[%s2544 + $0x180] sm:$0xff]
        %v2594 = vld [vmem:[%s2544 + $0x188] sm:$0xff]
        %v2595 = vld [vmem:[%s2544 + $0x190] sm:$0xff]
        %v2596 = vld [vmem:[%s2544 + $0x198] sm:$0xff]
        %v2597 = vld [vmem:[%s2544 + $0x1a0] sm:$0xff]
        %v2598 = vld [vmem:[%s2544 + $0x1a8] sm:$0xff]
        %s2599 = scalar_lea.vmem %s1, 384
        %v2600 = vld [vmem:[%s2599] sm:$0xf]
        %v2601 = vld [vmem:[%s2599 + $0x4] sm:$0xf]
        %v2602 = vld [vmem:[%s2599 + $0x8] sm:$0xf]
        %v2603 = vld [vmem:[%s2599 + $0xc] sm:$0xf]
        %v2604 = vld [vmem:[%s2599 + $0x10] sm:$0xf]
        %v2605 = vld [vmem:[%s2599 + $0x14] sm:$0xf]
        %v2606 = vld [vmem:[%s2599 + $0x18] sm:$0xf]
        %v2607 = vld [vmem:[%s2599 + $0x1c] sm:$0xf]
        %v2608 = vld [vmem:[%s2599 + $0x20] sm:$0xf]
        %v2609 = vld [vmem:[%s2599 + $0x24] sm:$0xf]
        %v2610 = vld [vmem:[%s2599 + $0x28] sm:$0xf]
        %v2611 = vld [vmem:[%s2599 + $0x2c] sm:$0xf]
        %v2612 = vld [vmem:[%s2599 + $0x30] sm:$0xf]
        %v2613 = vld [vmem:[%s2599 + $0x34] sm:$0xf]
        %v2614 = vld [vmem:[%s2599 + $0x38] sm:$0xf]
        %v2615 = vld [vmem:[%s2599 + $0x3c] sm:$0xf]
        %v2616 = vld [vmem:[%s2599 + $0x40] sm:$0xf]
        %v2617 = vld [vmem:[%s2599 + $0x44] sm:$0xf]
        %v2618 = vld [vmem:[%s2599 + $0x48] sm:$0xf]
        %v2619 = vld [vmem:[%s2599 + $0x4c] sm:$0xf]
        %v2620 = vld [vmem:[%s2599 + $0x50] sm:$0xf]
        %v2621 = vld [vmem:[%s2599 + $0x54] sm:$0xf]
        %v2622 = vld [vmem:[%s2599 + $0x58] sm:$0xf]
        %v2623 = vld [vmem:[%s2599 + $0x5c] sm:$0xf]
        %v2624 = vld [vmem:[%s2599 + $0x60] sm:$0xf]
        %v2625 = vld [vmem:[%s2599 + $0x64] sm:$0xf]
        %v2626 = vld [vmem:[%s2599 + $0x68] sm:$0xf]
        %v2627 = vld [vmem:[%s2599 + $0x6c] sm:$0xf]
        %v2628 = vld [vmem:[%s2599 + $0x70] sm:$0xf]
        %v2629 = vld [vmem:[%s2599 + $0x74] sm:$0xf]
        %v2630 = vld [vmem:[%s2599 + $0x78] sm:$0xf]
        %v2631 = vld [vmem:[%s2599 + $0x7c] sm:$0xf]
        %v2632 = vld [vmem:[%s2599 + $0x80] sm:$0xf]
        %v2633 = vld [vmem:[%s2599 + $0x84] sm:$0xf]
        %v2634 = vld [vmem:[%s2599 + $0x88] sm:$0xf]
        %v2635 = vld [vmem:[%s2599 + $0x8c] sm:$0xf]
        %v2636 = vld [vmem:[%s2599 + $0x90] sm:$0xf]
        %v2637 = vld [vmem:[%s2599 + $0x94] sm:$0xf]
        %v2638 = vld [vmem:[%s2599 + $0x98] sm:$0xf]
        %v2639 = vld [vmem:[%s2599 + $0x9c] sm:$0xf]
        %v2640 = vld [vmem:[%s2599 + $0xa0] sm:$0xf]
        %v2641 = vld [vmem:[%s2599 + $0xa4] sm:$0xf]
        %v2642 = vld [vmem:[%s2599 + $0xa8] sm:$0xf]
        %v2643 = vld [vmem:[%s2599 + $0xac] sm:$0xf]
        %v2644 = vld [vmem:[%s2599 + $0xb0] sm:$0xf]
        %v2645 = vld [vmem:[%s2599 + $0xb4] sm:$0xf]
        %v2646 = vld [vmem:[%s2599 + $0xb8] sm:$0xf]
        %v2647 = vld [vmem:[%s2599 + $0xbc] sm:$0xf]
        %v2696 = vunpack.c.l.b16 %v2600
        %v2697 = vunpack.c.l.b16 %v2601
        %v2698 = vunpack.c.l.b16 %v2602
        %v2699 = vunpack.c.l.b16 %v2603
        %v2700 = vunpack.c.l.b16 %v2604
        %v2701 = vunpack.c.l.b16 %v2605
        %v2702 = vunpack.c.l.b16 %v2606
        %v2703 = vunpack.c.l.b16 %v2607
        %v2704 = vunpack.c.l.b16 %v2608
        %v2705 = vunpack.c.l.b16 %v2609
        %v2706 = vunpack.c.l.b16 %v2610
        %v2707 = vunpack.c.l.b16 %v2611
        %v2708 = vunpack.c.l.b16 %v2612
        %v2709 = vunpack.c.l.b16 %v2613
        %v2710 = vunpack.c.l.b16 %v2614
        %v2711 = vunpack.c.l.b16 %v2615
        %v2712 = vunpack.c.l.b16 %v2616
        %v2713 = vunpack.c.l.b16 %v2617
        %v2714 = vunpack.c.l.b16 %v2618
        %v2715 = vunpack.c.l.b16 %v2619
        %v2716 = vunpack.c.l.b16 %v2620
        %v2717 = vunpack.c.l.b16 %v2621
        %v2718 = vunpack.c.l.b16 %v2622
        %v2719 = vunpack.c.l.b16 %v2623
        %v2720 = vunpack.c.l.b16 %v2624
        %v2721 = vunpack.c.l.b16 %v2625
        %v2722 = vunpack.c.l.b16 %v2626
        %v2723 = vunpack.c.l.b16 %v2627
        %v2724 = vunpack.c.l.b16 %v2628
        %v2725 = vunpack.c.l.b16 %v2629
        %v2726 = vunpack.c.l.b16 %v2630
        %v2727 = vunpack.c.l.b16 %v2631
        %v2728 = vunpack.c.l.b16 %v2632
        %v2729 = vunpack.c.l.b16 %v2633
        %v2730 = vunpack.c.l.b16 %v2634
        %v2731 = vunpack.c.l.b16 %v2635
        %v2732 = vunpack.c.l.b16 %v2636
        %v2733 = vunpack.c.l.b16 %v2637
        %v2734 = vunpack.c.l.b16 %v2638
        %v2735 = vunpack.c.l.b16 %v2639
        %v2736 = vunpack.c.l.b16 %v2640
        %v2737 = vunpack.c.l.b16 %v2641
        %v2738 = vunpack.c.l.b16 %v2642
        %v2739 = vunpack.c.l.b16 %v2643
        %v2740 = vunpack.c.l.b16 %v2644
        %v2741 = vunpack.c.l.b16 %v2645
        %v2742 = vunpack.c.l.b16 %v2646
        %v2743 = vunpack.c.l.b16 %v2647
        %v2744 = vpack.c.b16 %v2697, %v2696
        %v2745 = vpack.c.b16 %v2699, %v2698
        %v2746 = vpack.c.b16 %v2701, %v2700
        %v2747 = vpack.c.b16 %v2703, %v2702
        %v2748 = vpack.c.b16 %v2705, %v2704
        %v2749 = vpack.c.b16 %v2707, %v2706
        %v2750 = vpack.c.b16 %v2709, %v2708
        %v2751 = vpack.c.b16 %v2711, %v2710
        %v2752 = vpack.c.b16 %v2713, %v2712
        %v2753 = vpack.c.b16 %v2715, %v2714
        %v2754 = vpack.c.b16 %v2717, %v2716
        %v2755 = vpack.c.b16 %v2719, %v2718
        %v2756 = vpack.c.b16 %v2721, %v2720
        %v2757 = vpack.c.b16 %v2723, %v2722
        %v2758 = vpack.c.b16 %v2725, %v2724
        %v2759 = vpack.c.b16 %v2727, %v2726
        %v2760 = vpack.c.b16 %v2729, %v2728
        %v2761 = vpack.c.b16 %v2731, %v2730
        %v2762 = vpack.c.b16 %v2733, %v2732
        %v2763 = vpack.c.b16 %v2735, %v2734
        %v2764 = vpack.c.b16 %v2737, %v2736
        %v2765 = vpack.c.b16 %v2739, %v2738
        %v2766 = vpack.c.b16 %v2741, %v2740
        %v2767 = vpack.c.b16 %v2743, %v2742
        %2792 = vmatprep.subr.bf16.mxu0 0
        %2793 = vmatpush1.bf16.msra.mxu0 %v2744
        %2794 = vmatprep.subr.bf16.mxu0 0
        %2795 = vmatpush1.bf16.msra.mxu0 %v2745
        %2796 = vmatprep.subr.bf16.mxu0 0
        %2797 = vmatpush1.bf16.msra.mxu0 %v2746
        %2798 = vmatprep.subr.bf16.mxu0 0
        %2799 = vmatpush1.bf16.msra.mxu0 %v2747
        %2800 = vmatprep.subr.bf16.mxu0 0
        %2801 = vmatpush1.bf16.msra.mxu0 %v2748
        %2802 = vmatprep.subr.bf16.mxu0 0
        %2803 = vmatpush1.bf16.msra.mxu0 %v2749
        %2804 = vmatprep.subr.bf16.mxu0 0
        %2805 = vmatpush1.bf16.msra.mxu0 %v2750
        %2806 = vmatprep.subr.bf16.mxu0 0
        %2807 = vmatpush1.bf16.msra.mxu0 %v2751
        %2808 = vmatprep.subr.bf16.mxu0 0
        %2809 = vmatpush1.bf16.msra.mxu0 %v2752
        %2810 = vmatprep.subr.bf16.mxu0 0
        %2811 = vmatpush1.bf16.msra.mxu0 %v2753
        %2812 = vmatprep.subr.bf16.mxu0 0
        %2813 = vmatpush1.bf16.msra.mxu0 %v2754
        %2814 = vmatprep.subr.bf16.mxu0 0
        %2815 = vmatpush1.bf16.msra.mxu0 %v2755
        %2816 = vmatprep.subr.bf16.mxu0 0
        %2817 = vmatpush1.bf16.msra.mxu0 %v2756
        %2818 = vmatprep.subr.bf16.mxu0 0
        %2819 = vmatpush1.bf16.msra.mxu0 %v2757
        %2820 = vmatprep.subr.bf16.mxu0 0
        %2821 = vmatpush1.bf16.msra.mxu0 %v2758
        %2822 = vmatprep.subr.bf16.mxu0 0
        %2823 = vmatpush1.bf16.msra.mxu0 %v2759
        %2824 = vmatprep.mubr.bf16.mxu0 %v2546
        %2825 = vmatmul.mubr.bf16.gmra.mrb[0].mxu0 %v2545
        %v2826 = vpop.f32.mrb[0].mxu0
        %v2827 = vadd.f32 0.0, %v2826
        %v2828 = vpop.f32.mrb[0].mxu0
        %v2829 = vpop.f32.mrb[0].mxu0
        %v2830 = vadd.f32 0.0, %v2829
        %v2831 = vpop.f32.mrb[0].mxu0
        %2832 = vmatprep.mubr.bf16.mxu0 %v2549
        %2833 = vmatmul.mubr.bf16.gmra.mrb[0].mxu0 %v2548
        %v2834 = vpop.f32.mrb[0].mxu0
        %v2835 = vadd.f32 0.0, %v2834
        %v2836 = vpop.f32.mrb[0].mxu0
        %v2837 = vpop.f32.mrb[0].mxu0
        %v2838 = vadd.f32 0.0, %v2837
        %v2839 = vpop.f32.mrb[0].mxu0
        %2840 = vmatprep.mubr.bf16.mxu0 %v2552
        %2841 = vmatmul.mubr.bf16.gmra.mrb[0].mxu0 %v2551
        %v2842 = vpop.f32.mrb[0].mxu0
        %v2843 = vadd.f32 0.0, %v2842
        %v2844 = vpop.f32.mrb[0].mxu0
        %v2845 = vpop.f32.mrb[0].mxu0
        %v2846 = vadd.f32 0.0, %v2845
        %v2847 = vpop.f32.mrb[0].mxu0
        %2848 = vmatprep.mubr.bf16.mxu0 %v2555
        %2849 = vmatmul.mubr.bf16.gmra.mrb[0].mxu0 %v2554
        %v2850 = vpop.f32.mrb[0].mxu0
        %v2851 = vadd.f32 0.0, %v2850
        %v2852 = vpop.f32.mrb[0].mxu0
        %v2853 = vpop.f32.mrb[0].mxu0
        %v2854 = vadd.f32 0.0, %v2853
        %v2855 = vpop.f32.mrb[0].mxu0
        %2856 = vmatprep.mubr.bf16.mxu0 %v2558
        %2857 = vmatmul.mubr.bf16.gmra.mrb[0].mxu0 %v2557
        %v2858 = vpop.f32.mrb[0].mxu0
        %v2859 = vadd.f32 0.0, %v2858
        %v2860 = vpop.f32.mrb[0].mxu0
        %v2861 = vpop.f32.mrb[0].mxu0
        %v2862 = vadd.f32 0.0, %v2861
        %v2863 = vpop.f32.mrb[0].mxu0
        %2864 = vmatprep.mubr.bf16.mxu0 %v2561
        %2865 = vmatmul.mubr.bf16.gmra.mrb[0].mxu0 %v2560
        %v2866 = vpop.f32.mrb[0].mxu0
        %v2867 = vadd.f32 0.0, %v2866
        %v2868 = vpop.f32.mrb[0].mxu0
        %v2869 = vpop.f32.mrb[0].mxu0
        %v2870 = vadd.f32 0.0, %v2869
        %v2871 = vpop.f32.mrb[0].mxu0
        %2872 = vmatprep.mubr.bf16.mxu0 %v2564
        %2873 = vmatmul.mubr.bf16.gmra.mrb[0].mxu0 %v2563
        %v2874 = vpop.f32.mrb[0].mxu0
        %v2875 = vadd.f32 0.0, %v2874
        %v2876 = vpop.f32.mrb[0].mxu0
        %v2877 = vpop.f32.mrb[0].mxu0
        %v2878 = vadd.f32 0.0, %v2877
        %v2879 = vpop.f32.mrb[0].mxu0
        %2880 = vmatprep.mubr.bf16.mxu0 %v2567
        %2881 = vmatmul.mubr.bf16.gmra.mrb[0].mxu0 %v2566
        %v2882 = vpop.f32.mrb[0].mxu0
        %v2883 = vadd.f32 0.0, %v2882
        %v2884 = vpop.f32.mrb[0].mxu0
        %v2885 = vpop.f32.mrb[0].mxu0
        %v2886 = vadd.f32 0.0, %v2885
        %v2887 = vpop.f32.mrb[0].mxu0
        %2888 = vmatprep.mubr.bf16.mxu0 %v2570
        %2889 = vmatmul.mubr.bf16.gmra.mrb[0].mxu0 %v2569
        %v2890 = vpop.f32.mrb[0].mxu0
        %v2891 = vadd.f32 0.0, %v2890
        %v2892 = vpop.f32.mrb[0].mxu0
        %v2893 = vpop.f32.mrb[0].mxu0
        %v2894 = vadd.f32 0.0, %v2893
        %v2895 = vpop.f32.mrb[0].mxu0
        %2896 = vmatprep.mubr.bf16.mxu0 %v2573
        %2897 = vmatmul.mubr.bf16.gmra.mrb[0].mxu0 %v2572
        %v2898 = vpop.f32.mrb[0].mxu0
        %v2899 = vadd.f32 0.0, %v2898
        %v2900 = vpop.f32.mrb[0].mxu0
        %v2901 = vpop.f32.mrb[0].mxu0
        %v2902 = vadd.f32 0.0, %v2901
        %v2903 = vpop.f32.mrb[0].mxu0
        %2904 = vmatprep.mubr.bf16.mxu0 %v2576
        %2905 = vmatmul.mubr.bf16.gmra.mrb[0].mxu0 %v2575
        %v2906 = vpop.f32.mrb[0].mxu0
        %v2907 = vadd.f32 0.0, %v2906
        %v2908 = vpop.f32.mrb[0].mxu0
        %v2909 = vpop.f32.mrb[0].mxu0
        %v2910 = vadd.f32 0.0, %v2909
        %v2911 = vpop.f32.mrb[0].mxu0
        %2912 = vmatprep.mubr.bf16.mxu0 %v2579
        %2913 = vmatmul.mubr.bf16.gmra.mrb[0].mxu0 %v2578
        %v2914 = vpop.f32.mrb[0].mxu0
        %v2915 = vadd.f32 0.0, %v2914
        %v2916 = vpop.f32.mrb[0].mxu0
        %v2917 = vpop.f32.mrb[0].mxu0
        %v2918 = vadd.f32 0.0, %v2917
        %v2919 = vpop.f32.mrb[0].mxu0
        %2920 = vmatprep.mubr.bf16.mxu0 %v2582
        %2921 = vmatmul.mubr.bf16.gmra.mrb[0].mxu0 %v2581
        %v2922 = vpop.f32.mrb[0].mxu0
        %v2923 = vadd.f32 0.0, %v2922
        %v2924 = vpop.f32.mrb[0].mxu0
        %v2925 = vpop.f32.mrb[0].mxu0
        %v2926 = vadd.f32 0.0, %v2925
        %v2927 = vpop.f32.mrb[0].mxu0
        %2928 = vmatprep.mubr.bf16.mxu0 %v2585
        %2929 = vmatmul.mubr.bf16.gmra.mrb[0].mxu0 %v2584
        %v2930 = vpop.f32.mrb[0].mxu0
        %v2931 = vadd.f32 0.0, %v2930
        %v2932 = vpop.f32.mrb[0].mxu0
        %v2933 = vpop.f32.mrb[0].mxu0
        %v2934 = vadd.f32 0.0, %v2933
        %v2935 = vpop.f32.mrb[0].mxu0
        %2936 = vmatprep.mubr.bf16.mxu0 %v2588
        %2937 = vmatmul.mubr.bf16.gmra.mrb[0].mxu0 %v2587
        %v2938 = vpop.f32.mrb[0].mxu0
        %v2939 = vadd.f32 0.0, %v2938
        %v2940 = vpop.f32.mrb[0].mxu0
        %v2941 = vpop.f32.mrb[0].mxu0
        %v2942 = vadd.f32 0.0, %v2941
        %v2943 = vpop.f32.mrb[0].mxu0
        %2944 = vmatprep.mubr.bf16.mxu0 %v2591
        %2945 = vmatmul.mubr.bf16.gmra.mrb[0].mxu0 %v2590
        %v2946 = vpop.f32.mrb[0].mxu0
        %v2947 = vadd.f32 0.0, %v2946
        %v2948 = vpop.f32.mrb[0].mxu0
        %v2949 = vpop.f32.mrb[0].mxu0
        %v2950 = vadd.f32 0.0, %v2949
        %v2951 = vpop.f32.mrb[0].mxu0
        %2952 = vmatprep.mubr.bf16.mxu0 %v2594
        %2953 = vmatmul.mubr.bf16.gmra.mrb[0].mxu0 %v2593
        %v2954 = vpop.f32.mrb[0].mxu0
        %v2955 = vadd.f32 0.0, %v2954
        %v2956 = vpop.f32.mrb[0].mxu0
        %v2957 = vpop.f32.mrb[0].mxu0
        %v2958 = vadd.f32 0.0, %v2957
        %v2959 = vpop.f32.mrb[0].mxu0
        %2960 = vmatprep.mubr.bf16.mxu0 %v2597
        %2961 = vmatmul.mubr.bf16.gmra.mrb[0].mxu0 %v2596
        %v2962 = vpop.f32.mrb[0].mxu0
        %v2963 = vadd.f32 0.0, %v2962
        %v2964 = vpop.f32.mrb[0].mxu0
        %v2965 = vpop.f32.mrb[0].mxu0
        %v2966 = vadd.f32 0.0, %v2965
        %v2967 = vpop.f32.mrb[0].mxu0
        %2968 = vdwg.mxu0
        %2969 = vmatprep.subr.bf16.mxu0 0
        %2970 = vmatpush1.bf16.msra.mxu0 %v2760
        %2971 = vmatprep.subr.bf16.mxu0 0
        %2972 = vmatpush1.bf16.msra.mxu0 %v2761
        %2973 = vmatprep.subr.bf16.mxu0 0
        %2974 = vmatpush1.bf16.msra.mxu0 %v2762
        %2975 = vmatprep.subr.bf16.mxu0 0
        %2976 = vmatpush1.bf16.msra.mxu0 %v2763
        %2977 = vmatprep.subr.bf16.mxu0 0
        %2978 = vmatpush1.bf16.msra.mxu0 %v2764
        %2979 = vmatprep.subr.bf16.mxu0 0
        %2980 = vmatpush1.bf16.msra.mxu0 %v2765
        %2981 = vmatprep.subr.bf16.mxu0 0
        %2982 = vmatpush1.bf16.msra.mxu0 %v2766
        %2983 = vmatprep.subr.bf16.mxu0 0
        %2984 = vmatpush1.bf16.msra.mxu0 %v2767
        %2985 = vmatprep.subr.bf16.mxu0 0
        %2986 = vmatpush1.bf16.msra.mxu0 0
        %2987 = vmatprep.subr.bf16.mxu0 0
        %2988 = vmatpush1.bf16.msra.mxu0 0
        %2989 = vmatprep.subr.bf16.mxu0 0
        %2990 = vmatpush1.bf16.msra.mxu0 0
        %2991 = vmatprep.subr.bf16.mxu0 0
        %2992 = vmatpush1.bf16.msra.mxu0 0
        %2993 = vmatprep.subr.bf16.mxu0 0
        %2994 = vmatpush1.bf16.msra.mxu0 0
        %2995 = vmatprep.subr.bf16.mxu0 0
        %2996 = vmatpush1.bf16.msra.mxu0 0
        %2997 = vmatprep.subr.bf16.mxu0 0
        %2998 = vmatpush1.bf16.msra.mxu0 0
        %2999 = vmatprep.subr.bf16.mxu0 0
        %3000 = vmatpush1.bf16.msra.mxu0 0
        %3001 = vmatprep.mubr.bf16.mxu0 0
        %3002 = vmatmul.mubr.bf16.gmra.mrb[0].mxu0 %v2547
        %v3003 = vpop.f32.mrb[0].mxu0
        %v3004 = vadd.f32 %v2827, %v3003
        %v3005 = vpop.f32.mrb[0].mxu0
        %v3006 = vpop.f32.mrb[0].mxu0
        %v3007 = vadd.f32 %v2830, %v3006
        %v3008 = vpop.f32.mrb[0].mxu0
        %3009 = vmatprep.mubr.bf16.mxu0 0
        %3010 = vmatmul.mubr.bf16.gmra.mrb[0].mxu0 %v2550
        %v3011 = vpop.f32.mrb[0].mxu0
        %v3012 = vadd.f32 %v2835, %v3011
        %v3013 = vpop.f32.mrb[0].mxu0
        %v3014 = vpop.f32.mrb[0].mxu0
        %v3015 = vadd.f32 %v2838, %v3014
        %v3016 = vpop.f32.mrb[0].mxu0
        %3017 = vmatprep.mubr.bf16.mxu0 0
        %3018 = vmatmul.mubr.bf16.gmra.mrb[0].mxu0 %v2553
        %v3019 = vpop.f32.mrb[0].mxu0
        %v3020 = vadd.f32 %v2843, %v3019
        %v3021 = vpop.f32.mrb[0].mxu0
        %v3022 = vpop.f32.mrb[0].mxu0
        %v3023 = vadd.f32 %v2846, %v3022
        %v3024 = vpop.f32.mrb[0].mxu0
        %3025 = vmatprep.mubr.bf16.mxu0 0
        %3026 = vmatmul.mubr.bf16.gmra.mrb[0].mxu0 %v2556
        %v3027 = vpop.f32.mrb[0].mxu0
        %v3028 = vadd.f32 %v2851, %v3027
        %v3029 = vpop.f32.mrb[0].mxu0
        %v3030 = vpop.f32.mrb[0].mxu0
        %v3031 = vadd.f32 %v2854, %v3030
        %v3032 = vpop.f32.mrb[0].mxu0
        %3033 = vmatprep.mubr.bf16.mxu0 0
        %3034 = vmatmul.mubr.bf16.gmra.mrb[0].mxu0 %v2559
        %v3035 = vpop.f32.mrb[0].mxu0
        %v3036 = vadd.f32 %v2859, %v3035
        %v3037 = vpop.f32.mrb[0].mxu0
        %v3038 = vpop.f32.mrb[0].mxu0
        %v3039 = vadd.f32 %v2862, %v3038
        %v3040 = vpop.f32.mrb[0].mxu0
        %3041 = vmatprep.mubr.bf16.mxu0 0
        %3042 = vmatmul.mubr.bf16.gmra.mrb[0].mxu0 %v2562
        %v3043 = vpop.f32.mrb[0].mxu0
        %v3044 = vadd.f32 %v2867, %v3043
        %v3045 = vpop.f32.mrb[0].mxu0
        %v3046 = vpop.f32.mrb[0].mxu0
        %v3047 = vadd.f32 %v2870, %v3046
        %v3048 = vpop.f32.mrb[0].mxu0
        %3049 = vmatprep.mubr.bf16.mxu0 0
        %3050 = vmatmul.mubr.bf16.gmra.mrb[0].mxu0 %v2565
        %v3051 = vpop.f32.mrb[0].mxu0
        %v3052 = vadd.f32 %v2875, %v3051
        %v3053 = vpop.f32.mrb[0].mxu0
        %v3054 = vpop.f32.mrb[0].mxu0
        %v3055 = vadd.f32 %v2878, %v3054
        %v3056 = vpop.f32.mrb[0].mxu0
        %3057 = vmatprep.mubr.bf16.mxu0 0
        %3058 = vmatmul.mubr.bf16.gmra.mrb[0].mxu0 %v2568
        %v3059 = vpop.f32.mrb[0].mxu0
        %v3060 = vadd.f32 %v2883, %v3059
        %v3061 = vpop.f32.mrb[0].mxu0
        %v3062 = vpop.f32.mrb[0].mxu0
        %v3063 = vadd.f32 %v2886, %v3062
        %v3064 = vpop.f32.mrb[0].mxu0
        %3065 = vmatprep.mubr.bf16.mxu0 0
        %3066 = vmatmul.mubr.bf16.gmra.mrb[0].mxu0 %v2571
        %v3067 = vpop.f32.mrb[0].mxu0
        %v3068 = vadd.f32 %v2891, %v3067
        %v3069 = vpop.f32.mrb[0].mxu0
        %v3070 = vpop.f32.mrb[0].mxu0
        %v3071 = vadd.f32 %v2894, %v3070
        %v3072 = vpop.f32.mrb[0].mxu0
        %3073 = vmatprep.mubr.bf16.mxu0 0
        %3074 = vmatmul.mubr.bf16.gmra.mrb[0].mxu0 %v2574
        %v3075 = vpop.f32.mrb[0].mxu0
        %v3076 = vadd.f32 %v2899, %v3075
        %v3077 = vpop.f32.mrb[0].mxu0
        %v3078 = vpop.f32.mrb[0].mxu0
        %v3079 = vadd.f32 %v2902, %v3078
        %v3080 = vpop.f32.mrb[0].mxu0
        %3081 = vmatprep.mubr.bf16.mxu0 0
        %3082 = vmatmul.mubr.bf16.gmra.mrb[0].mxu0 %v2577
        %v3083 = vpop.f32.mrb[0].mxu0
        %v3084 = vadd.f32 %v2907, %v3083
        %v3085 = vpop.f32.mrb[0].mxu0
        %v3086 = vpop.f32.mrb[0].mxu0
        %v3087 = vadd.f32 %v2910, %v3086
        %v3088 = vpop.f32.mrb[0].mxu0
        %3089 = vmatprep.mubr.bf16.mxu0 0
        %3090 = vmatmul.mubr.bf16.gmra.mrb[0].mxu0 %v2580
        %v3091 = vpop.f32.mrb[0].mxu0
        %v3092 = vadd.f32 %v2915, %v3091
        %v3093 = vpop.f32.mrb[0].mxu0
        %v3094 = vpop.f32.mrb[0].mxu0
        %v3095 = vadd.f32 %v2918, %v3094
        %v3096 = vpop.f32.mrb[0].mxu0
        %3097 = vmatprep.mubr.bf16.mxu0 0
        %3098 = vmatmul.mubr.bf16.gmra.mrb[0].mxu0 %v2583
        %v3099 = vpop.f32.mrb[0].mxu0
        %v3100 = vadd.f32 %v2923, %v3099
        %v3101 = vpop.f32.mrb[0].mxu0
        %v3102 = vpop.f32.mrb[0].mxu0
        %v3103 = vadd.f32 %v2926, %v3102
        %v3104 = vpop.f32.mrb[0].mxu0
        %3105 = vmatprep.mubr.bf16.mxu0 0
        %3106 = vmatmul.mubr.bf16.gmra.mrb[0].mxu0 %v2586
        %v3107 = vpop.f32.mrb[0].mxu0
        %v3108 = vadd.f32 %v2931, %v3107
        %v3109 = vpop.f32.mrb[0].mxu0
        %v3110 = vpop.f32.mrb[0].mxu0
        %v3111 = vadd.f32 %v2934, %v3110
        %v3112 = vpop.f32.mrb[0].mxu0
        %3113 = vmatprep.mubr.bf16.mxu0 0
        %3114 = vmatmul.mubr.bf16.gmra.mrb[0].mxu0 %v2589
        %v3115 = vpop.f32.mrb[0].mxu0
        %v3116 = vadd.f32 %v2939, %v3115
        %v3117 = vpop.f32.mrb[0].mxu0
        %v3118 = vpop.f32.mrb[0].mxu0
        %v3119 = vadd.f32 %v2942, %v3118
        %v3120 = vpop.f32.mrb[0].mxu0
        %3121 = vmatprep.mubr.bf16.mxu0 0
        %3122 = vmatmul.mubr.bf16.gmra.mrb[0].mxu0 %v2592
        %v3123 = vpop.f32.mrb[0].mxu0
        %v3124 = vadd.f32 %v2947, %v3123
        %v3125 = vpop.f32.mrb[0].mxu0
        %v3126 = vpop.f32.mrb[0].mxu0
        %v3127 = vadd.f32 %v2950, %v3126
        %v3128 = vpop.f32.mrb[0].mxu0
        %3129 = vmatprep.mubr.bf16.mxu0 0
        %3130 = vmatmul.mubr.bf16.gmra.mrb[0].mxu0 %v2595
        %v3131 = vpop.f32.mrb[0].mxu0
        %v3132 = vadd.f32 %v2955, %v3131
        %v3133 = vpop.f32.mrb[0].mxu0
        %v3134 = vpop.f32.mrb[0].mxu0
        %v3135 = vadd.f32 %v2958, %v3134
        %v3136 = vpop.f32.mrb[0].mxu0
        %3137 = vmatprep.mubr.bf16.mxu0 0
        %3138 = vmatmul.mubr.bf16.gmra.mrb[0].mxu0 %v2598
        %v3139 = vpop.f32.mrb[0].mxu0
        %v3140 = vadd.f32 %v2963, %v3139
        %v3141 = vpop.f32.mrb[0].mxu0
        %v3142 = vpop.f32.mrb[0].mxu0
        %v3143 = vadd.f32 %v2966, %v3142
        %v3144 = vpop.f32.mrb[0].mxu0
        %3145 = vdwg.mxu0
        %v3146 = vadd.f32 %v2402, %v3004
        %v3147 = vadd.f32 %v2405, %v3007
        %v3148 = vadd.f32 %v2410, %v3012
        %v3149 = vadd.f32 %v2413, %v3015
        %v3150 = vadd.f32 %v2418, %v3020
        %v3151 = vadd.f32 %v2421, %v3023
        %v3152 = vadd.f32 %v2426, %v3028
        %v3153 = vadd.f32 %v2429, %v3031
        %v3154 = vadd.f32 %v2434, %v3036
        %v3155 = vadd.f32 %v2437, %v3039
        %v3156 = vadd.f32 %v2442, %v3044
        %v3157 = vadd.f32 %v2445, %v3047
        %v3158 = vadd.f32 %v2450, %v3052
        %v3159 = vadd.f32 %v2453, %v3055
        %v3160 = vadd.f32 %v2458, %v3060
        %v3161 = vadd.f32 %v2461, %v3063
        %v3162 = vadd.f32 %v2466, %v3068
        %v3163 = vadd.f32 %v2469, %v3071
        %v3164 = vadd.f32 %v2474, %v3076
        %v3165 = vadd.f32 %v2477, %v3079
        %v3166 = vadd.f32 %v2482, %v3084
        %v3167 = vadd.f32 %v2485, %v3087
        %v3168 = vadd.f32 %v2490, %v3092
        %v3169 = vadd.f32 %v2493, %v3095
        %v3170 = vadd.f32 %v2498, %v3100
        %v3171 = vadd.f32 %v2501, %v3103
        %v3172 = vadd.f32 %v2506, %v3108
        %v3173 = vadd.f32 %v2509, %v3111
        %v3174 = vadd.f32 %v2514, %v3116
        %v3175 = vadd.f32 %v2517, %v3119
        %v3176 = vadd.f32 %v2522, %v3124
        %v3177 = vadd.f32 %v2525, %v3127
        %v3178 = vadd.f32 %v2530, %v3132
        %v3179 = vadd.f32 %v2533, %v3135
        %v3180 = vadd.f32 %v2538, %v3140
        %v3181 = vadd.f32 %v2541, %v3143
        %v3182 = vld [vmem:[%s2] sm:$0x1]
        %v3184 = vlaneseq
        %v3185 = vshrl.u32 %v3184, 7
        %v3186 = vsub.s32 0, %v3185
        %v3187 = vrot.slane %v3182, %v3186
        %v3189 = vmul.f32 %v3146, %v3187
        %v3190 = vmul.f32 %v3147, %v3187
        %v3191 = vmul.f32 %v3148, %v3187
        %v3192 = vmul.f32 %v3149, %v3187
        %v3193 = vmul.f32 %v3150, %v3187
        %v3194 = vmul.f32 %v3151, %v3187
        %v3195 = vmul.f32 %v3152, %v3187
        %v3196 = vmul.f32 %v3153, %v3187
        %v3197 = vmul.f32 %v3154, %v3187
        %v3198 = vmul.f32 %v3155, %v3187
        %v3199 = vmul.f32 %v3156, %v3187
        %v3200 = vmul.f32 %v3157, %v3187
        %v3201 = vmul.f32 %v3158, %v3187
        %v3202 = vmul.f32 %v3159, %v3187
        %v3203 = vmul.f32 %v3160, %v3187
        %v3204 = vmul.f32 %v3161, %v3187
        %v3205 = vmul.f32 %v3162, %v3187
        %v3206 = vmul.f32 %v3163, %v3187
        %v3207 = vmul.f32 %v3164, %v3187
        %v3208 = vmul.f32 %v3165, %v3187
        %v3209 = vmul.f32 %v3166, %v3187
        %v3210 = vmul.f32 %v3167, %v3187
        %v3211 = vmul.f32 %v3168, %v3187
        %v3212 = vmul.f32 %v3169, %v3187
        %v3213 = vmul.f32 %v3170, %v3187
        %v3214 = vmul.f32 %v3171, %v3187
        %v3215 = vmul.f32 %v3172, %v3187
        %v3216 = vmul.f32 %v3173, %v3187
        %v3217 = vmul.f32 %v3174, %v3187
        %v3218 = vmul.f32 %v3175, %v3187
        %v3219 = vmul.f32 %v3176, %v3187
        %v3220 = vmul.f32 %v3177, %v3187
        %v3221 = vmul.f32 %v3178, %v3187
        %v3222 = vmul.f32 %v3179, %v3187
        %v3223 = vmul.f32 %v3180, %v3187
        %v3224 = vmul.f32 %v3181, %v3187
        %v3225 = vld [vmem:[%s3] sm:$0x1]
        %v3227 = vlaneseq
        %v3228 = vshrl.u32 %v3227, 7
        %v3229 = vsub.s32 0, %v3228
        %v3230 = vrot.slane %v3225, %v3229
        %v3232 = vadd.f32 %v3189, %v3230
        %v3233 = vadd.f32 %v3190, %v3230
        %v3234 = vadd.f32 %v3191, %v3230
        %v3235 = vadd.f32 %v3192, %v3230
        %v3236 = vadd.f32 %v3193, %v3230
        %v3237 = vadd.f32 %v3194, %v3230
        %v3238 = vadd.f32 %v3195, %v3230
        %v3239 = vadd.f32 %v3196, %v3230
        %v3240 = vadd.f32 %v3197, %v3230
        %v3241 = vadd.f32 %v3198, %v3230
        %v3242 = vadd.f32 %v3199, %v3230
        %v3243 = vadd.f32 %v3200, %v3230
        %v3244 = vadd.f32 %v3201, %v3230
        %v3245 = vadd.f32 %v3202, %v3230
        %v3246 = vadd.f32 %v3203, %v3230
        %v3247 = vadd.f32 %v3204, %v3230
        %v3248 = vadd.f32 %v3205, %v3230
        %v3249 = vadd.f32 %v3206, %v3230
        %v3250 = vadd.f32 %v3207, %v3230
        %v3251 = vadd.f32 %v3208, %v3230
        %v3252 = vadd.f32 %v3209, %v3230
        %v3253 = vadd.f32 %v3210, %v3230
        %v3254 = vadd.f32 %v3211, %v3230
        %v3255 = vadd.f32 %v3212, %v3230
        %v3256 = vadd.f32 %v3213, %v3230
        %v3257 = vadd.f32 %v3214, %v3230
        %v3258 = vadd.f32 %v3215, %v3230
        %v3259 = vadd.f32 %v3216, %v3230
        %v3260 = vadd.f32 %v3217, %v3230
        %v3261 = vadd.f32 %v3218, %v3230
        %v3262 = vadd.f32 %v3219, %v3230
        %v3263 = vadd.f32 %v3220, %v3230
        %v3264 = vadd.f32 %v3221, %v3230
        %v3265 = vadd.f32 %v3222, %v3230
        %v3266 = vadd.f32 %v3223, %v3230
        %v3267 = vadd.f32 %v3224, %v3230
        %s3268 = sld [smem:[#allocation4]]
        %vm3269 = vcmp.ge.f32.partialorder %v3232, 0.0
        %vm3270 = vcmp.ge.f32.partialorder %v3233, 0.0
        %vm3271 = vcmp.ge.f32.partialorder %v3234, 0.0
        %vm3272 = vcmp.ge.f32.partialorder %v3235, 0.0
        %vm3273 = vcmp.ge.f32.partialorder %v3236, 0.0
        %vm3274 = vcmp.ge.f32.partialorder %v3237, 0.0
        %vm3275 = vcmp.ge.f32.partialorder %v3238, 0.0
        %vm3276 = vcmp.ge.f32.partialorder %v3239, 0.0
        %vm3277 = vcmp.ge.f32.partialorder %v3240, 0.0
        %vm3278 = vcmp.ge.f32.partialorder %v3241, 0.0
        %vm3279 = vcmp.ge.f32.partialorder %v3242, 0.0
        %vm3280 = vcmp.ge.f32.partialorder %v3243, 0.0
        %vm3281 = vcmp.ge.f32.partialorder %v3244, 0.0
        %vm3282 = vcmp.ge.f32.partialorder %v3245, 0.0
        %vm3283 = vcmp.ge.f32.partialorder %v3246, 0.0
        %vm3284 = vcmp.ge.f32.partialorder %v3247, 0.0
        %vm3285 = vcmp.ge.f32.partialorder %v3248, 0.0
        %vm3286 = vcmp.ge.f32.partialorder %v3249, 0.0
        %vm3287 = vcmp.ge.f32.partialorder %v3250, 0.0
        %vm3288 = vcmp.ge.f32.partialorder %v3251, 0.0
        %vm3289 = vcmp.ge.f32.partialorder %v3252, 0.0
        %vm3290 = vcmp.ge.f32.partialorder %v3253, 0.0
        %vm3291 = vcmp.ge.f32.partialorder %v3254, 0.0
        %vm3292 = vcmp.ge.f32.partialorder %v3255, 0.0
        %vm3293 = vcmp.ge.f32.partialorder %v3256, 0.0
        %vm3294 = vcmp.ge.f32.partialorder %v3257, 0.0
        %vm3295 = vcmp.ge.f32.partialorder %v3258, 0.0
        %vm3296 = vcmp.ge.f32.partialorder %v3259, 0.0
        %vm3297 = vcmp.ge.f32.partialorder %v3260, 0.0
        %vm3298 = vcmp.ge.f32.partialorder %v3261, 0.0
        %vm3299 = vcmp.ge.f32.partialorder %v3262, 0.0
        %vm3300 = vcmp.ge.f32.partialorder %v3263, 0.0
        %vm3301 = vcmp.ge.f32.partialorder %v3264, 0.0
        %vm3302 = vcmp.ge.f32.partialorder %v3265, 0.0
        %vm3303 = vcmp.ge.f32.partialorder %v3266, 0.0
        %vm3304 = vcmp.ge.f32.partialorder %v3267, 0.0
        %v3305 = vstv %s3268
        %v3306 = vmul.f32 %v3305, %v3232
        %v3307 = vmul.f32 %v3305, %v3233
        %v3308 = vmul.f32 %v3305, %v3234
        %v3309 = vmul.f32 %v3305, %v3235
        %v3310 = vmul.f32 %v3305, %v3236
        %v3311 = vmul.f32 %v3305, %v3237
        %v3312 = vmul.f32 %v3305, %v3238
        %v3313 = vmul.f32 %v3305, %v3239
        %v3314 = vmul.f32 %v3305, %v3240
        %v3315 = vmul.f32 %v3305, %v3241
        %v3316 = vmul.f32 %v3305, %v3242
        %v3317 = vmul.f32 %v3305, %v3243
        %v3318 = vmul.f32 %v3305, %v3244
        %v3319 = vmul.f32 %v3305, %v3245
        %v3320 = vmul.f32 %v3305, %v3246
        %v3321 = vmul.f32 %v3305, %v3247
        %v3322 = vmul.f32 %v3305, %v3248
        %v3323 = vmul.f32 %v3305, %v3249
        %v3324 = vmul.f32 %v3305, %v3250
        %v3325 = vmul.f32 %v3305, %v3251
        %v3326 = vmul.f32 %v3305, %v3252
        %v3327 = vmul.f32 %v3305, %v3253
        %v3328 = vmul.f32 %v3305, %v3254
        %v3329 = vmul.f32 %v3305, %v3255
        %v3330 = vmul.f32 %v3305, %v3256
        %v3331 = vmul.f32 %v3305, %v3257
        %v3332 = vmul.f32 %v3305, %v3258
        %v3333 = vmul.f32 %v3305, %v3259
        %v3334 = vmul.f32 %v3305, %v3260
        %v3335 = vmul.f32 %v3305, %v3261
        %v3336 = vmul.f32 %v3305, %v3262
        %v3337 = vmul.f32 %v3305, %v3263
        %v3338 = vmul.f32 %v3305, %v3264
        %v3339 = vmul.f32 %v3305, %v3265
        %v3340 = vmul.f32 %v3305, %v3266
        %v3341 = vmul.f32 %v3305, %v3267
        %v3342 = vsel %vm3269, %v3232, %v3306
        %v3343 = vsel %vm3270, %v3233, %v3307
        %v3344 = vsel %vm3271, %v3234, %v3308
        %v3345 = vsel %vm3272, %v3235, %v3309
        %v3346 = vsel %vm3273, %v3236, %v3310
        %v3347 = vsel %vm3274, %v3237, %v3311
        %v3348 = vsel %vm3275, %v3238, %v3312
        %v3349 = vsel %vm3276, %v3239, %v3313
        %v3350 = vsel %vm3277, %v3240, %v3314
        %v3351 = vsel %vm3278, %v3241, %v3315
        %v3352 = vsel %vm3279, %v3242, %v3316
        %v3353 = vsel %vm3280, %v3243, %v3317
        %v3354 = vsel %vm3281, %v3244, %v3318
        %v3355 = vsel %vm3282, %v3245, %v3319
        %v3356 = vsel %vm3283, %v3246, %v3320
        %v3357 = vsel %vm3284, %v3247, %v3321
        %v3358 = vsel %vm3285, %v3248, %v3322
        %v3359 = vsel %vm3286, %v3249, %v3323
        %v3360 = vsel %vm3287, %v3250, %v3324
        %v3361 = vsel %vm3288, %v3251, %v3325
        %v3362 = vsel %vm3289, %v3252, %v3326
        %v3363 = vsel %vm3290, %v3253, %v3327
        %v3364 = vsel %vm3291, %v3254, %v3328
        %v3365 = vsel %vm3292, %v3255, %v3329
        %v3366 = vsel %vm3293, %v3256, %v3330
        %v3367 = vsel %vm3294, %v3257, %v3331
        %v3368 = vsel %vm3295, %v3258, %v3332
        %v3369 = vsel %vm3296, %v3259, %v3333
        %v3370 = vsel %vm3297, %v3260, %v3334
        %v3371 = vsel %vm3298, %v3261, %v3335
        %v3372 = vsel %vm3299, %v3262, %v3336
        %v3373 = vsel %vm3300, %v3263, %v3337
        %v3374 = vsel %vm3301, %v3264, %v3338
        %v3375 = vsel %vm3302, %v3265, %v3339
        %v3376 = vsel %vm3303, %v3266, %v3340
        %v3377 = vsel %vm3304, %v3267, %v3341
        %v3378 = vpack.c.bf16 %v3343, %v3342
        %v3379 = vpack.c.bf16 %v3345, %v3344
        %v3380 = vpack.c.bf16 %v3347, %v3346
        %v3381 = vpack.c.bf16 %v3349, %v3348
        %v3382 = vpack.c.bf16 %v3351, %v3350
        %v3383 = vpack.c.bf16 %v3353, %v3352
        %v3384 = vpack.c.bf16 %v3355, %v3354
        %v3385 = vpack.c.bf16 %v3357, %v3356
        %v3386 = vpack.c.bf16 %v3359, %v3358
        %v3387 = vpack.c.bf16 %v3361, %v3360
        %v3388 = vpack.c.bf16 %v3363, %v3362
        %v3389 = vpack.c.bf16 %v3365, %v3364
        %v3390 = vpack.c.bf16 %v3367, %v3366
        %v3391 = vpack.c.bf16 %v3369, %v3368
        %v3392 = vpack.c.bf16 %v3371, %v3370
        %v3393 = vpack.c.bf16 %v3373, %v3372
        %v3394 = vpack.c.bf16 %v3375, %v3374
        %v3395 = vpack.c.bf16 %v3377, %v3376
        %3396 = vst [vmem:[#allocation3 + $0x8] sm:$0xff] %v3378
        %3397 = vst [vmem:[#allocation3 + $0x20] sm:$0xff] %v3379
        %3398 = vst [vmem:[#allocation3 + $0x38] sm:$0xff] %v3380
        %3399 = vst [vmem:[#allocation3 + $0x50] sm:$0xff] %v3381
        %3400 = vst [vmem:[#allocation3 + $0x68] sm:$0xff] %v3382
        %3401 = vst [vmem:[#allocation3 + $0x80] sm:$0xff] %v3383
        %3402 = vst [vmem:[#allocation3 + $0x98] sm:$0xff] %v3384
        %3403 = vst [vmem:[#allocation3 + $0xb0] sm:$0xff] %v3385
        %3404 = vst [vmem:[#allocation3 + $0xc8] sm:$0xff] %v3386
        %3405 = vst [vmem:[#allocation3 + $0xe0] sm:$0xff] %v3387
        %3406 = vst [vmem:[#allocation3 + $0xf8] sm:$0xff] %v3388
        %3407 = vst [vmem:[#allocation3 + $0x110] sm:$0xff] %v3389
        %3408 = vst [vmem:[#allocation3 + $0x128] sm:$0xff] %v3390
        %3409 = vst [vmem:[#allocation3 + $0x140] sm:$0xff] %v3391
        %3410 = vst [vmem:[#allocation3 + $0x158] sm:$0xff] %v3392
        %3411 = vst [vmem:[#allocation3 + $0x170] sm:$0xff] %v3393
        %3412 = vst [vmem:[#allocation3 + $0x188] sm:$0xff] %v3394
        %3413 = vst [vmem:[#allocation3 + $0x1a0] sm:$0xff] %v3395
        %v3415 = vshrl.u32 %v3378, 16
        %v3417 = vrot.slane %v3415, 7
        %v3418 = vshll.u32 %v3378, 16
        %v3420 = vor.u32 %v3417, %v3418
        %v3422 = vshrl.u32 %v3379, 16
        %v3424 = vrot.slane %v3422, 7
        %v3425 = vshll.u32 %v3379, 16
        %v3427 = vor.u32 %v3424, %v3425
        %v3429 = vshrl.u32 %v3380, 16
        %v3431 = vrot.slane %v3429, 7
        %v3432 = vshll.u32 %v3380, 16
        %v3434 = vor.u32 %v3431, %v3432
        %v3436 = vshrl.u32 %v3381, 16
        %v3438 = vrot.slane %v3436, 7
        %v3439 = vshll.u32 %v3381, 16
        %v3441 = vor.u32 %v3438, %v3439
        %v3443 = vshrl.u32 %v3382, 16
        %v3445 = vrot.slane %v3443, 7
        %v3446 = vshll.u32 %v3382, 16
        %v3448 = vor.u32 %v3445, %v3446
        %v3450 = vshrl.u32 %v3383, 16
        %v3452 = vrot.slane %v3450, 7
        %v3453 = vshll.u32 %v3383, 16
        %v3455 = vor.u32 %v3452, %v3453
        %v3457 = vshrl.u32 %v3384, 16
        %v3459 = vrot.slane %v3457, 7
        %v3460 = vshll.u32 %v3384, 16
        %v3462 = vor.u32 %v3459, %v3460
        %v3464 = vshrl.u32 %v3385, 16
        %v3466 = vrot.slane %v3464, 7
        %v3467 = vshll.u32 %v3385, 16
        %v3469 = vor.u32 %v3466, %v3467
        %v3471 = vshrl.u32 %v3386, 16
        %v3473 = vrot.slane %v3471, 7
        %v3474 = vshll.u32 %v3386, 16
        %v3476 = vor.u32 %v3473, %v3474
        %v3478 = vshrl.u32 %v3387, 16
        %v3480 = vrot.slane %v3478, 7
        %v3481 = vshll.u32 %v3387, 16
        %v3483 = vor.u32 %v3480, %v3481
        %v3485 = vshrl.u32 %v3388, 16
        %v3487 = vrot.slane %v3485, 7
        %v3488 = vshll.u32 %v3388, 16
        %v3490 = vor.u32 %v3487, %v3488
        %v3492 = vshrl.u32 %v3389, 16
        %v3494 = vrot.slane %v3492, 7
        %v3495 = vshll.u32 %v3389, 16
        %v3497 = vor.u32 %v3494, %v3495
        %v3499 = vshrl.u32 %v3390, 16
        %v3501 = vrot.slane %v3499, 7
        %v3502 = vshll.u32 %v3390, 16
        %v3504 = vor.u32 %v3501, %v3502
        %v3506 = vshrl.u32 %v3391, 16
        %v3508 = vrot.slane %v3506, 7
        %v3509 = vshll.u32 %v3391, 16
        %v3511 = vor.u32 %v3508, %v3509
        %v3513 = vshrl.u32 %v3392, 16
        %v3515 = vrot.slane %v3513, 7
        %v3516 = vshll.u32 %v3392, 16
        %v3518 = vor.u32 %v3515, %v3516
        %v3520 = vshrl.u32 %v3393, 16
        %v3522 = vrot.slane %v3520, 7
        %v3523 = vshll.u32 %v3393, 16
        %v3525 = vor.u32 %v3522, %v3523
        %v3527 = vshrl.u32 %v3394, 16
        %v3529 = vrot.slane %v3527, 7
        %v3530 = vshll.u32 %v3394, 16
        %v3532 = vor.u32 %v3529, %v3530
        %v3534 = vshrl.u32 %v3395, 16
        %v3536 = vrot.slane %v3534, 7
        %v3537 = vshll.u32 %v3395, 16
        %v3539 = vor.u32 %v3536, %v3537
        %vm3558 = vcmask 1047552
        %vm3559 = vsmask.f32 7938
        %vm3560 = vmand %vm3558, %vm3559
        %v3561 = vld [vmem:[#allocation3] sm:$0xff]
        %v3562 = vsel %vm3560, %v3420, %v3561
        %3563 = vst [vmem:[#allocation3] sm:$0xff] %v3562
        %v3564 = vld [vmem:[#allocation3 + $0x18] sm:$0xff]
        %v3565 = vsel %vm3560, %v3427, %v3564
        %3566 = vst [vmem:[#allocation3 + $0x18] sm:$0xff] %v3565
        %v3567 = vld [vmem:[#allocation3 + $0x30] sm:$0xff]
        %v3568 = vsel %vm3560, %v3434, %v3567
        %3569 = vst [vmem:[#allocation3 + $0x30] sm:$0xff] %v3568
        %v3570 = vld [vmem:[#allocation3 + $0x48] sm:$0xff]
        %v3571 = vsel %vm3560, %v3441, %v3570
        %3572 = vst [vmem:[#allocation3 + $0x48] sm:$0xff] %v3571
        %v3573 = vld [vmem:[#allocation3 + $0x60] sm:$0xff]
        %v3574 = vsel %vm3560, %v3448, %v3573
        %3575 = vst [vmem:[#allocation3 + $0x60] sm:$0xff] %v3574
        %v3576 = vld [vmem:[#allocation3 + $0x78] sm:$0xff]
        %v3577 = vsel %vm3560, %v3455, %v3576
        %3578 = vst [vmem:[#allocation3 + $0x78] sm:$0xff] %v3577
        %v3579 = vld [vmem:[#allocation3 + $0x90] sm:$0xff]
        %v3580 = vsel %vm3560, %v3462, %v3579
        %3581 = vst [vmem:[#allocation3 + $0x90] sm:$0xff] %v3580
        %v3582 = vld [vmem:[#allocation3 + $0xa8] sm:$0xff]
        %v3583 = vsel %vm3560, %v3469, %v3582
        %3584 = vst [vmem:[#allocation3 + $0xa8] sm:$0xff] %v3583
        %v3585 = vld [vmem:[#allocation3 + $0xc0] sm:$0xff]
        %v3586 = vsel %vm3560, %v3476, %v3585
        %3587 = vst [vmem:[#allocation3 + $0xc0] sm:$0xff] %v3586
        %v3588 = vld [vmem:[#allocation3 + $0xd8] sm:$0xff]
        %v3589 = vsel %vm3560, %v3483, %v3588
        %3590 = vst [vmem:[#allocation3 + $0xd8] sm:$0xff] %v3589
        %v3591 = vld [vmem:[#allocation3 + $0xf0] sm:$0xff]
        %v3592 = vsel %vm3560, %v3490, %v3591
        %3593 = vst [vmem:[#allocation3 + $0xf0] sm:$0xff] %v3592
        %v3594 = vld [vmem:[#allocation3 + $0x108] sm:$0xff]
        %v3595 = vsel %vm3560, %v3497, %v3594
        %3596 = vst [vmem:[#allocation3 + $0x108] sm:$0xff] %v3595
        %v3597 = vld [vmem:[#allocation3 + $0x120] sm:$0xff]
        %v3598 = vsel %vm3560, %v3504, %v3597
        %3599 = vst [vmem:[#allocation3 + $0x120] sm:$0xff] %v3598
        %v3600 = vld [vmem:[#allocation3 + $0x138] sm:$0xff]
        %v3601 = vsel %vm3560, %v3511, %v3600
        %3602 = vst [vmem:[#allocation3 + $0x138] sm:$0xff] %v3601
        %v3603 = vld [vmem:[#allocation3 + $0x150] sm:$0xff]
        %v3604 = vsel %vm3560, %v3518, %v3603
        %3605 = vst [vmem:[#allocation3 + $0x150] sm:$0xff] %v3604
        %v3606 = vld [vmem:[#allocation3 + $0x168] sm:$0xff]
        %v3607 = vsel %vm3560, %v3525, %v3606
        %3608 = vst [vmem:[#allocation3 + $0x168] sm:$0xff] %v3607
        %v3609 = vld [vmem:[#allocation3 + $0x180] sm:$0xff]
        %v3610 = vsel %vm3560, %v3532, %v3609
        %3611 = vst [vmem:[#allocation3 + $0x180] sm:$0xff] %v3610
        %v3612 = vld [vmem:[#allocation3 + $0x198] sm:$0xff]
        %v3613 = vsel %vm3560, %v3539, %v3612
        %3614 = vst [vmem:[#allocation3 + $0x198] sm:$0xff] %v3613
        %v3615 = vrot.slane %v3418, 1
        %v3616 = vor.u32 %v3415, %v3615
        %v3617 = vrot.slane %v3425, 1
        %v3618 = vor.u32 %v3422, %v3617
        %v3619 = vrot.slane %v3432, 1
        %v3620 = vor.u32 %v3429, %v3619
        %v3621 = vrot.slane %v3439, 1
        %v3622 = vor.u32 %v3436, %v3621
        %v3623 = vrot.slane %v3446, 1
        %v3624 = vor.u32 %v3443, %v3623
        %v3625 = vrot.slane %v3453, 1
        %v3626 = vor.u32 %v3450, %v3625
        %v3627 = vrot.slane %v3460, 1
        %v3628 = vor.u32 %v3457, %v3627
        %v3629 = vrot.slane %v3467, 1
        %v3630 = vor.u32 %v3464, %v3629
        %v3631 = vrot.slane %v3474, 1
        %v3632 = vor.u32 %v3471, %v3631
        %v3633 = vrot.slane %v3481, 1
        %v3634 = vor.u32 %v3478, %v3633
        %v3635 = vrot.slane %v3488, 1
        %v3636 = vor.u32 %v3485, %v3635
        %v3637 = vrot.slane %v3495, 1
        %v3638 = vor.u32 %v3492, %v3637
        %v3639 = vrot.slane %v3502, 1
        %v3640 = vor.u32 %v3499, %v3639
        %v3641 = vrot.slane %v3509, 1
        %v3642 = vor.u32 %v3506, %v3641
        %v3643 = vrot.slane %v3516, 1
        %v3644 = vor.u32 %v3513, %v3643
        %v3645 = vrot.slane %v3523, 1
        %v3646 = vor.u32 %v3520, %v3645
        %v3647 = vrot.slane %v3530, 1
        %v3648 = vor.u32 %v3527, %v3647
        %v3649 = vrot.slane %v3537, 1
        %v3650 = vor.u32 %v3534, %v3649
        %vm3669 = vmand %vm3558, %vm740
        %v3670 = vld [vmem:[#allocation3 + $0x10] sm:$0xff]
        %v3671 = vsel %vm3669, %v3616, %v3670
        %3672 = vst [vmem:[#allocation3 + $0x10] sm:$0xff] %v3671
        %v3673 = vld [vmem:[#allocation3 + $0x28] sm:$0xff]
        %v3674 = vsel %vm3669, %v3618, %v3673
        %3675 = vst [vmem:[#allocation3 + $0x28] sm:$0xff] %v3674
        %v3676 = vld [vmem:[#allocation3 + $0x40] sm:$0xff]
        %v3677 = vsel %vm3669, %v3620, %v3676
        %3678 = vst [vmem:[#allocation3 + $0x40] sm:$0xff] %v3677
        %v3679 = vld [vmem:[#allocation3 + $0x58] sm:$0xff]
        %v3680 = vsel %vm3669, %v3622, %v3679
        %3681 = vst [vmem:[#allocation3 + $0x58] sm:$0xff] %v3680
        %v3682 = vld [vmem:[#allocation3 + $0x70] sm:$0xff]
        %v3683 = vsel %vm3669, %v3624, %v3682
        %3684 = vst [vmem:[#allocation3 + $0x70] sm:$0xff] %v3683
        %v3685 = vld [vmem:[#allocation3 + $0x88] sm:$0xff]
        %v3686 = vsel %vm3669, %v3626, %v3685
        %3687 = vst [vmem:[#allocation3 + $0x88] sm:$0xff] %v3686
        %v3688 = vld [vmem:[#allocation3 + $0xa0] sm:$0xff]
        %v3689 = vsel %vm3669, %v3628, %v3688
        %3690 = vst [vmem:[#allocation3 + $0xa0] sm:$0xff] %v3689
        %v3691 = vld [vmem:[#allocation3 + $0xb8] sm:$0xff]
        %v3692 = vsel %vm3669, %v3630, %v3691
        %3693 = vst [vmem:[#allocation3 + $0xb8] sm:$0xff] %v3692
        %v3694 = vld [vmem:[#allocation3 + $0xd0] sm:$0xff]
        %v3695 = vsel %vm3669, %v3632, %v3694
        %3696 = vst [vmem:[#allocation3 + $0xd0] sm:$0xff] %v3695
        %v3697 = vld [vmem:[#allocation3 + $0xe8] sm:$0xff]
        %v3698 = vsel %vm3669, %v3634, %v3697
        %3699 = vst [vmem:[#allocation3 + $0xe8] sm:$0xff] %v3698
        %v3700 = vld [vmem:[#allocation3 + $0x100] sm:$0xff]
        %v3701 = vsel %vm3669, %v3636, %v3700
        %3702 = vst [vmem:[#allocation3 + $0x100] sm:$0xff] %v3701
        %v3703 = vld [vmem:[#allocation3 + $0x118] sm:$0xff]
        %v3704 = vsel %vm3669, %v3638, %v3703
        %3705 = vst [vmem:[#allocation3 + $0x118] sm:$0xff] %v3704
        %v3706 = vld [vmem:[#allocation3 + $0x130] sm:$0xff]
        %v3707 = vsel %vm3669, %v3640, %v3706
        %3708 = vst [vmem:[#allocation3 + $0x130] sm:$0xff] %v3707
        %v3709 = vld [vmem:[#allocation3 + $0x148] sm:$0xff]
        %v3710 = vsel %vm3669, %v3642, %v3709
        %3711 = vst [vmem:[#allocation3 + $0x148] sm:$0xff] %v3710
        %v3712 = vld [vmem:[#allocation3 + $0x160] sm:$0xff]
        %v3713 = vsel %vm3669, %v3644, %v3712
        %3714 = vst [vmem:[#allocation3 + $0x160] sm:$0xff] %v3713
        %v3715 = vld [vmem:[#allocation3 + $0x178] sm:$0xff]
        %v3716 = vsel %vm3669, %v3646, %v3715
        %3717 = vst [vmem:[#allocation3 + $0x178] sm:$0xff] %v3716
        %v3718 = vld [vmem:[#allocation3 + $0x190] sm:$0xff]
        %v3719 = vsel %vm3669, %v3648, %v3718
        %3720 = vst [vmem:[#allocation3 + $0x190] sm:$0xff] %v3719
        %v3721 = vld [vmem:[#allocation3 + $0x1a8] sm:$0xff]
        %v3722 = vsel %vm3669, %v3650, %v3721
        %3723 = vst [vmem:[#allocation3 + $0x1a8] sm:$0xff] %v3722
        %vm3724 = vcmask 1040384
        %vm3725 = vsmask.f32 256
        %vm3726 = vmand %vm3724, %vm3725
        %v3727 = vld [vmem:[#allocation3] sm:$0x1]
        %v3728 = vsel %vm3726, 0, %v3727
        %3729 = vst [vmem:[#allocation3] sm:$0x1] %v3728
        %v3730 = vld [vmem:[#allocation3 + $0x18] sm:$0x1]
        %v3731 = vsel %vm3726, 0, %v3730
        %3732 = vst [vmem:[#allocation3 + $0x18] sm:$0x1] %v3731
        %v3733 = vld [vmem:[#allocation3 + $0x30] sm:$0x1]
        %v3734 = vsel %vm3726, 0, %v3733
        %3735 = vst [vmem:[#allocation3 + $0x30] sm:$0x1] %v3734
        %v3736 = vld [vmem:[#allocation3 + $0x48] sm:$0x1]
        %v3737 = vsel %vm3726, 0, %v3736
        %3738 = vst [vmem:[#allocation3 + $0x48] sm:$0x1] %v3737
        %v3739 = vld [vmem:[#allocation3 + $0x60] sm:$0x1]
        %v3740 = vsel %vm3726, 0, %v3739
        %3741 = vst [vmem:[#allocation3 + $0x60] sm:$0x1] %v3740
        %v3742 = vld [vmem:[#allocation3 + $0x78] sm:$0x1]
        %v3743 = vsel %vm3726, 0, %v3742
        %3744 = vst [vmem:[#allocation3 + $0x78] sm:$0x1] %v3743
        %v3745 = vld [vmem:[#allocation3 + $0x90] sm:$0x1]
        %v3746 = vsel %vm3726, 0, %v3745
        %3747 = vst [vmem:[#allocation3 + $0x90] sm:$0x1] %v3746
        %v3748 = vld [vmem:[#allocation3 + $0xa8] sm:$0x1]
        %v3749 = vsel %vm3726, 0, %v3748
        %3750 = vst [vmem:[#allocation3 + $0xa8] sm:$0x1] %v3749
        %v3751 = vld [vmem:[#allocation3 + $0xc0] sm:$0x1]
        %v3752 = vsel %vm3726, 0, %v3751
        %3753 = vst [vmem:[#allocation3 + $0xc0] sm:$0x1] %v3752
        %v3754 = vld [vmem:[#allocation3 + $0xd8] sm:$0x1]
        %v3755 = vsel %vm3726, 0, %v3754
        %3756 = vst [vmem:[#allocation3 + $0xd8] sm:$0x1] %v3755
        %v3757 = vld [vmem:[#allocation3 + $0xf0] sm:$0x1]
        %v3758 = vsel %vm3726, 0, %v3757
        %3759 = vst [vmem:[#allocation3 + $0xf0] sm:$0x1] %v3758
        %v3760 = vld [vmem:[#allocation3 + $0x108] sm:$0x1]
        %v3761 = vsel %vm3726, 0, %v3760
        %3762 = vst [vmem:[#allocation3 + $0x108] sm:$0x1] %v3761
        %v3763 = vld [vmem:[#allocation3 + $0x120] sm:$0x1]
        %v3764 = vsel %vm3726, 0, %v3763
        %3765 = vst [vmem:[#allocation3 + $0x120] sm:$0x1] %v3764
        %v3766 = vld [vmem:[#allocation3 + $0x138] sm:$0x1]
        %v3767 = vsel %vm3726, 0, %v3766
        %3768 = vst [vmem:[#allocation3 + $0x138] sm:$0x1] %v3767
        %v3769 = vld [vmem:[#allocation3 + $0x150] sm:$0x1]
        %v3770 = vsel %vm3726, 0, %v3769
        %3771 = vst [vmem:[#allocation3 + $0x150] sm:$0x1] %v3770
        %v3772 = vld [vmem:[#allocation3 + $0x168] sm:$0x1]
        %v3773 = vsel %vm3726, 0, %v3772
        %3774 = vst [vmem:[#allocation3 + $0x168] sm:$0x1] %v3773
        %v3775 = vld [vmem:[#allocation3 + $0x180] sm:$0x1]
        %v3776 = vsel %vm3726, 0, %v3775
        %3777 = vst [vmem:[#allocation3 + $0x180] sm:$0x1] %v3776
        %v3778 = vld [vmem:[#allocation3 + $0x198] sm:$0x1]
        %v3779 = vsel %vm3726, 0, %v3778
        %3780 = vst [vmem:[#allocation3 + $0x198] sm:$0x1] %v3779
        %vm3781 = vcmask 1047559
        %vm3782 = vsmask.f32 7966
        %vm3783 = vmand %vm3781, %vm3782
        %v3784 = vld [vmem:[#allocation3 + $0x10] sm:$0x80]
        %v3785 = vsel %vm3783, 0, %v3784
        %3786 = vst [vmem:[#allocation3 + $0x10] sm:$0x80] %v3785
        %v3787 = vld [vmem:[#allocation3 + $0x28] sm:$0x80]
        %v3788 = vsel %vm3783, 0, %v3787
        %3789 = vst [vmem:[#allocation3 + $0x28] sm:$0x80] %v3788
        %v3790 = vld [vmem:[#allocation3 + $0x40] sm:$0x80]
        %v3791 = vsel %vm3783, 0, %v3790
        %3792 = vst [vmem:[#allocation3 + $0x40] sm:$0x80] %v3791
        %v3793 = vld [vmem:[#allocation3 + $0x58] sm:$0x80]
        %v3794 = vsel %vm3783, 0, %v3793
        %3795 = vst [vmem:[#allocation3 + $0x58] sm:$0x80] %v3794
        %v3796 = vld [vmem:[#allocation3 + $0x70] sm:$0x80]
        %v3797 = vsel %vm3783, 0, %v3796
        %3798 = vst [vmem:[#allocation3 + $0x70] sm:$0x80] %v3797
        %v3799 = vld [vmem:[#allocation3 + $0x88] sm:$0x80]
        %v3800 = vsel %vm3783, 0, %v3799
        %3801 = vst [vmem:[#allocation3 + $0x88] sm:$0x80] %v3800
        %v3802 = vld [vmem:[#allocation3 + $0xa0] sm:$0x80]
        %v3803 = vsel %vm3783, 0, %v3802
        %3804 = vst [vmem:[#allocation3 + $0xa0] sm:$0x80] %v3803
        %v3805 = vld [vmem:[#allocation3 + $0xb8] sm:$0x80]
        %v3806 = vsel %vm3783, 0, %v3805
        %3807 = vst [vmem:[#allocation3 + $0xb8] sm:$0x80] %v3806
        %v3808 = vld [vmem:[#allocation3 + $0xd0] sm:$0x80]
        %v3809 = vsel %vm3783, 0, %v3808
        %3810 = vst [vmem:[#allocation3 + $0xd0] sm:$0x80] %v3809
        %v3811 = vld [vmem:[#allocation3 + $0xe8] sm:$0x80]
        %v3812 = vsel %vm3783, 0, %v3811
        %3813 = vst [vmem:[#allocation3 + $0xe8] sm:$0x80] %v3812
        %v3814 = vld [vmem:[#allocation3 + $0x100] sm:$0x80]
        %v3815 = vsel %vm3783, 0, %v3814
        %3816 = vst [vmem:[#allocation3 + $0x100] sm:$0x80] %v3815
        %v3817 = vld [vmem:[#allocation3 + $0x118] sm:$0x80]
        %v3818 = vsel %vm3783, 0, %v3817
        %3819 = vst [vmem:[#allocation3 + $0x118] sm:$0x80] %v3818
        %v3820 = vld [vmem:[#allocation3 + $0x130] sm:$0x80]
        %v3821 = vsel %vm3783, 0, %v3820
        %3822 = vst [vmem:[#allocation3 + $0x130] sm:$0x80] %v3821
        %v3823 = vld [vmem:[#allocation3 + $0x148] sm:$0x80]
        %v3824 = vsel %vm3783, 0, %v3823
        %3825 = vst [vmem:[#allocation3 + $0x148] sm:$0x80] %v3824
        %v3826 = vld [vmem:[#allocation3 + $0x160] sm:$0x80]
        %v3827 = vsel %vm3783, 0, %v3826
        %3828 = vst [vmem:[#allocation3 + $0x160] sm:$0x80] %v3827
        %v3829 = vld [vmem:[#allocation3 + $0x178] sm:$0x80]
        %v3830 = vsel %vm3783, 0, %v3829
        %3831 = vst [vmem:[#allocation3 + $0x178] sm:$0x80] %v3830
        %v3832 = vld [vmem:[#allocation3 + $0x190] sm:$0x80]
        %v3833 = vsel %vm3783, 0, %v3832
        %3834 = vst [vmem:[#allocation3 + $0x190] sm:$0x80] %v3833
        %v3835 = vld [vmem:[#allocation3 + $0x1a8] sm:$0x80]
        %v3836 = vsel %vm3783, 0, %v3835
        %3837 = vst [vmem:[#allocation3 + $0x1a8] sm:$0x80] %v3836
        %p3838 = scmp.eq.s32.totalorder %s29, 0
        // Predicated region
        $region57: #{tpu_custom_call.1} parent=51 // pred_check
          %p3839 = pneg %p3838
        $region58: #{tpu_custom_call.1} parent=51 // pred_check_branch
          %3841 = sbr.rel (%p3839) target = $region60
        $region59: #{tpu_custom_call.1} parent=51 // pred_region
          %3842 = vst [vmem:[#allocation3] sm:$0xff] 0
          %3843 = vst [vmem:[#allocation3 + $0x8] sm:$0xff] 0
          %3844 = vst [vmem:[#allocation3 + $0x10] sm:$0xff] 0
          %s3845 = scalar_lea.vmem [#allocation3], 408
          %3846 = vst [vmem:[%s3845] sm:$0xff] 0
          %3847 = vst [vmem:[%s3845 + $0x8] sm:$0xff] 0
          %3848 = vst [vmem:[%s3845 + $0x10] sm:$0xff] 0
        $region60: #{tpu_custom_call.1} parent=51 // pred_fallthru
          _
        %v3849 = vld [vmem:[#allocation3] sm:$0xff]
        %v3850 = vld [vmem:[#allocation3 + $0x8] sm:$0xff]
        %v3851 = vld [vmem:[#allocation3 + $0x10] sm:$0xff]
        %v3852 = vld [vmem:[#allocation3 + $0x18] sm:$0xff]
        %v3853 = vld [vmem:[#allocation3 + $0x20] sm:$0xff]
        %v3854 = vld [vmem:[#allocation3 + $0x28] sm:$0xff]
        %v3855 = vld [vmem:[#allocation3 + $0x30] sm:$0xff]
        %v3856 = vld [vmem:[#allocation3 + $0x38] sm:$0xff]
        %v3857 = vld [vmem:[#allocation3 + $0x40] sm:$0xff]
        %v3858 = vld [vmem:[#allocation3 + $0x48] sm:$0xff]
        %v3859 = vld [vmem:[#allocation3 + $0x50] sm:$0xff]
        %v3860 = vld [vmem:[#allocation3 + $0x58] sm:$0xff]
        %v3861 = vld [vmem:[#allocation3 + $0x60] sm:$0xff]
        %v3862 = vld [vmem:[#allocation3 + $0x68] sm:$0xff]
        %v3863 = vld [vmem:[#allocation3 + $0x70] sm:$0xff]
        %v3864 = vld [vmem:[#allocation3 + $0x78] sm:$0xff]
        %v3865 = vld [vmem:[#allocation3 + $0x80] sm:$0xff]
        %v3866 = vld [vmem:[#allocation3 + $0x88] sm:$0xff]
        %v3867 = vld [vmem:[#allocation3 + $0x90] sm:$0xff]
        %v3868 = vld [vmem:[#allocation3 + $0x98] sm:$0xff]
        %v3869 = vld [vmem:[#allocation3 + $0xa0] sm:$0xff]
        %v3870 = vld [vmem:[#allocation3 + $0xa8] sm:$0xff]
        %v3871 = vld [vmem:[#allocation3 + $0xb0] sm:$0xff]
        %v3872 = vld [vmem:[#allocation3 + $0xb8] sm:$0xff]
        %v3873 = vld [vmem:[#allocation3 + $0xc0] sm:$0xff]
        %v3874 = vld [vmem:[#allocation3 + $0xc8] sm:$0xff]
        %v3875 = vld [vmem:[#allocation3 + $0xd0] sm:$0xff]
        %v3876 = vld [vmem:[#allocation3 + $0xd8] sm:$0xff]
        %v3877 = vld [vmem:[#allocation3 + $0xe0] sm:$0xff]
        %v3878 = vld [vmem:[#allocation3 + $0xe8] sm:$0xff]
        %v3879 = vld [vmem:[#allocation3 + $0xf0] sm:$0xff]
        %v3880 = vld [vmem:[#allocation3 + $0xf8] sm:$0xff]
        %v3881 = vld [vmem:[#allocation3 + $0x100] sm:$0xff]
        %v3882 = vld [vmem:[#allocation3 + $0x108] sm:$0xff]
        %v3883 = vld [vmem:[#allocation3 + $0x110] sm:$0xff]
        %v3884 = vld [vmem:[#allocation3 + $0x118] sm:$0xff]
        %v3885 = vld [vmem:[#allocation3 + $0x120] sm:$0xff]
        %v3886 = vld [vmem:[#allocation3 + $0x128] sm:$0xff]
        %v3887 = vld [vmem:[#allocation3 + $0x130] sm:$0xff]
        %v3888 = vld [vmem:[#allocation3 + $0x138] sm:$0xff]
        %v3889 = vld [vmem:[#allocation3 + $0x140] sm:$0xff]
        %v3890 = vld [vmem:[#allocation3 + $0x148] sm:$0xff]
        %v3891 = vld [vmem:[#allocation3 + $0x150] sm:$0xff]
        %v3892 = vld [vmem:[#allocation3 + $0x158] sm:$0xff]
        %v3893 = vld [vmem:[#allocation3 + $0x160] sm:$0xff]
        %v3894 = vld [vmem:[#allocation3 + $0x168] sm:$0xff]
        %v3895 = vld [vmem:[#allocation3 + $0x170] sm:$0xff]
        %v3896 = vld [vmem:[#allocation3 + $0x178] sm:$0xff]
        %v3897 = vld [vmem:[#allocation5] sm:$0xf]
        %v3898 = vld [vmem:[#allocation5 + $0x4] sm:$0xf]
        %v3899 = vld [vmem:[#allocation5 + $0x8] sm:$0xf]
        %v3900 = vld [vmem:[#allocation5 + $0xc] sm:$0xf]
        %v3901 = vld [vmem:[#allocation5 + $0x10] sm:$0xf]
        %v3902 = vld [vmem:[#allocation5 + $0x14] sm:$0xf]
        %v3903 = vld [vmem:[#allocation5 + $0x18] sm:$0xf]
        %v3904 = vld [vmem:[#allocation5 + $0x1c] sm:$0xf]
        %v3905 = vld [vmem:[#allocation5 + $0x20] sm:$0xf]
        %v3906 = vld [vmem:[#allocation5 + $0x24] sm:$0xf]
        %v3907 = vld [vmem:[#allocation5 + $0x28] sm:$0xf]
        %v3908 = vld [vmem:[#allocation5 + $0x2c] sm:$0xf]
        %v3909 = vld [vmem:[#allocation5 + $0x30] sm:$0xf]
        %v3910 = vld [vmem:[#allocation5 + $0x34] sm:$0xf]
        %v3911 = vld [vmem:[#allocation5 + $0x38] sm:$0xf]
        %v3912 = vld [vmem:[#allocation5 + $0x3c] sm:$0xf]
        %v3913 = vld [vmem:[#allocation5 + $0x40] sm:$0xf]
        %v3914 = vld [vmem:[#allocation5 + $0x44] sm:$0xf]
        %v3915 = vld [vmem:[#allocation5 + $0x48] sm:$0xf]
        %v3916 = vld [vmem:[#allocation5 + $0x4c] sm:$0xf]
        %v3917 = vld [vmem:[#allocation5 + $0x50] sm:$0xf]
        %v3918 = vld [vmem:[#allocation5 + $0x54] sm:$0xf]
        %v3919 = vld [vmem:[#allocation5 + $0x58] sm:$0xf]
        %v3920 = vld [vmem:[#allocation5 + $0x5c] sm:$0xf]
        %v3921 = vld [vmem:[#allocation5 + $0x60] sm:$0xf]
        %v3922 = vld [vmem:[#allocation5 + $0x64] sm:$0xf]
        %v3923 = vld [vmem:[#allocation5 + $0x68] sm:$0xf]
        %v3924 = vld [vmem:[#allocation5 + $0x6c] sm:$0xf]
        %v3925 = vld [vmem:[#allocation5 + $0x70] sm:$0xf]
        %v3926 = vld [vmem:[#allocation5 + $0x74] sm:$0xf]
        %v3927 = vld [vmem:[#allocation5 + $0x78] sm:$0xf]
        %v3928 = vld [vmem:[#allocation5 + $0x7c] sm:$0xf]
        %v3929 = vld [vmem:[#allocation5 + $0x80] sm:$0xf]
        %v3930 = vld [vmem:[#allocation5 + $0x84] sm:$0xf]
        %v3931 = vld [vmem:[#allocation5 + $0x88] sm:$0xf]
        %v3932 = vld [vmem:[#allocation5 + $0x8c] sm:$0xf]
        %v3933 = vld [vmem:[#allocation5 + $0x90] sm:$0xf]
        %v3934 = vld [vmem:[#allocation5 + $0x94] sm:$0xf]
        %v3935 = vld [vmem:[#allocation5 + $0x98] sm:$0xf]
        %v3936 = vld [vmem:[#allocation5 + $0x9c] sm:$0xf]
        %v3937 = vld [vmem:[#allocation5 + $0xa0] sm:$0xf]
        %v3938 = vld [vmem:[#allocation5 + $0xa4] sm:$0xf]
        %v3939 = vld [vmem:[#allocation5 + $0xa8] sm:$0xf]
        %v3940 = vld [vmem:[#allocation5 + $0xac] sm:$0xf]
        %v3941 = vld [vmem:[#allocation5 + $0xb0] sm:$0xf]
        %v3942 = vld [vmem:[#allocation5 + $0xb4] sm:$0xf]
        %v3943 = vld [vmem:[#allocation5 + $0xb8] sm:$0xf]
        %v3944 = vld [vmem:[#allocation5 + $0xbc] sm:$0xf]
        %s3945 = scalar_lea.vmem [#allocation3], 24
        %v3946 = vld [vmem:[%s3945] sm:$0xff]
        %v3947 = vld [vmem:[%s3945 + $0x8] sm:$0xff]
        %v3948 = vld [vmem:[%s3945 + $0x10] sm:$0xff]
        %v3949 = vld [vmem:[%s3945 + $0x18] sm:$0xff]
        %v3950 = vld [vmem:[%s3945 + $0x20] sm:$0xff]
        %v3951 = vld [vmem:[%s3945 + $0x28] sm:$0xff]
        %v3952 = vld [vmem:[%s3945 + $0x30] sm:$0xff]
        %v3953 = vld [vmem:[%s3945 + $0x38] sm:$0xff]
        %v3954 = vld [vmem:[%s3945 + $0x40] sm:$0xff]
        %v3955 = vld [vmem:[%s3945 + $0x48] sm:$0xff]
        %v3956 = vld [vmem:[%s3945 + $0x50] sm:$0xff]
        %v3957 = vld [vmem:[%s3945 + $0x58] sm:$0xff]
        %v3958 = vld [vmem:[%s3945 + $0x60] sm:$0xff]
        %v3959 = vld [vmem:[%s3945 + $0x68] sm:$0xff]
        %v3960 = vld [vmem:[%s3945 + $0x70] sm:$0xff]
        %v3961 = vld [vmem:[%s3945 + $0x78] sm:$0xff]
        %v3962 = vld [vmem:[%s3945 + $0x80] sm:$0xff]
        %v3963 = vld [vmem:[%s3945 + $0x88] sm:$0xff]
        %v3964 = vld [vmem:[%s3945 + $0x90] sm:$0xff]
        %v3965 = vld [vmem:[%s3945 + $0x98] sm:$0xff]
        %v3966 = vld [vmem:[%s3945 + $0xa0] sm:$0xff]
        %v3967 = vld [vmem:[%s3945 + $0xa8] sm:$0xff]
        %v3968 = vld [vmem:[%s3945 + $0xb0] sm:$0xff]
        %v3969 = vld [vmem:[%s3945 + $0xb8] sm:$0xff]
        %v3970 = vld [vmem:[%s3945 + $0xc0] sm:$0xff]
        %v3971 = vld [vmem:[%s3945 + $0xc8] sm:$0xff]
        %v3972 = vld [vmem:[%s3945 + $0xd0] sm:$0xff]
        %v3973 = vld [vmem:[%s3945 + $0xd8] sm:$0xff]
        %v3974 = vld [vmem:[%s3945 + $0xe0] sm:$0xff]
        %v3975 = vld [vmem:[%s3945 + $0xe8] sm:$0xff]
        %v3976 = vld [vmem:[%s3945 + $0xf0] sm:$0xff]
        %v3977 = vld [vmem:[%s3945 + $0xf8] sm:$0xff]
        %v3978 = vld [vmem:[%s3945 + $0x100] sm:$0xff]
        %v3979 = vld [vmem:[%s3945 + $0x108] sm:$0xff]
        %v3980 = vld [vmem:[%s3945 + $0x110] sm:$0xff]
        %v3981 = vld [vmem:[%s3945 + $0x118] sm:$0xff]
        %v3982 = vld [vmem:[%s3945 + $0x120] sm:$0xff]
        %v3983 = vld [vmem:[%s3945 + $0x128] sm:$0xff]
        %v3984 = vld [vmem:[%s3945 + $0x130] sm:$0xff]
        %v3985 = vld [vmem:[%s3945 + $0x138] sm:$0xff]
        %v3986 = vld [vmem:[%s3945 + $0x140] sm:$0xff]
        %v3987 = vld [vmem:[%s3945 + $0x148] sm:$0xff]
        %v3988 = vld [vmem:[%s3945 + $0x150] sm:$0xff]
        %v3989 = vld [vmem:[%s3945 + $0x158] sm:$0xff]
        %v3990 = vld [vmem:[%s3945 + $0x160] sm:$0xff]
        %v3991 = vld [vmem:[%s3945 + $0x168] sm:$0xff]
        %v3992 = vld [vmem:[%s3945 + $0x170] sm:$0xff]
        %v3993 = vld [vmem:[%s3945 + $0x178] sm:$0xff]
        %s3994 = scalar_lea.vmem [#allocation5], 192
        %v3995 = vld [vmem:[%s3994] sm:$0xf]
        %v3996 = vld [vmem:[%s3994 + $0x4] sm:$0xf]
        %v3997 = vld [vmem:[%s3994 + $0x8] sm:$0xf]
        %v3998 = vld [vmem:[%s3994 + $0xc] sm:$0xf]
        %v3999 = vld [vmem:[%s3994 + $0x10] sm:$0xf]
        %v4000 = vld [vmem:[%s3994 + $0x14] sm:$0xf]
        %v4001 = vld [vmem:[%s3994 + $0x18] sm:$0xf]
        %v4002 = vld [vmem:[%s3994 + $0x1c] sm:$0xf]
        %v4003 = vld [vmem:[%s3994 + $0x20] sm:$0xf]
        %v4004 = vld [vmem:[%s3994 + $0x24] sm:$0xf]
        %v4005 = vld [vmem:[%s3994 + $0x28] sm:$0xf]
        %v4006 = vld [vmem:[%s3994 + $0x2c] sm:$0xf]
        %v4007 = vld [vmem:[%s3994 + $0x30] sm:$0xf]
        %v4008 = vld [vmem:[%s3994 + $0x34] sm:$0xf]
        %v4009 = vld [vmem:[%s3994 + $0x38] sm:$0xf]
        %v4010 = vld [vmem:[%s3994 + $0x3c] sm:$0xf]
        %v4011 = vld [vmem:[%s3994 + $0x40] sm:$0xf]
        %v4012 = vld [vmem:[%s3994 + $0x44] sm:$0xf]
        %v4013 = vld [vmem:[%s3994 + $0x48] sm:$0xf]
        %v4014 = vld [vmem:[%s3994 + $0x4c] sm:$0xf]
        %v4015 = vld [vmem:[%s3994 + $0x50] sm:$0xf]
        %v4016 = vld [vmem:[%s3994 + $0x54] sm:$0xf]
        %v4017 = vld [vmem:[%s3994 + $0x58] sm:$0xf]
        %v4018 = vld [vmem:[%s3994 + $0x5c] sm:$0xf]
        %v4019 = vld [vmem:[%s3994 + $0x60] sm:$0xf]
        %v4020 = vld [vmem:[%s3994 + $0x64] sm:$0xf]
        %v4021 = vld [vmem:[%s3994 + $0x68] sm:$0xf]
        %v4022 = vld [vmem:[%s3994 + $0x6c] sm:$0xf]
        %v4023 = vld [vmem:[%s3994 + $0x70] sm:$0xf]
        %v4024 = vld [vmem:[%s3994 + $0x74] sm:$0xf]
        %v4025 = vld [vmem:[%s3994 + $0x78] sm:$0xf]
        %v4026 = vld [vmem:[%s3994 + $0x7c] sm:$0xf]
        %v4027 = vld [vmem:[%s3994 + $0x80] sm:$0xf]
        %v4028 = vld [vmem:[%s3994 + $0x84] sm:$0xf]
        %v4029 = vld [vmem:[%s3994 + $0x88] sm:$0xf]
        %v4030 = vld [vmem:[%s3994 + $0x8c] sm:$0xf]
        %v4031 = vld [vmem:[%s3994 + $0x90] sm:$0xf]
        %v4032 = vld [vmem:[%s3994 + $0x94] sm:$0xf]
        %v4033 = vld [vmem:[%s3994 + $0x98] sm:$0xf]
        %v4034 = vld [vmem:[%s3994 + $0x9c] sm:$0xf]
        %v4035 = vld [vmem:[%s3994 + $0xa0] sm:$0xf]
        %v4036 = vld [vmem:[%s3994 + $0xa4] sm:$0xf]
        %v4037 = vld [vmem:[%s3994 + $0xa8] sm:$0xf]
        %v4038 = vld [vmem:[%s3994 + $0xac] sm:$0xf]
        %v4039 = vld [vmem:[%s3994 + $0xb0] sm:$0xf]
        %v4040 = vld [vmem:[%s3994 + $0xb4] sm:$0xf]
        %v4041 = vld [vmem:[%s3994 + $0xb8] sm:$0xf]
        %v4042 = vld [vmem:[%s3994 + $0xbc] sm:$0xf]
        %v4091 = vunpack.c.l.b16 %v3995
        %v4092 = vunpack.c.l.b16 %v3996
        %v4093 = vunpack.c.l.b16 %v3997
        %v4094 = vunpack.c.l.b16 %v3998
        %v4095 = vunpack.c.l.b16 %v3999
        %v4096 = vunpack.c.l.b16 %v4000
        %v4097 = vunpack.c.l.b16 %v4001
        %v4098 = vunpack.c.l.b16 %v4002
        %v4099 = vunpack.c.l.b16 %v4003
        %v4100 = vunpack.c.l.b16 %v4004
        %v4101 = vunpack.c.l.b16 %v4005
        %v4102 = vunpack.c.l.b16 %v4006
        %v4103 = vunpack.c.l.b16 %v4007
        %v4104 = vunpack.c.l.b16 %v4008
        %v4105 = vunpack.c.l.b16 %v4009
        %v4106 = vunpack.c.l.b16 %v4010
        %v4107 = vunpack.c.l.b16 %v4011
        %v4108 = vunpack.c.l.b16 %v4012
        %v4109 = vunpack.c.l.b16 %v4013
        %v4110 = vunpack.c.l.b16 %v4014
        %v4111 = vunpack.c.l.b16 %v4015
        %v4112 = vunpack.c.l.b16 %v4016
        %v4113 = vunpack.c.l.b16 %v4017
        %v4114 = vunpack.c.l.b16 %v4018
        %v4115 = vunpack.c.l.b16 %v4019
        %v4116 = vunpack.c.l.b16 %v4020
        %v4117 = vunpack.c.l.b16 %v4021
        %v4118 = vunpack.c.l.b16 %v4022
        %v4119 = vunpack.c.l.b16 %v4023
        %v4120 = vunpack.c.l.b16 %v4024
        %v4121 = vunpack.c.l.b16 %v4025
        %v4122 = vunpack.c.l.b16 %v4026
        %v4123 = vunpack.c.l.b16 %v4027
        %v4124 = vunpack.c.l.b16 %v4028
        %v4125 = vunpack.c.l.b16 %v4029
        %v4126 = vunpack.c.l.b16 %v4030
        %v4127 = vunpack.c.l.b16 %v4031
        %v4128 = vunpack.c.l.b16 %v4032
        %v4129 = vunpack.c.l.b16 %v4033
        %v4130 = vunpack.c.l.b16 %v4034
        %v4131 = vunpack.c.l.b16 %v4035
        %v4132 = vunpack.c.l.b16 %v4036
        %v4133 = vunpack.c.l.b16 %v4037
        %v4134 = vunpack.c.l.b16 %v4038
        %v4135 = vunpack.c.l.b16 %v4039
        %v4136 = vunpack.c.l.b16 %v4040
        %v4137 = vunpack.c.l.b16 %v4041
        %v4138 = vunpack.c.l.b16 %v4042
        %v4139 = vpack.c.b16 %v4092, %v4091
        %v4140 = vpack.c.b16 %v4094, %v4093
        %v4141 = vpack.c.b16 %v4096, %v4095
        %v4142 = vpack.c.b16 %v4098, %v4097
        %v4143 = vpack.c.b16 %v4100, %v4099
        %v4144 = vpack.c.b16 %v4102, %v4101
        %v4145 = vpack.c.b16 %v4104, %v4103
        %v4146 = vpack.c.b16 %v4106, %v4105
        %v4147 = vpack.c.b16 %v4108, %v4107
        %v4148 = vpack.c.b16 %v4110, %v4109
        %v4149 = vpack.c.b16 %v4112, %v4111
        %v4150 = vpack.c.b16 %v4114, %v4113
        %v4151 = vpack.c.b16 %v4116, %v4115
        %v4152 = vpack.c.b16 %v4118, %v4117
        %v4153 = vpack.c.b16 %v4120, %v4119
        %v4154 = vpack.c.b16 %v4122, %v4121
        %v4155 = vpack.c.b16 %v4124, %v4123
        %v4156 = vpack.c.b16 %v4126, %v4125
        %v4157 = vpack.c.b16 %v4128, %v4127
        %v4158 = vpack.c.b16 %v4130, %v4129
        %v4159 = vpack.c.b16 %v4132, %v4131
        %v4160 = vpack.c.b16 %v4134, %v4133
        %v4161 = vpack.c.b16 %v4136, %v4135
        %v4162 = vpack.c.b16 %v4138, %v4137
        %4187 = vmatprep.subr.bf16.mxu0 0
        %4188 = vmatpush1.bf16.msra.mxu0 %v4139
        %4189 = vmatprep.subr.bf16.mxu0 0
        %4190 = vmatpush1.bf16.msra.mxu0 %v4140
        %4191 = vmatprep.subr.bf16.mxu0 0
        %4192 = vmatpush1.bf16.msra.mxu0 %v4141
        %4193 = vmatprep.subr.bf16.mxu0 0
        %4194 = vmatpush1.bf16.msra.mxu0 %v4142
        %4195 = vmatprep.subr.bf16.mxu0 0
        %4196 = vmatpush1.bf16.msra.mxu0 %v4143
        %4197 = vmatprep.subr.bf16.mxu0 0
        %4198 = vmatpush1.bf16.msra.mxu0 %v4144
        %4199 = vmatprep.subr.bf16.mxu0 0
        %4200 = vmatpush1.bf16.msra.mxu0 %v4145
        %4201 = vmatprep.subr.bf16.mxu0 0
        %4202 = vmatpush1.bf16.msra.mxu0 %v4146
        %4203 = vmatprep.subr.bf16.mxu0 0
        %4204 = vmatpush1.bf16.msra.mxu0 %v4147
        %4205 = vmatprep.subr.bf16.mxu0 0
        %4206 = vmatpush1.bf16.msra.mxu0 %v4148
        %4207 = vmatprep.subr.bf16.mxu0 0
        %4208 = vmatpush1.bf16.msra.mxu0 %v4149
        %4209 = vmatprep.subr.bf16.mxu0 0
        %4210 = vmatpush1.bf16.msra.mxu0 %v4150
        %4211 = vmatprep.subr.bf16.mxu0 0
        %4212 = vmatpush1.bf16.msra.mxu0 %v4151
        %4213 = vmatprep.subr.bf16.mxu0 0
        %4214 = vmatpush1.bf16.msra.mxu0 %v4152
        %4215 = vmatprep.subr.bf16.mxu0 0
        %4216 = vmatpush1.bf16.msra.mxu0 %v4153
        %4217 = vmatprep.subr.bf16.mxu0 0
        %4218 = vmatpush1.bf16.msra.mxu0 %v4154
        %4219 = vmatprep.mubr.bf16.mxu0 %v3947
        %4220 = vmatmul.mubr.bf16.gmra.mrb[0].mxu0 %v3946
        %v4221 = vpop.f32.mrb[0].mxu0
        %v4222 = vadd.f32 0.0, %v4221
        %v4223 = vpop.f32.mrb[0].mxu0
        %v4224 = vpop.f32.mrb[0].mxu0
        %v4225 = vadd.f32 0.0, %v4224
        %v4226 = vpop.f32.mrb[0].mxu0
        %4227 = vmatprep.mubr.bf16.mxu0 %v3950
        %4228 = vmatmul.mubr.bf16.gmra.mrb[0].mxu0 %v3949
        %v4229 = vpop.f32.mrb[0].mxu0
        %v4230 = vadd.f32 0.0, %v4229
        %v4231 = vpop.f32.mrb[0].mxu0
        %v4232 = vpop.f32.mrb[0].mxu0
        %v4233 = vadd.f32 0.0, %v4232
        %v4234 = vpop.f32.mrb[0].mxu0
        %4235 = vmatprep.mubr.bf16.mxu0 %v3953
        %4236 = vmatmul.mubr.bf16.gmra.mrb[0].mxu0 %v3952
        %v4237 = vpop.f32.mrb[0].mxu0
        %v4238 = vadd.f32 0.0, %v4237
        %v4239 = vpop.f32.mrb[0].mxu0
        %v4240 = vpop.f32.mrb[0].mxu0
        %v4241 = vadd.f32 0.0, %v4240
        %v4242 = vpop.f32.mrb[0].mxu0
        %4243 = vmatprep.mubr.bf16.mxu0 %v3956
        %4244 = vmatmul.mubr.bf16.gmra.mrb[0].mxu0 %v3955
        %v4245 = vpop.f32.mrb[0].mxu0
        %v4246 = vadd.f32 0.0, %v4245
        %v4247 = vpop.f32.mrb[0].mxu0
        %v4248 = vpop.f32.mrb[0].mxu0
        %v4249 = vadd.f32 0.0, %v4248
        %v4250 = vpop.f32.mrb[0].mxu0
        %4251 = vmatprep.mubr.bf16.mxu0 %v3959
        %4252 = vmatmul.mubr.bf16.gmra.mrb[0].mxu0 %v3958
        %v4253 = vpop.f32.mrb[0].mxu0
        %v4254 = vadd.f32 0.0, %v4253
        %v4255 = vpop.f32.mrb[0].mxu0
        %v4256 = vpop.f32.mrb[0].mxu0
        %v4257 = vadd.f32 0.0, %v4256
        %v4258 = vpop.f32.mrb[0].mxu0
        %4259 = vmatprep.mubr.bf16.mxu0 %v3962
        %4260 = vmatmul.mubr.bf16.gmra.mrb[0].mxu0 %v3961
        %v4261 = vpop.f32.mrb[0].mxu0
        %v4262 = vadd.f32 0.0, %v4261
        %v4263 = vpop.f32.mrb[0].mxu0
        %v4264 = vpop.f32.mrb[0].mxu0
        %v4265 = vadd.f32 0.0, %v4264
        %v4266 = vpop.f32.mrb[0].mxu0
        %4267 = vmatprep.mubr.bf16.mxu0 %v3965
        %4268 = vmatmul.mubr.bf16.gmra.mrb[0].mxu0 %v3964
        %v4269 = vpop.f32.mrb[0].mxu0
        %v4270 = vadd.f32 0.0, %v4269
        %v4271 = vpop.f32.mrb[0].mxu0
        %v4272 = vpop.f32.mrb[0].mxu0
        %v4273 = vadd.f32 0.0, %v4272
        %v4274 = vpop.f32.mrb[0].mxu0
        %4275 = vmatprep.mubr.bf16.mxu0 %v3968
        %4276 = vmatmul.mubr.bf16.gmra.mrb[0].mxu0 %v3967
        %v4277 = vpop.f32.mrb[0].mxu0
        %v4278 = vadd.f32 0.0, %v4277
        %v4279 = vpop.f32.mrb[0].mxu0
        %v4280 = vpop.f32.mrb[0].mxu0
        %v4281 = vadd.f32 0.0, %v4280
        %v4282 = vpop.f32.mrb[0].mxu0
        %4283 = vmatprep.mubr.bf16.mxu0 %v3971
        %4284 = vmatmul.mubr.bf16.gmra.mrb[0].mxu0 %v3970
        %v4285 = vpop.f32.mrb[0].mxu0
        %v4286 = vadd.f32 0.0, %v4285
        %v4287 = vpop.f32.mrb[0].mxu0
        %v4288 = vpop.f32.mrb[0].mxu0
        %v4289 = vadd.f32 0.0, %v4288
        %v4290 = vpop.f32.mrb[0].mxu0
        %4291 = vmatprep.mubr.bf16.mxu0 %v3974
        %4292 = vmatmul.mubr.bf16.gmra.mrb[0].mxu0 %v3973
        %v4293 = vpop.f32.mrb[0].mxu0
        %v4294 = vadd.f32 0.0, %v4293
        %v4295 = vpop.f32.mrb[0].mxu0
        %v4296 = vpop.f32.mrb[0].mxu0
        %v4297 = vadd.f32 0.0, %v4296
        %v4298 = vpop.f32.mrb[0].mxu0
        %4299 = vmatprep.mubr.bf16.mxu0 %v3977
        %4300 = vmatmul.mubr.bf16.gmra.mrb[0].mxu0 %v3976
        %v4301 = vpop.f32.mrb[0].mxu0
        %v4302 = vadd.f32 0.0, %v4301
        %v4303 = vpop.f32.mrb[0].mxu0
        %v4304 = vpop.f32.mrb[0].mxu0
        %v4305 = vadd.f32 0.0, %v4304
        %v4306 = vpop.f32.mrb[0].mxu0
        %4307 = vmatprep.mubr.bf16.mxu0 %v3980
        %4308 = vmatmul.mubr.bf16.gmra.mrb[0].mxu0 %v3979
        %v4309 = vpop.f32.mrb[0].mxu0
        %v4310 = vadd.f32 0.0, %v4309
        %v4311 = vpop.f32.mrb[0].mxu0
        %v4312 = vpop.f32.mrb[0].mxu0
        %v4313 = vadd.f32 0.0, %v4312
        %v4314 = vpop.f32.mrb[0].mxu0
        %4315 = vmatprep.mubr.bf16.mxu0 %v3983
        %4316 = vmatmul.mubr.bf16.gmra.mrb[0].mxu0 %v3982
        %v4317 = vpop.f32.mrb[0].mxu0
        %v4318 = vadd.f32 0.0, %v4317
        %v4319 = vpop.f32.mrb[0].mxu0
        %v4320 = vpop.f32.mrb[0].mxu0
        %v4321 = vadd.f32 0.0, %v4320
        %v4322 = vpop.f32.mrb[0].mxu0
        %4323 = vmatprep.mubr.bf16.mxu0 %v3986
        %4324 = vmatmul.mubr.bf16.gmra.mrb[0].mxu0 %v3985
        %v4325 = vpop.f32.mrb[0].mxu0
        %v4326 = vadd.f32 0.0, %v4325
        %v4327 = vpop.f32.mrb[0].mxu0
        %v4328 = vpop.f32.mrb[0].mxu0
        %v4329 = vadd.f32 0.0, %v4328
        %v4330 = vpop.f32.mrb[0].mxu0
        %4331 = vmatprep.mubr.bf16.mxu0 %v3989
        %4332 = vmatmul.mubr.bf16.gmra.mrb[0].mxu0 %v3988
        %v4333 = vpop.f32.mrb[0].mxu0
        %v4334 = vadd.f32 0.0, %v4333
        %v4335 = vpop.f32.mrb[0].mxu0
        %v4336 = vpop.f32.mrb[0].mxu0
        %v4337 = vadd.f32 0.0, %v4336
        %v4338 = vpop.f32.mrb[0].mxu0
        %4339 = vmatprep.mubr.bf16.mxu0 %v3992
        %4340 = vmatmul.mubr.bf16.gmra.mrb[0].mxu0 %v3991
        %v4341 = vpop.f32.mrb[0].mxu0
        %v4342 = vadd.f32 0.0, %v4341
        %v4343 = vpop.f32.mrb[0].mxu0
        %v4344 = vpop.f32.mrb[0].mxu0
        %v4345 = vadd.f32 0.0, %v4344
        %v4346 = vpop.f32.mrb[0].mxu0
        %4347 = vdwg.mxu0
        %4348 = vmatprep.subr.bf16.mxu0 0
        %4349 = vmatpush1.bf16.msra.mxu0 %v4155
        %4350 = vmatprep.subr.bf16.mxu0 0
        %4351 = vmatpush1.bf16.msra.mxu0 %v4156
        %4352 = vmatprep.subr.bf16.mxu0 0
        %4353 = vmatpush1.bf16.msra.mxu0 %v4157
        %4354 = vmatprep.subr.bf16.mxu0 0
        %4355 = vmatpush1.bf16.msra.mxu0 %v4158
        %4356 = vmatprep.subr.bf16.mxu0 0
        %4357 = vmatpush1.bf16.msra.mxu0 %v4159
        %4358 = vmatprep.subr.bf16.mxu0 0
        %4359 = vmatpush1.bf16.msra.mxu0 %v4160
        %4360 = vmatprep.subr.bf16.mxu0 0
        %4361 = vmatpush1.bf16.msra.mxu0 %v4161
        %4362 = vmatprep.subr.bf16.mxu0 0
        %4363 = vmatpush1.bf16.msra.mxu0 %v4162
        %4364 = vmatprep.subr.bf16.mxu0 0
        %4365 = vmatpush1.bf16.msra.mxu0 0
        %4366 = vmatprep.subr.bf16.mxu0 0
        %4367 = vmatpush1.bf16.msra.mxu0 0
        %4368 = vmatprep.subr.bf16.mxu0 0
        %4369 = vmatpush1.bf16.msra.mxu0 0
        %4370 = vmatprep.subr.bf16.mxu0 0
        %4371 = vmatpush1.bf16.msra.mxu0 0
        %4372 = vmatprep.subr.bf16.mxu0 0
        %4373 = vmatpush1.bf16.msra.mxu0 0
        %4374 = vmatprep.subr.bf16.mxu0 0
        %4375 = vmatpush1.bf16.msra.mxu0 0
        %4376 = vmatprep.subr.bf16.mxu0 0
        %4377 = vmatpush1.bf16.msra.mxu0 0
        %4378 = vmatprep.subr.bf16.mxu0 0
        %4379 = vmatpush1.bf16.msra.mxu0 0
        %4380 = vmatprep.mubr.bf16.mxu0 0
        %4381 = vmatmul.mubr.bf16.gmra.mrb[0].mxu0 %v3948
        %v4382 = vpop.f32.mrb[0].mxu0
        %v4383 = vadd.f32 %v4222, %v4382
        %v4384 = vpop.f32.mrb[0].mxu0
        %v4385 = vpop.f32.mrb[0].mxu0
        %v4386 = vadd.f32 %v4225, %v4385
        %v4387 = vpop.f32.mrb[0].mxu0
        %4388 = vmatprep.mubr.bf16.mxu0 0
        %4389 = vmatmul.mubr.bf16.gmra.mrb[0].mxu0 %v3951
        %v4390 = vpop.f32.mrb[0].mxu0
        %v4391 = vadd.f32 %v4230, %v4390
        %v4392 = vpop.f32.mrb[0].mxu0
        %v4393 = vpop.f32.mrb[0].mxu0
        %v4394 = vadd.f32 %v4233, %v4393
        %v4395 = vpop.f32.mrb[0].mxu0
        %4396 = vmatprep.mubr.bf16.mxu0 0
        %4397 = vmatmul.mubr.bf16.gmra.mrb[0].mxu0 %v3954
        %v4398 = vpop.f32.mrb[0].mxu0
        %v4399 = vadd.f32 %v4238, %v4398
        %v4400 = vpop.f32.mrb[0].mxu0
        %v4401 = vpop.f32.mrb[0].mxu0
        %v4402 = vadd.f32 %v4241, %v4401
        %v4403 = vpop.f32.mrb[0].mxu0
        %4404 = vmatprep.mubr.bf16.mxu0 0
        %4405 = vmatmul.mubr.bf16.gmra.mrb[0].mxu0 %v3957
        %v4406 = vpop.f32.mrb[0].mxu0
        %v4407 = vadd.f32 %v4246, %v4406
        %v4408 = vpop.f32.mrb[0].mxu0
        %v4409 = vpop.f32.mrb[0].mxu0
        %v4410 = vadd.f32 %v4249, %v4409
        %v4411 = vpop.f32.mrb[0].mxu0
        %4412 = vmatprep.mubr.bf16.mxu0 0
        %4413 = vmatmul.mubr.bf16.gmra.mrb[0].mxu0 %v3960
        %v4414 = vpop.f32.mrb[0].mxu0
        %v4415 = vadd.f32 %v4254, %v4414
        %v4416 = vpop.f32.mrb[0].mxu0
        %v4417 = vpop.f32.mrb[0].mxu0
        %v4418 = vadd.f32 %v4257, %v4417
        %v4419 = vpop.f32.mrb[0].mxu0
        %4420 = vmatprep.mubr.bf16.mxu0 0
        %4421 = vmatmul.mubr.bf16.gmra.mrb[0].mxu0 %v3963
        %v4422 = vpop.f32.mrb[0].mxu0
        %v4423 = vadd.f32 %v4262, %v4422
        %v4424 = vpop.f32.mrb[0].mxu0
        %v4425 = vpop.f32.mrb[0].mxu0
        %v4426 = vadd.f32 %v4265, %v4425
        %v4427 = vpop.f32.mrb[0].mxu0
        %4428 = vmatprep.mubr.bf16.mxu0 0
        %4429 = vmatmul.mubr.bf16.gmra.mrb[0].mxu0 %v3966
        %v4430 = vpop.f32.mrb[0].mxu0
        %v4431 = vadd.f32 %v4270, %v4430
        %v4432 = vpop.f32.mrb[0].mxu0
        %v4433 = vpop.f32.mrb[0].mxu0
        %v4434 = vadd.f32 %v4273, %v4433
        %v4435 = vpop.f32.mrb[0].mxu0
        %4436 = vmatprep.mubr.bf16.mxu0 0
        %4437 = vmatmul.mubr.bf16.gmra.mrb[0].mxu0 %v3969
        %v4438 = vpop.f32.mrb[0].mxu0
        %v4439 = vadd.f32 %v4278, %v4438
        %v4440 = vpop.f32.mrb[0].mxu0
        %v4441 = vpop.f32.mrb[0].mxu0
        %v4442 = vadd.f32 %v4281, %v4441
        %v4443 = vpop.f32.mrb[0].mxu0
        %4444 = vmatprep.mubr.bf16.mxu0 0
        %4445 = vmatmul.mubr.bf16.gmra.mrb[0].mxu0 %v3972
        %v4446 = vpop.f32.mrb[0].mxu0
        %v4447 = vadd.f32 %v4286, %v4446
        %v4448 = vpop.f32.mrb[0].mxu0
        %v4449 = vpop.f32.mrb[0].mxu0
        %v4450 = vadd.f32 %v4289, %v4449
        %v4451 = vpop.f32.mrb[0].mxu0
        %4452 = vmatprep.mubr.bf16.mxu0 0
        %4453 = vmatmul.mubr.bf16.gmra.mrb[0].mxu0 %v3975
        %v4454 = vpop.f32.mrb[0].mxu0
        %v4455 = vadd.f32 %v4294, %v4454
        %v4456 = vpop.f32.mrb[0].mxu0
        %v4457 = vpop.f32.mrb[0].mxu0
        %v4458 = vadd.f32 %v4297, %v4457
        %v4459 = vpop.f32.mrb[0].mxu0
        %4460 = vmatprep.mubr.bf16.mxu0 0
        %4461 = vmatmul.mubr.bf16.gmra.mrb[0].mxu0 %v3978
        %v4462 = vpop.f32.mrb[0].mxu0
        %v4463 = vadd.f32 %v4302, %v4462
        %v4464 = vpop.f32.mrb[0].mxu0
        %v4465 = vpop.f32.mrb[0].mxu0
        %v4466 = vadd.f32 %v4305, %v4465
        %v4467 = vpop.f32.mrb[0].mxu0
        %4468 = vmatprep.mubr.bf16.mxu0 0
        %4469 = vmatmul.mubr.bf16.gmra.mrb[0].mxu0 %v3981
        %v4470 = vpop.f32.mrb[0].mxu0
        %v4471 = vadd.f32 %v4310, %v4470
        %v4472 = vpop.f32.mrb[0].mxu0
        %v4473 = vpop.f32.mrb[0].mxu0
        %v4474 = vadd.f32 %v4313, %v4473
        %v4475 = vpop.f32.mrb[0].mxu0
        %4476 = vmatprep.mubr.bf16.mxu0 0
        %4477 = vmatmul.mubr.bf16.gmra.mrb[0].mxu0 %v3984
        %v4478 = vpop.f32.mrb[0].mxu0
        %v4479 = vadd.f32 %v4318, %v4478
        %v4480 = vpop.f32.mrb[0].mxu0
        %v4481 = vpop.f32.mrb[0].mxu0
        %v4482 = vadd.f32 %v4321, %v4481
        %v4483 = vpop.f32.mrb[0].mxu0
        %4484 = vmatprep.mubr.bf16.mxu0 0
        %4485 = vmatmul.mubr.bf16.gmra.mrb[0].mxu0 %v3987
        %v4486 = vpop.f32.mrb[0].mxu0
        %v4487 = vadd.f32 %v4326, %v4486
        %v4488 = vpop.f32.mrb[0].mxu0
        %v4489 = vpop.f32.mrb[0].mxu0
        %v4490 = vadd.f32 %v4329, %v4489
        %v4491 = vpop.f32.mrb[0].mxu0
        %4492 = vmatprep.mubr.bf16.mxu0 0
        %4493 = vmatmul.mubr.bf16.gmra.mrb[0].mxu0 %v3990
        %v4494 = vpop.f32.mrb[0].mxu0
        %v4495 = vadd.f32 %v4334, %v4494
        %v4496 = vpop.f32.mrb[0].mxu0
        %v4497 = vpop.f32.mrb[0].mxu0
        %v4498 = vadd.f32 %v4337, %v4497
        %v4499 = vpop.f32.mrb[0].mxu0
        %4500 = vmatprep.mubr.bf16.mxu0 0
        %4501 = vmatmul.mubr.bf16.gmra.mrb[0].mxu0 %v3993
        %v4502 = vpop.f32.mrb[0].mxu0
        %v4503 = vadd.f32 %v4342, %v4502
        %v4504 = vpop.f32.mrb[0].mxu0
        %v4505 = vpop.f32.mrb[0].mxu0
        %v4506 = vadd.f32 %v4345, %v4505
        %v4507 = vpop.f32.mrb[0].mxu0
        %4508 = vdwg.mxu0
        %v4557 = vunpack.c.l.b16 %v3897
        %v4558 = vunpack.c.l.b16 %v3898
        %v4559 = vunpack.c.l.b16 %v3899
        %v4560 = vunpack.c.l.b16 %v3900
        %v4561 = vunpack.c.l.b16 %v3901
        %v4562 = vunpack.c.l.b16 %v3902
        %v4563 = vunpack.c.l.b16 %v3903
        %v4564 = vunpack.c.l.b16 %v3904
        %v4565 = vunpack.c.l.b16 %v3905
        %v4566 = vunpack.c.l.b16 %v3906
        %v4567 = vunpack.c.l.b16 %v3907
        %v4568 = vunpack.c.l.b16 %v3908
        %v4569 = vunpack.c.l.b16 %v3909
        %v4570 = vunpack.c.l.b16 %v3910
        %v4571 = vunpack.c.l.b16 %v3911
        %v4572 = vunpack.c.l.b16 %v3912
        %v4573 = vunpack.c.l.b16 %v3913
        %v4574 = vunpack.c.l.b16 %v3914
        %v4575 = vunpack.c.l.b16 %v3915
        %v4576 = vunpack.c.l.b16 %v3916
        %v4577 = vunpack.c.l.b16 %v3917
        %v4578 = vunpack.c.l.b16 %v3918
        %v4579 = vunpack.c.l.b16 %v3919
        %v4580 = vunpack.c.l.b16 %v3920
        %v4581 = vunpack.c.l.b16 %v3921
        %v4582 = vunpack.c.l.b16 %v3922
        %v4583 = vunpack.c.l.b16 %v3923
        %v4584 = vunpack.c.l.b16 %v3924
        %v4585 = vunpack.c.l.b16 %v3925
        %v4586 = vunpack.c.l.b16 %v3926
        %v4587 = vunpack.c.l.b16 %v3927
        %v4588 = vunpack.c.l.b16 %v3928
        %v4589 = vunpack.c.l.b16 %v3929
        %v4590 = vunpack.c.l.b16 %v3930
        %v4591 = vunpack.c.l.b16 %v3931
        %v4592 = vunpack.c.l.b16 %v3932
        %v4593 = vunpack.c.l.b16 %v3933
        %v4594 = vunpack.c.l.b16 %v3934
        %v4595 = vunpack.c.l.b16 %v3935
        %v4596 = vunpack.c.l.b16 %v3936
        %v4597 = vunpack.c.l.b16 %v3937
        %v4598 = vunpack.c.l.b16 %v3938
        %v4599 = vunpack.c.l.b16 %v3939
        %v4600 = vunpack.c.l.b16 %v3940
        %v4601 = vunpack.c.l.b16 %v3941
        %v4602 = vunpack.c.l.b16 %v3942
        %v4603 = vunpack.c.l.b16 %v3943
        %v4604 = vunpack.c.l.b16 %v3944
        %v4605 = vpack.c.b16 %v4558, %v4557
        %v4606 = vpack.c.b16 %v4560, %v4559
        %v4607 = vpack.c.b16 %v4562, %v4561
        %v4608 = vpack.c.b16 %v4564, %v4563
        %v4609 = vpack.c.b16 %v4566, %v4565
        %v4610 = vpack.c.b16 %v4568, %v4567
        %v4611 = vpack.c.b16 %v4570, %v4569
        %v4612 = vpack.c.b16 %v4572, %v4571
        %v4613 = vpack.c.b16 %v4574, %v4573
        %v4614 = vpack.c.b16 %v4576, %v4575
        %v4615 = vpack.c.b16 %v4578, %v4577
        %v4616 = vpack.c.b16 %v4580, %v4579
        %v4617 = vpack.c.b16 %v4582, %v4581
        %v4618 = vpack.c.b16 %v4584, %v4583
        %v4619 = vpack.c.b16 %v4586, %v4585
        %v4620 = vpack.c.b16 %v4588, %v4587
        %v4621 = vpack.c.b16 %v4590, %v4589
        %v4622 = vpack.c.b16 %v4592, %v4591
        %v4623 = vpack.c.b16 %v4594, %v4593
        %v4624 = vpack.c.b16 %v4596, %v4595
        %v4625 = vpack.c.b16 %v4598, %v4597
        %v4626 = vpack.c.b16 %v4600, %v4599
        %v4627 = vpack.c.b16 %v4602, %v4601
        %v4628 = vpack.c.b16 %v4604, %v4603
        %4653 = vmatprep.subr.bf16.mxu0 0
        %4654 = vmatpush1.bf16.msra.mxu0 %v4605
        %4655 = vmatprep.subr.bf16.mxu0 0
        %4656 = vmatpush1.bf16.msra.mxu0 %v4606
        %4657 = vmatprep.subr.bf16.mxu0 0
        %4658 = vmatpush1.bf16.msra.mxu0 %v4607
        %4659 = vmatprep.subr.bf16.mxu0 0
        %4660 = vmatpush1.bf16.msra.mxu0 %v4608
        %4661 = vmatprep.subr.bf16.mxu0 0
        %4662 = vmatpush1.bf16.msra.mxu0 %v4609
        %4663 = vmatprep.subr.bf16.mxu0 0
        %4664 = vmatpush1.bf16.msra.mxu0 %v4610
        %4665 = vmatprep.subr.bf16.mxu0 0
        %4666 = vmatpush1.bf16.msra.mxu0 %v4611
        %4667 = vmatprep.subr.bf16.mxu0 0
        %4668 = vmatpush1.bf16.msra.mxu0 %v4612
        %4669 = vmatprep.subr.bf16.mxu0 0
        %4670 = vmatpush1.bf16.msra.mxu0 %v4613
        %4671 = vmatprep.subr.bf16.mxu0 0
        %4672 = vmatpush1.bf16.msra.mxu0 %v4614
        %4673 = vmatprep.subr.bf16.mxu0 0
        %4674 = vmatpush1.bf16.msra.mxu0 %v4615
        %4675 = vmatprep.subr.bf16.mxu0 0
        %4676 = vmatpush1.bf16.msra.mxu0 %v4616
        %4677 = vmatprep.subr.bf16.mxu0 0
        %4678 = vmatpush1.bf16.msra.mxu0 %v4617
        %4679 = vmatprep.subr.bf16.mxu0 0
        %4680 = vmatpush1.bf16.msra.mxu0 %v4618
        %4681 = vmatprep.subr.bf16.mxu0 0
        %4682 = vmatpush1.bf16.msra.mxu0 %v4619
        %4683 = vmatprep.subr.bf16.mxu0 0
        %4684 = vmatpush1.bf16.msra.mxu0 %v4620
        %4685 = vmatprep.mubr.bf16.mxu0 %v3850
        %4686 = vmatmul.mubr.bf16.gmra.mrb[0].mxu0 %v3849
        %v4687 = vpop.f32.mrb[0].mxu0
        %v4688 = vadd.f32 %v4383, %v4687
        %v4689 = vpop.f32.mrb[0].mxu0
        %v4690 = vpop.f32.mrb[0].mxu0
        %v4691 = vadd.f32 %v4386, %v4690
        %v4692 = vpop.f32.mrb[0].mxu0
        %4693 = vmatprep.mubr.bf16.mxu0 %v3853
        %4694 = vmatmul.mubr.bf16.gmra.mrb[0].mxu0 %v3852
        %v4695 = vpop.f32.mrb[0].mxu0
        %v4696 = vadd.f32 %v4391, %v4695
        %v4697 = vpop.f32.mrb[0].mxu0
        %v4698 = vpop.f32.mrb[0].mxu0
        %v4699 = vadd.f32 %v4394, %v4698
        %v4700 = vpop.f32.mrb[0].mxu0
        %4701 = vmatprep.mubr.bf16.mxu0 %v3856
        %4702 = vmatmul.mubr.bf16.gmra.mrb[0].mxu0 %v3855
        %v4703 = vpop.f32.mrb[0].mxu0
        %v4704 = vadd.f32 %v4399, %v4703
        %v4705 = vpop.f32.mrb[0].mxu0
        %v4706 = vpop.f32.mrb[0].mxu0
        %v4707 = vadd.f32 %v4402, %v4706
        %v4708 = vpop.f32.mrb[0].mxu0
        %4709 = vmatprep.mubr.bf16.mxu0 %v3859
        %4710 = vmatmul.mubr.bf16.gmra.mrb[0].mxu0 %v3858
        %v4711 = vpop.f32.mrb[0].mxu0
        %v4712 = vadd.f32 %v4407, %v4711
        %v4713 = vpop.f32.mrb[0].mxu0
        %v4714 = vpop.f32.mrb[0].mxu0
        %v4715 = vadd.f32 %v4410, %v4714
        %v4716 = vpop.f32.mrb[0].mxu0
        %4717 = vmatprep.mubr.bf16.mxu0 %v3862
        %4718 = vmatmul.mubr.bf16.gmra.mrb[0].mxu0 %v3861
        %v4719 = vpop.f32.mrb[0].mxu0
        %v4720 = vadd.f32 %v4415, %v4719
        %v4721 = vpop.f32.mrb[0].mxu0
        %v4722 = vpop.f32.mrb[0].mxu0
        %v4723 = vadd.f32 %v4418, %v4722
        %v4724 = vpop.f32.mrb[0].mxu0
        %4725 = vmatprep.mubr.bf16.mxu0 %v3865
        %4726 = vmatmul.mubr.bf16.gmra.mrb[0].mxu0 %v3864
        %v4727 = vpop.f32.mrb[0].mxu0
        %v4728 = vadd.f32 %v4423, %v4727
        %v4729 = vpop.f32.mrb[0].mxu0
        %v4730 = vpop.f32.mrb[0].mxu0
        %v4731 = vadd.f32 %v4426, %v4730
        %v4732 = vpop.f32.mrb[0].mxu0
        %4733 = vmatprep.mubr.bf16.mxu0 %v3868
        %4734 = vmatmul.mubr.bf16.gmra.mrb[0].mxu0 %v3867
        %v4735 = vpop.f32.mrb[0].mxu0
        %v4736 = vadd.f32 %v4431, %v4735
        %v4737 = vpop.f32.mrb[0].mxu0
        %v4738 = vpop.f32.mrb[0].mxu0
        %v4739 = vadd.f32 %v4434, %v4738
        %v4740 = vpop.f32.mrb[0].mxu0
        %4741 = vmatprep.mubr.bf16.mxu0 %v3871
        %4742 = vmatmul.mubr.bf16.gmra.mrb[0].mxu0 %v3870
        %v4743 = vpop.f32.mrb[0].mxu0
        %v4744 = vadd.f32 %v4439, %v4743
        %v4745 = vpop.f32.mrb[0].mxu0
        %v4746 = vpop.f32.mrb[0].mxu0
        %v4747 = vadd.f32 %v4442, %v4746
        %v4748 = vpop.f32.mrb[0].mxu0
        %4749 = vmatprep.mubr.bf16.mxu0 %v3874
        %4750 = vmatmul.mubr.bf16.gmra.mrb[0].mxu0 %v3873
        %v4751 = vpop.f32.mrb[0].mxu0
        %v4752 = vadd.f32 %v4447, %v4751
        %v4753 = vpop.f32.mrb[0].mxu0
        %v4754 = vpop.f32.mrb[0].mxu0
        %v4755 = vadd.f32 %v4450, %v4754
        %v4756 = vpop.f32.mrb[0].mxu0
        %4757 = vmatprep.mubr.bf16.mxu0 %v3877
        %4758 = vmatmul.mubr.bf16.gmra.mrb[0].mxu0 %v3876
        %v4759 = vpop.f32.mrb[0].mxu0
        %v4760 = vadd.f32 %v4455, %v4759
        %v4761 = vpop.f32.mrb[0].mxu0
        %v4762 = vpop.f32.mrb[0].mxu0
        %v4763 = vadd.f32 %v4458, %v4762
        %v4764 = vpop.f32.mrb[0].mxu0
        %4765 = vmatprep.mubr.bf16.mxu0 %v3880
        %4766 = vmatmul.mubr.bf16.gmra.mrb[0].mxu0 %v3879
        %v4767 = vpop.f32.mrb[0].mxu0
        %v4768 = vadd.f32 %v4463, %v4767
        %v4769 = vpop.f32.mrb[0].mxu0
        %v4770 = vpop.f32.mrb[0].mxu0
        %v4771 = vadd.f32 %v4466, %v4770
        %v4772 = vpop.f32.mrb[0].mxu0
        %4773 = vmatprep.mubr.bf16.mxu0 %v3883
        %4774 = vmatmul.mubr.bf16.gmra.mrb[0].mxu0 %v3882
        %v4775 = vpop.f32.mrb[0].mxu0
        %v4776 = vadd.f32 %v4471, %v4775
        %v4777 = vpop.f32.mrb[0].mxu0
        %v4778 = vpop.f32.mrb[0].mxu0
        %v4779 = vadd.f32 %v4474, %v4778
        %v4780 = vpop.f32.mrb[0].mxu0
        %4781 = vmatprep.mubr.bf16.mxu0 %v3886
        %4782 = vmatmul.mubr.bf16.gmra.mrb[0].mxu0 %v3885
        %v4783 = vpop.f32.mrb[0].mxu0
        %v4784 = vadd.f32 %v4479, %v4783
        %v4785 = vpop.f32.mrb[0].mxu0
        %v4786 = vpop.f32.mrb[0].mxu0
        %v4787 = vadd.f32 %v4482, %v4786
        %v4788 = vpop.f32.mrb[0].mxu0
        %4789 = vmatprep.mubr.bf16.mxu0 %v3889
        %4790 = vmatmul.mubr.bf16.gmra.mrb[0].mxu0 %v3888
        %v4791 = vpop.f32.mrb[0].mxu0
        %v4792 = vadd.f32 %v4487, %v4791
        %v4793 = vpop.f32.mrb[0].mxu0
        %v4794 = vpop.f32.mrb[0].mxu0
        %v4795 = vadd.f32 %v4490, %v4794
        %v4796 = vpop.f32.mrb[0].mxu0
        %4797 = vmatprep.mubr.bf16.mxu0 %v3892
        %4798 = vmatmul.mubr.bf16.gmra.mrb[0].mxu0 %v3891
        %v4799 = vpop.f32.mrb[0].mxu0
        %v4800 = vadd.f32 %v4495, %v4799
        %v4801 = vpop.f32.mrb[0].mxu0
        %v4802 = vpop.f32.mrb[0].mxu0
        %v4803 = vadd.f32 %v4498, %v4802
        %v4804 = vpop.f32.mrb[0].mxu0
        %4805 = vmatprep.mubr.bf16.mxu0 %v3895
        %4806 = vmatmul.mubr.bf16.gmra.mrb[0].mxu0 %v3894
        %v4807 = vpop.f32.mrb[0].mxu0
        %v4808 = vadd.f32 %v4503, %v4807
        %v4809 = vpop.f32.mrb[0].mxu0
        %v4810 = vpop.f32.mrb[0].mxu0
        %v4811 = vadd.f32 %v4506, %v4810
        %v4812 = vpop.f32.mrb[0].mxu0
        %4813 = vdwg.mxu0
        %4814 = vmatprep.subr.bf16.mxu0 0
        %4815 = vmatpush1.bf16.msra.mxu0 %v4621
        %4816 = vmatprep.subr.bf16.mxu0 0
        %4817 = vmatpush1.bf16.msra.mxu0 %v4622
        %4818 = vmatprep.subr.bf16.mxu0 0
        %4819 = vmatpush1.bf16.msra.mxu0 %v4623
        %4820 = vmatprep.subr.bf16.mxu0 0
        %4821 = vmatpush1.bf16.msra.mxu0 %v4624
        %4822 = vmatprep.subr.bf16.mxu0 0
        %4823 = vmatpush1.bf16.msra.mxu0 %v4625
        %4824 = vmatprep.subr.bf16.mxu0 0
        %4825 = vmatpush1.bf16.msra.mxu0 %v4626
        %4826 = vmatprep.subr.bf16.mxu0 0
        %4827 = vmatpush1.bf16.msra.mxu0 %v4627
        %4828 = vmatprep.subr.bf16.mxu0 0
        %4829 = vmatpush1.bf16.msra.mxu0 %v4628
        %4830 = vmatprep.subr.bf16.mxu0 0
        %4831 = vmatpush1.bf16.msra.mxu0 0
        %4832 = vmatprep.subr.bf16.mxu0 0
        %4833 = vmatpush1.bf16.msra.mxu0 0
        %4834 = vmatprep.subr.bf16.mxu0 0
        %4835 = vmatpush1.bf16.msra.mxu0 0
        %4836 = vmatprep.subr.bf16.mxu0 0
        %4837 = vmatpush1.bf16.msra.mxu0 0
        %4838 = vmatprep.subr.bf16.mxu0 0
        %4839 = vmatpush1.bf16.msra.mxu0 0
        %4840 = vmatprep.subr.bf16.mxu0 0
        %4841 = vmatpush1.bf16.msra.mxu0 0
        %4842 = vmatprep.subr.bf16.mxu0 0
        %4843 = vmatpush1.bf16.msra.mxu0 0
        %4844 = vmatprep.subr.bf16.mxu0 0
        %4845 = vmatpush1.bf16.msra.mxu0 0
        %4846 = vmatprep.mubr.bf16.mxu0 0
        %4847 = vmatmul.mubr.bf16.gmra.mrb[0].mxu0 %v3851
        %v4848 = vpop.f32.mrb[0].mxu0
        %v4849 = vadd.f32 %v4688, %v4848
        %v4850 = vpop.f32.mrb[0].mxu0
        %v4851 = vpop.f32.mrb[0].mxu0
        %v4852 = vadd.f32 %v4691, %v4851
        %v4853 = vpop.f32.mrb[0].mxu0
        %4854 = vmatprep.mubr.bf16.mxu0 0
        %4855 = vmatmul.mubr.bf16.gmra.mrb[0].mxu0 %v3854
        %v4856 = vpop.f32.mrb[0].mxu0
        %v4857 = vadd.f32 %v4696, %v4856
        %v4858 = vpop.f32.mrb[0].mxu0
        %v4859 = vpop.f32.mrb[0].mxu0
        %v4860 = vadd.f32 %v4699, %v4859
        %v4861 = vpop.f32.mrb[0].mxu0
        %4862 = vmatprep.mubr.bf16.mxu0 0
        %4863 = vmatmul.mubr.bf16.gmra.mrb[0].mxu0 %v3857
        %v4864 = vpop.f32.mrb[0].mxu0
        %v4865 = vadd.f32 %v4704, %v4864
        %v4866 = vpop.f32.mrb[0].mxu0
        %v4867 = vpop.f32.mrb[0].mxu0
        %v4868 = vadd.f32 %v4707, %v4867
        %v4869 = vpop.f32.mrb[0].mxu0
        %4870 = vmatprep.mubr.bf16.mxu0 0
        %4871 = vmatmul.mubr.bf16.gmra.mrb[0].mxu0 %v3860
        %v4872 = vpop.f32.mrb[0].mxu0
        %v4873 = vadd.f32 %v4712, %v4872
        %v4874 = vpop.f32.mrb[0].mxu0
        %v4875 = vpop.f32.mrb[0].mxu0
        %v4876 = vadd.f32 %v4715, %v4875
        %v4877 = vpop.f32.mrb[0].mxu0
        %4878 = vmatprep.mubr.bf16.mxu0 0
        %4879 = vmatmul.mubr.bf16.gmra.mrb[0].mxu0 %v3863
        %v4880 = vpop.f32.mrb[0].mxu0
        %v4881 = vadd.f32 %v4720, %v4880
        %v4882 = vpop.f32.mrb[0].mxu0
        %v4883 = vpop.f32.mrb[0].mxu0
        %v4884 = vadd.f32 %v4723, %v4883
        %v4885 = vpop.f32.mrb[0].mxu0
        %4886 = vmatprep.mubr.bf16.mxu0 0
        %4887 = vmatmul.mubr.bf16.gmra.mrb[0].mxu0 %v3866
        %v4888 = vpop.f32.mrb[0].mxu0
        %v4889 = vadd.f32 %v4728, %v4888
        %v4890 = vpop.f32.mrb[0].mxu0
        %v4891 = vpop.f32.mrb[0].mxu0
        %v4892 = vadd.f32 %v4731, %v4891
        %v4893 = vpop.f32.mrb[0].mxu0
        %4894 = vmatprep.mubr.bf16.mxu0 0
        %4895 = vmatmul.mubr.bf16.gmra.mrb[0].mxu0 %v3869
        %v4896 = vpop.f32.mrb[0].mxu0
        %v4897 = vadd.f32 %v4736, %v4896
        %v4898 = vpop.f32.mrb[0].mxu0
        %v4899 = vpop.f32.mrb[0].mxu0
        %v4900 = vadd.f32 %v4739, %v4899
        %v4901 = vpop.f32.mrb[0].mxu0
        %4902 = vmatprep.mubr.bf16.mxu0 0
        %4903 = vmatmul.mubr.bf16.gmra.mrb[0].mxu0 %v3872
        %v4904 = vpop.f32.mrb[0].mxu0
        %v4905 = vadd.f32 %v4744, %v4904
        %v4906 = vpop.f32.mrb[0].mxu0
        %v4907 = vpop.f32.mrb[0].mxu0
        %v4908 = vadd.f32 %v4747, %v4907
        %v4909 = vpop.f32.mrb[0].mxu0
        %4910 = vmatprep.mubr.bf16.mxu0 0
        %4911 = vmatmul.mubr.bf16.gmra.mrb[0].mxu0 %v3875
        %v4912 = vpop.f32.mrb[0].mxu0
        %v4913 = vadd.f32 %v4752, %v4912
        %v4914 = vpop.f32.mrb[0].mxu0
        %v4915 = vpop.f32.mrb[0].mxu0
        %v4916 = vadd.f32 %v4755, %v4915
        %v4917 = vpop.f32.mrb[0].mxu0
        %4918 = vmatprep.mubr.bf16.mxu0 0
        %4919 = vmatmul.mubr.bf16.gmra.mrb[0].mxu0 %v3878
        %v4920 = vpop.f32.mrb[0].mxu0
        %v4921 = vadd.f32 %v4760, %v4920
        %v4922 = vpop.f32.mrb[0].mxu0
        %v4923 = vpop.f32.mrb[0].mxu0
        %v4924 = vadd.f32 %v4763, %v4923
        %v4925 = vpop.f32.mrb[0].mxu0
        %4926 = vmatprep.mubr.bf16.mxu0 0
        %4927 = vmatmul.mubr.bf16.gmra.mrb[0].mxu0 %v3881
        %v4928 = vpop.f32.mrb[0].mxu0
        %v4929 = vadd.f32 %v4768, %v4928
        %v4930 = vpop.f32.mrb[0].mxu0
        %v4931 = vpop.f32.mrb[0].mxu0
        %v4932 = vadd.f32 %v4771, %v4931
        %v4933 = vpop.f32.mrb[0].mxu0
        %4934 = vmatprep.mubr.bf16.mxu0 0
        %4935 = vmatmul.mubr.bf16.gmra.mrb[0].mxu0 %v3884
        %v4936 = vpop.f32.mrb[0].mxu0
        %v4937 = vadd.f32 %v4776, %v4936
        %v4938 = vpop.f32.mrb[0].mxu0
        %v4939 = vpop.f32.mrb[0].mxu0
        %v4940 = vadd.f32 %v4779, %v4939
        %v4941 = vpop.f32.mrb[0].mxu0
        %4942 = vmatprep.mubr.bf16.mxu0 0
        %4943 = vmatmul.mubr.bf16.gmra.mrb[0].mxu0 %v3887
        %v4944 = vpop.f32.mrb[0].mxu0
        %v4945 = vadd.f32 %v4784, %v4944
        %v4946 = vpop.f32.mrb[0].mxu0
        %v4947 = vpop.f32.mrb[0].mxu0
        %v4948 = vadd.f32 %v4787, %v4947
        %v4949 = vpop.f32.mrb[0].mxu0
        %4950 = vmatprep.mubr.bf16.mxu0 0
        %4951 = vmatmul.mubr.bf16.gmra.mrb[0].mxu0 %v3890
        %v4952 = vpop.f32.mrb[0].mxu0
        %v4953 = vadd.f32 %v4792, %v4952
        %v4954 = vpop.f32.mrb[0].mxu0
        %v4955 = vpop.f32.mrb[0].mxu0
        %v4956 = vadd.f32 %v4795, %v4955
        %v4957 = vpop.f32.mrb[0].mxu0
        %4958 = vmatprep.mubr.bf16.mxu0 0
        %4959 = vmatmul.mubr.bf16.gmra.mrb[0].mxu0 %v3893
        %v4960 = vpop.f32.mrb[0].mxu0
        %v4961 = vadd.f32 %v4800, %v4960
        %v4962 = vpop.f32.mrb[0].mxu0
        %v4963 = vpop.f32.mrb[0].mxu0
        %v4964 = vadd.f32 %v4803, %v4963
        %v4965 = vpop.f32.mrb[0].mxu0
        %4966 = vmatprep.mubr.bf16.mxu0 0
        %4967 = vmatmul.mubr.bf16.gmra.mrb[0].mxu0 %v3896
        %v4968 = vpop.f32.mrb[0].mxu0
        %v4969 = vadd.f32 %v4808, %v4968
        %v4970 = vpop.f32.mrb[0].mxu0
        %v4971 = vpop.f32.mrb[0].mxu0
        %v4972 = vadd.f32 %v4811, %v4971
        %v4973 = vpop.f32.mrb[0].mxu0
        %4974 = vdwg.mxu0
        %s4975 = scalar_lea.vmem [#allocation3], 48
        %v4976 = vld [vmem:[%s4975] sm:$0xff]
        %v4977 = vld [vmem:[%s4975 + $0x8] sm:$0xff]
        %v4978 = vld [vmem:[%s4975 + $0x10] sm:$0xff]
        %v4979 = vld [vmem:[%s4975 + $0x18] sm:$0xff]
        %v4980 = vld [vmem:[%s4975 + $0x20] sm:$0xff]
        %v4981 = vld [vmem:[%s4975 + $0x28] sm:$0xff]
        %v4982 = vld [vmem:[%s4975 + $0x30] sm:$0xff]
        %v4983 = vld [vmem:[%s4975 + $0x38] sm:$0xff]
        %v4984 = vld [vmem:[%s4975 + $0x40] sm:$0xff]
        %v4985 = vld [vmem:[%s4975 + $0x48] sm:$0xff]
        %v4986 = vld [vmem:[%s4975 + $0x50] sm:$0xff]
        %v4987 = vld [vmem:[%s4975 + $0x58] sm:$0xff]
        %v4988 = vld [vmem:[%s4975 + $0x60] sm:$0xff]
        %v4989 = vld [vmem:[%s4975 + $0x68] sm:$0xff]
        %v4990 = vld [vmem:[%s4975 + $0x70] sm:$0xff]
        %v4991 = vld [vmem:[%s4975 + $0x78] sm:$0xff]
        %v4992 = vld [vmem:[%s4975 + $0x80] sm:$0xff]
        %v4993 = vld [vmem:[%s4975 + $0x88] sm:$0xff]
        %v4994 = vld [vmem:[%s4975 + $0x90] sm:$0xff]
        %v4995 = vld [vmem:[%s4975 + $0x98] sm:$0xff]
        %v4996 = vld [vmem:[%s4975 + $0xa0] sm:$0xff]
        %v4997 = vld [vmem:[%s4975 + $0xa8] sm:$0xff]
        %v4998 = vld [vmem:[%s4975 + $0xb0] sm:$0xff]
        %v4999 = vld [vmem:[%s4975 + $0xb8] sm:$0xff]
        %v5000 = vld [vmem:[%s4975 + $0xc0] sm:$0xff]
        %v5001 = vld [vmem:[%s4975 + $0xc8] sm:$0xff]
        %v5002 = vld [vmem:[%s4975 + $0xd0] sm:$0xff]
        %v5003 = vld [vmem:[%s4975 + $0xd8] sm:$0xff]
        %v5004 = vld [vmem:[%s4975 + $0xe0] sm:$0xff]
        %v5005 = vld [vmem:[%s4975 + $0xe8] sm:$0xff]
        %v5006 = vld [vmem:[%s4975 + $0xf0] sm:$0xff]
        %v5007 = vld [vmem:[%s4975 + $0xf8] sm:$0xff]
        %v5008 = vld [vmem:[%s4975 + $0x100] sm:$0xff]
        %v5009 = vld [vmem:[%s4975 + $0x108] sm:$0xff]
        %v5010 = vld [vmem:[%s4975 + $0x110] sm:$0xff]
        %v5011 = vld [vmem:[%s4975 + $0x118] sm:$0xff]
        %v5012 = vld [vmem:[%s4975 + $0x120] sm:$0xff]
        %v5013 = vld [vmem:[%s4975 + $0x128] sm:$0xff]
        %v5014 = vld [vmem:[%s4975 + $0x130] sm:$0xff]
        %v5015 = vld [vmem:[%s4975 + $0x138] sm:$0xff]
        %v5016 = vld [vmem:[%s4975 + $0x140] sm:$0xff]
        %v5017 = vld [vmem:[%s4975 + $0x148] sm:$0xff]
        %v5018 = vld [vmem:[%s4975 + $0x150] sm:$0xff]
        %v5019 = vld [vmem:[%s4975 + $0x158] sm:$0xff]
        %v5020 = vld [vmem:[%s4975 + $0x160] sm:$0xff]
        %v5021 = vld [vmem:[%s4975 + $0x168] sm:$0xff]
        %v5022 = vld [vmem:[%s4975 + $0x170] sm:$0xff]
        %v5023 = vld [vmem:[%s4975 + $0x178] sm:$0xff]
        %s5024 = scalar_lea.vmem [#allocation5], 384
        %v5025 = vld [vmem:[%s5024] sm:$0xf]
        %v5026 = vld [vmem:[%s5024 + $0x4] sm:$0xf]
        %v5027 = vld [vmem:[%s5024 + $0x8] sm:$0xf]
        %v5028 = vld [vmem:[%s5024 + $0xc] sm:$0xf]
        %v5029 = vld [vmem:[%s5024 + $0x10] sm:$0xf]
        %v5030 = vld [vmem:[%s5024 + $0x14] sm:$0xf]
        %v5031 = vld [vmem:[%s5024 + $0x18] sm:$0xf]
        %v5032 = vld [vmem:[%s5024 + $0x1c] sm:$0xf]
        %v5033 = vld [vmem:[%s5024 + $0x20] sm:$0xf]
        %v5034 = vld [vmem:[%s5024 + $0x24] sm:$0xf]
        %v5035 = vld [vmem:[%s5024 + $0x28] sm:$0xf]
        %v5036 = vld [vmem:[%s5024 + $0x2c] sm:$0xf]
        %v5037 = vld [vmem:[%s5024 + $0x30] sm:$0xf]
        %v5038 = vld [vmem:[%s5024 + $0x34] sm:$0xf]
        %v5039 = vld [vmem:[%s5024 + $0x38] sm:$0xf]
        %v5040 = vld [vmem:[%s5024 + $0x3c] sm:$0xf]
        %v5041 = vld [vmem:[%s5024 + $0x40] sm:$0xf]
        %v5042 = vld [vmem:[%s5024 + $0x44] sm:$0xf]
        %v5043 = vld [vmem:[%s5024 + $0x48] sm:$0xf]
        %v5044 = vld [vmem:[%s5024 + $0x4c] sm:$0xf]
        %v5045 = vld [vmem:[%s5024 + $0x50] sm:$0xf]
        %v5046 = vld [vmem:[%s5024 + $0x54] sm:$0xf]
        %v5047 = vld [vmem:[%s5024 + $0x58] sm:$0xf]
        %v5048 = vld [vmem:[%s5024 + $0x5c] sm:$0xf]
        %v5049 = vld [vmem:[%s5024 + $0x60] sm:$0xf]
        %v5050 = vld [vmem:[%s5024 + $0x64] sm:$0xf]
        %v5051 = vld [vmem:[%s5024 + $0x68] sm:$0xf]
        %v5052 = vld [vmem:[%s5024 + $0x6c] sm:$0xf]
        %v5053 = vld [vmem:[%s5024 + $0x70] sm:$0xf]
        %v5054 = vld [vmem:[%s5024 + $0x74] sm:$0xf]
        %v5055 = vld [vmem:[%s5024 + $0x78] sm:$0xf]
        %v5056 = vld [vmem:[%s5024 + $0x7c] sm:$0xf]
        %v5057 = vld [vmem:[%s5024 + $0x80] sm:$0xf]
        %v5058 = vld [vmem:[%s5024 + $0x84] sm:$0xf]
        %v5059 = vld [vmem:[%s5024 + $0x88] sm:$0xf]
        %v5060 = vld [vmem:[%s5024 + $0x8c] sm:$0xf]
        %v5061 = vld [vmem:[%s5024 + $0x90] sm:$0xf]
        %v5062 = vld [vmem:[%s5024 + $0x94] sm:$0xf]
        %v5063 = vld [vmem:[%s5024 + $0x98] sm:$0xf]
        %v5064 = vld [vmem:[%s5024 + $0x9c] sm:$0xf]
        %v5065 = vld [vmem:[%s5024 + $0xa0] sm:$0xf]
        %v5066 = vld [vmem:[%s5024 + $0xa4] sm:$0xf]
        %v5067 = vld [vmem:[%s5024 + $0xa8] sm:$0xf]
        %v5068 = vld [vmem:[%s5024 + $0xac] sm:$0xf]
        %v5069 = vld [vmem:[%s5024 + $0xb0] sm:$0xf]
        %v5070 = vld [vmem:[%s5024 + $0xb4] sm:$0xf]
        %v5071 = vld [vmem:[%s5024 + $0xb8] sm:$0xf]
        %v5072 = vld [vmem:[%s5024 + $0xbc] sm:$0xf]
        %v5121 = vunpack.c.l.b16 %v5025
        %v5122 = vunpack.c.l.b16 %v5026
        %v5123 = vunpack.c.l.b16 %v5027
        %v5124 = vunpack.c.l.b16 %v5028
        %v5125 = vunpack.c.l.b16 %v5029
        %v5126 = vunpack.c.l.b16 %v5030
        %v5127 = vunpack.c.l.b16 %v5031
        %v5128 = vunpack.c.l.b16 %v5032
        %v5129 = vunpack.c.l.b16 %v5033
        %v5130 = vunpack.c.l.b16 %v5034
        %v5131 = vunpack.c.l.b16 %v5035
        %v5132 = vunpack.c.l.b16 %v5036
        %v5133 = vunpack.c.l.b16 %v5037
        %v5134 = vunpack.c.l.b16 %v5038
        %v5135 = vunpack.c.l.b16 %v5039
        %v5136 = vunpack.c.l.b16 %v5040
        %v5137 = vunpack.c.l.b16 %v5041
        %v5138 = vunpack.c.l.b16 %v5042
        %v5139 = vunpack.c.l.b16 %v5043
        %v5140 = vunpack.c.l.b16 %v5044
        %v5141 = vunpack.c.l.b16 %v5045
        %v5142 = vunpack.c.l.b16 %v5046
        %v5143 = vunpack.c.l.b16 %v5047
        %v5144 = vunpack.c.l.b16 %v5048
        %v5145 = vunpack.c.l.b16 %v5049
        %v5146 = vunpack.c.l.b16 %v5050
        %v5147 = vunpack.c.l.b16 %v5051
        %v5148 = vunpack.c.l.b16 %v5052
        %v5149 = vunpack.c.l.b16 %v5053
        %v5150 = vunpack.c.l.b16 %v5054
        %v5151 = vunpack.c.l.b16 %v5055
        %v5152 = vunpack.c.l.b16 %v5056
        %v5153 = vunpack.c.l.b16 %v5057
        %v5154 = vunpack.c.l.b16 %v5058
        %v5155 = vunpack.c.l.b16 %v5059
        %v5156 = vunpack.c.l.b16 %v5060
        %v5157 = vunpack.c.l.b16 %v5061
        %v5158 = vunpack.c.l.b16 %v5062
        %v5159 = vunpack.c.l.b16 %v5063
        %v5160 = vunpack.c.l.b16 %v5064
        %v5161 = vunpack.c.l.b16 %v5065
        %v5162 = vunpack.c.l.b16 %v5066
        %v5163 = vunpack.c.l.b16 %v5067
        %v5164 = vunpack.c.l.b16 %v5068
        %v5165 = vunpack.c.l.b16 %v5069
        %v5166 = vunpack.c.l.b16 %v5070
        %v5167 = vunpack.c.l.b16 %v5071
        %v5168 = vunpack.c.l.b16 %v5072
        %v5169 = vpack.c.b16 %v5122, %v5121
        %v5170 = vpack.c.b16 %v5124, %v5123
        %v5171 = vpack.c.b16 %v5126, %v5125
        %v5172 = vpack.c.b16 %v5128, %v5127
        %v5173 = vpack.c.b16 %v5130, %v5129
        %v5174 = vpack.c.b16 %v5132, %v5131
        %v5175 = vpack.c.b16 %v5134, %v5133
        %v5176 = vpack.c.b16 %v5136, %v5135
        %v5177 = vpack.c.b16 %v5138, %v5137
        %v5178 = vpack.c.b16 %v5140, %v5139
        %v5179 = vpack.c.b16 %v5142, %v5141
        %v5180 = vpack.c.b16 %v5144, %v5143
        %v5181 = vpack.c.b16 %v5146, %v5145
        %v5182 = vpack.c.b16 %v5148, %v5147
        %v5183 = vpack.c.b16 %v5150, %v5149
        %v5184 = vpack.c.b16 %v5152, %v5151
        %v5185 = vpack.c.b16 %v5154, %v5153
        %v5186 = vpack.c.b16 %v5156, %v5155
        %v5187 = vpack.c.b16 %v5158, %v5157
        %v5188 = vpack.c.b16 %v5160, %v5159
        %v5189 = vpack.c.b16 %v5162, %v5161
        %v5190 = vpack.c.b16 %v5164, %v5163
        %v5191 = vpack.c.b16 %v5166, %v5165
        %v5192 = vpack.c.b16 %v5168, %v5167
        %5217 = vmatprep.subr.bf16.mxu0 0
        %5218 = vmatpush1.bf16.msra.mxu0 %v5169
        %5219 = vmatprep.subr.bf16.mxu0 0
        %5220 = vmatpush1.bf16.msra.mxu0 %v5170
        %5221 = vmatprep.subr.bf16.mxu0 0
        %5222 = vmatpush1.bf16.msra.mxu0 %v5171
        %5223 = vmatprep.subr.bf16.mxu0 0
        %5224 = vmatpush1.bf16.msra.mxu0 %v5172
        %5225 = vmatprep.subr.bf16.mxu0 0
        %5226 = vmatpush1.bf16.msra.mxu0 %v5173
        %5227 = vmatprep.subr.bf16.mxu0 0
        %5228 = vmatpush1.bf16.msra.mxu0 %v5174
        %5229 = vmatprep.subr.bf16.mxu0 0
        %5230 = vmatpush1.bf16.msra.mxu0 %v5175
        %5231 = vmatprep.subr.bf16.mxu0 0
        %5232 = vmatpush1.bf16.msra.mxu0 %v5176
        %5233 = vmatprep.subr.bf16.mxu0 0
        %5234 = vmatpush1.bf16.msra.mxu0 %v5177
        %5235 = vmatprep.subr.bf16.mxu0 0
        %5236 = vmatpush1.bf16.msra.mxu0 %v5178
        %5237 = vmatprep.subr.bf16.mxu0 0
        %5238 = vmatpush1.bf16.msra.mxu0 %v5179
        %5239 = vmatprep.subr.bf16.mxu0 0
        %5240 = vmatpush1.bf16.msra.mxu0 %v5180
        %5241 = vmatprep.subr.bf16.mxu0 0
        %5242 = vmatpush1.bf16.msra.mxu0 %v5181
        %5243 = vmatprep.subr.bf16.mxu0 0
        %5244 = vmatpush1.bf16.msra.mxu0 %v5182
        %5245 = vmatprep.subr.bf16.mxu0 0
        %5246 = vmatpush1.bf16.msra.mxu0 %v5183
        %5247 = vmatprep.subr.bf16.mxu0 0
        %5248 = vmatpush1.bf16.msra.mxu0 %v5184
        %5249 = vmatprep.mubr.bf16.mxu0 %v4977
        %5250 = vmatmul.mubr.bf16.gmra.mrb[0].mxu0 %v4976
        %v5251 = vpop.f32.mrb[0].mxu0
        %v5252 = vadd.f32 0.0, %v5251
        %v5253 = vpop.f32.mrb[0].mxu0
        %v5254 = vpop.f32.mrb[0].mxu0
        %v5255 = vadd.f32 0.0, %v5254
        %v5256 = vpop.f32.mrb[0].mxu0
        %5257 = vmatprep.mubr.bf16.mxu0 %v4980
        %5258 = vmatmul.mubr.bf16.gmra.mrb[0].mxu0 %v4979
        %v5259 = vpop.f32.mrb[0].mxu0
        %v5260 = vadd.f32 0.0, %v5259
        %v5261 = vpop.f32.mrb[0].mxu0
        %v5262 = vpop.f32.mrb[0].mxu0
        %v5263 = vadd.f32 0.0, %v5262
        %v5264 = vpop.f32.mrb[0].mxu0
        %5265 = vmatprep.mubr.bf16.mxu0 %v4983
        %5266 = vmatmul.mubr.bf16.gmra.mrb[0].mxu0 %v4982
        %v5267 = vpop.f32.mrb[0].mxu0
        %v5268 = vadd.f32 0.0, %v5267
        %v5269 = vpop.f32.mrb[0].mxu0
        %v5270 = vpop.f32.mrb[0].mxu0
        %v5271 = vadd.f32 0.0, %v5270
        %v5272 = vpop.f32.mrb[0].mxu0
        %5273 = vmatprep.mubr.bf16.mxu0 %v4986
        %5274 = vmatmul.mubr.bf16.gmra.mrb[0].mxu0 %v4985
        %v5275 = vpop.f32.mrb[0].mxu0
        %v5276 = vadd.f32 0.0, %v5275
        %v5277 = vpop.f32.mrb[0].mxu0
        %v5278 = vpop.f32.mrb[0].mxu0
        %v5279 = vadd.f32 0.0, %v5278
        %v5280 = vpop.f32.mrb[0].mxu0
        %5281 = vmatprep.mubr.bf16.mxu0 %v4989
        %5282 = vmatmul.mubr.bf16.gmra.mrb[0].mxu0 %v4988
        %v5283 = vpop.f32.mrb[0].mxu0
        %v5284 = vadd.f32 0.0, %v5283
        %v5285 = vpop.f32.mrb[0].mxu0
        %v5286 = vpop.f32.mrb[0].mxu0
        %v5287 = vadd.f32 0.0, %v5286
        %v5288 = vpop.f32.mrb[0].mxu0
        %5289 = vmatprep.mubr.bf16.mxu0 %v4992
        %5290 = vmatmul.mubr.bf16.gmra.mrb[0].mxu0 %v4991
        %v5291 = vpop.f32.mrb[0].mxu0
        %v5292 = vadd.f32 0.0, %v5291
        %v5293 = vpop.f32.mrb[0].mxu0
        %v5294 = vpop.f32.mrb[0].mxu0
        %v5295 = vadd.f32 0.0, %v5294
        %v5296 = vpop.f32.mrb[0].mxu0
        %5297 = vmatprep.mubr.bf16.mxu0 %v4995
        %5298 = vmatmul.mubr.bf16.gmra.mrb[0].mxu0 %v4994
        %v5299 = vpop.f32.mrb[0].mxu0
        %v5300 = vadd.f32 0.0, %v5299
        %v5301 = vpop.f32.mrb[0].mxu0
        %v5302 = vpop.f32.mrb[0].mxu0
        %v5303 = vadd.f32 0.0, %v5302
        %v5304 = vpop.f32.mrb[0].mxu0
        %5305 = vmatprep.mubr.bf16.mxu0 %v4998
        %5306 = vmatmul.mubr.bf16.gmra.mrb[0].mxu0 %v4997
        %v5307 = vpop.f32.mrb[0].mxu0
        %v5308 = vadd.f32 0.0, %v5307
        %v5309 = vpop.f32.mrb[0].mxu0
        %v5310 = vpop.f32.mrb[0].mxu0
        %v5311 = vadd.f32 0.0, %v5310
        %v5312 = vpop.f32.mrb[0].mxu0
        %5313 = vmatprep.mubr.bf16.mxu0 %v5001
        %5314 = vmatmul.mubr.bf16.gmra.mrb[0].mxu0 %v5000
        %v5315 = vpop.f32.mrb[0].mxu0
        %v5316 = vadd.f32 0.0, %v5315
        %v5317 = vpop.f32.mrb[0].mxu0
        %v5318 = vpop.f32.mrb[0].mxu0
        %v5319 = vadd.f32 0.0, %v5318
        %v5320 = vpop.f32.mrb[0].mxu0
        %5321 = vmatprep.mubr.bf16.mxu0 %v5004
        %5322 = vmatmul.mubr.bf16.gmra.mrb[0].mxu0 %v5003
        %v5323 = vpop.f32.mrb[0].mxu0
        %v5324 = vadd.f32 0.0, %v5323
        %v5325 = vpop.f32.mrb[0].mxu0
        %v5326 = vpop.f32.mrb[0].mxu0
        %v5327 = vadd.f32 0.0, %v5326
        %v5328 = vpop.f32.mrb[0].mxu0
        %5329 = vmatprep.mubr.bf16.mxu0 %v5007
        %5330 = vmatmul.mubr.bf16.gmra.mrb[0].mxu0 %v5006
        %v5331 = vpop.f32.mrb[0].mxu0
        %v5332 = vadd.f32 0.0, %v5331
        %v5333 = vpop.f32.mrb[0].mxu0
        %v5334 = vpop.f32.mrb[0].mxu0
        %v5335 = vadd.f32 0.0, %v5334
        %v5336 = vpop.f32.mrb[0].mxu0
        %5337 = vmatprep.mubr.bf16.mxu0 %v5010
        %5338 = vmatmul.mubr.bf16.gmra.mrb[0].mxu0 %v5009
        %v5339 = vpop.f32.mrb[0].mxu0
        %v5340 = vadd.f32 0.0, %v5339
        %v5341 = vpop.f32.mrb[0].mxu0
        %v5342 = vpop.f32.mrb[0].mxu0
        %v5343 = vadd.f32 0.0, %v5342
        %v5344 = vpop.f32.mrb[0].mxu0
        %5345 = vmatprep.mubr.bf16.mxu0 %v5013
        %5346 = vmatmul.mubr.bf16.gmra.mrb[0].mxu0 %v5012
        %v5347 = vpop.f32.mrb[0].mxu0
        %v5348 = vadd.f32 0.0, %v5347
        %v5349 = vpop.f32.mrb[0].mxu0
        %v5350 = vpop.f32.mrb[0].mxu0
        %v5351 = vadd.f32 0.0, %v5350
        %v5352 = vpop.f32.mrb[0].mxu0
        %5353 = vmatprep.mubr.bf16.mxu0 %v5016
        %5354 = vmatmul.mubr.bf16.gmra.mrb[0].mxu0 %v5015
        %v5355 = vpop.f32.mrb[0].mxu0
        %v5356 = vadd.f32 0.0, %v5355
        %v5357 = vpop.f32.mrb[0].mxu0
        %v5358 = vpop.f32.mrb[0].mxu0
        %v5359 = vadd.f32 0.0, %v5358
        %v5360 = vpop.f32.mrb[0].mxu0
        %5361 = vmatprep.mubr.bf16.mxu0 %v5019
        %5362 = vmatmul.mubr.bf16.gmra.mrb[0].mxu0 %v5018
        %v5363 = vpop.f32.mrb[0].mxu0
        %v5364 = vadd.f32 0.0, %v5363
        %v5365 = vpop.f32.mrb[0].mxu0
        %v5366 = vpop.f32.mrb[0].mxu0
        %v5367 = vadd.f32 0.0, %v5366
        %v5368 = vpop.f32.mrb[0].mxu0
        %5369 = vmatprep.mubr.bf16.mxu0 %v5022
        %5370 = vmatmul.mubr.bf16.gmra.mrb[0].mxu0 %v5021
        %v5371 = vpop.f32.mrb[0].mxu0
        %v5372 = vadd.f32 0.0, %v5371
        %v5373 = vpop.f32.mrb[0].mxu0
        %v5374 = vpop.f32.mrb[0].mxu0
        %v5375 = vadd.f32 0.0, %v5374
        %v5376 = vpop.f32.mrb[0].mxu0
        %5377 = vdwg.mxu0
        %5378 = vmatprep.subr.bf16.mxu0 0
        %5379 = vmatpush1.bf16.msra.mxu0 %v5185
        %5380 = vmatprep.subr.bf16.mxu0 0
        %5381 = vmatpush1.bf16.msra.mxu0 %v5186
        %5382 = vmatprep.subr.bf16.mxu0 0
        %5383 = vmatpush1.bf16.msra.mxu0 %v5187
        %5384 = vmatprep.subr.bf16.mxu0 0
        %5385 = vmatpush1.bf16.msra.mxu0 %v5188
        %5386 = vmatprep.subr.bf16.mxu0 0
        %5387 = vmatpush1.bf16.msra.mxu0 %v5189
        %5388 = vmatprep.subr.bf16.mxu0 0
        %5389 = vmatpush1.bf16.msra.mxu0 %v5190
        %5390 = vmatprep.subr.bf16.mxu0 0
        %5391 = vmatpush1.bf16.msra.mxu0 %v5191
        %5392 = vmatprep.subr.bf16.mxu0 0
        %5393 = vmatpush1.bf16.msra.mxu0 %v5192
        %5394 = vmatprep.subr.bf16.mxu0 0
        %5395 = vmatpush1.bf16.msra.mxu0 0
        %5396 = vmatprep.subr.bf16.mxu0 0
        %5397 = vmatpush1.bf16.msra.mxu0 0
        %5398 = vmatprep.subr.bf16.mxu0 0
        %5399 = vmatpush1.bf16.msra.mxu0 0
        %5400 = vmatprep.subr.bf16.mxu0 0
        %5401 = vmatpush1.bf16.msra.mxu0 0
        %5402 = vmatprep.subr.bf16.mxu0 0
        %5403 = vmatpush1.bf16.msra.mxu0 0
        %5404 = vmatprep.subr.bf16.mxu0 0
        %5405 = vmatpush1.bf16.msra.mxu0 0
        %5406 = vmatprep.subr.bf16.mxu0 0
        %5407 = vmatpush1.bf16.msra.mxu0 0
        %5408 = vmatprep.subr.bf16.mxu0 0
        %5409 = vmatpush1.bf16.msra.mxu0 0
        %5410 = vmatprep.mubr.bf16.mxu0 0
        %5411 = vmatmul.mubr.bf16.gmra.mrb[0].mxu0 %v4978
        %v5412 = vpop.f32.mrb[0].mxu0
        %v5413 = vadd.f32 %v5252, %v5412
        %v5414 = vpop.f32.mrb[0].mxu0
        %v5415 = vpop.f32.mrb[0].mxu0
        %v5416 = vadd.f32 %v5255, %v5415
        %v5417 = vpop.f32.mrb[0].mxu0
        %5418 = vmatprep.mubr.bf16.mxu0 0
        %5419 = vmatmul.mubr.bf16.gmra.mrb[0].mxu0 %v4981
        %v5420 = vpop.f32.mrb[0].mxu0
        %v5421 = vadd.f32 %v5260, %v5420
        %v5422 = vpop.f32.mrb[0].mxu0
        %v5423 = vpop.f32.mrb[0].mxu0
        %v5424 = vadd.f32 %v5263, %v5423
        %v5425 = vpop.f32.mrb[0].mxu0
        %5426 = vmatprep.mubr.bf16.mxu0 0
        %5427 = vmatmul.mubr.bf16.gmra.mrb[0].mxu0 %v4984
        %v5428 = vpop.f32.mrb[0].mxu0
        %v5429 = vadd.f32 %v5268, %v5428
        %v5430 = vpop.f32.mrb[0].mxu0
        %v5431 = vpop.f32.mrb[0].mxu0
        %v5432 = vadd.f32 %v5271, %v5431
        %v5433 = vpop.f32.mrb[0].mxu0
        %5434 = vmatprep.mubr.bf16.mxu0 0
        %5435 = vmatmul.mubr.bf16.gmra.mrb[0].mxu0 %v4987
        %v5436 = vpop.f32.mrb[0].mxu0
        %v5437 = vadd.f32 %v5276, %v5436
        %v5438 = vpop.f32.mrb[0].mxu0
        %v5439 = vpop.f32.mrb[0].mxu0
        %v5440 = vadd.f32 %v5279, %v5439
        %v5441 = vpop.f32.mrb[0].mxu0
        %5442 = vmatprep.mubr.bf16.mxu0 0
        %5443 = vmatmul.mubr.bf16.gmra.mrb[0].mxu0 %v4990
        %v5444 = vpop.f32.mrb[0].mxu0
        %v5445 = vadd.f32 %v5284, %v5444
        %v5446 = vpop.f32.mrb[0].mxu0
        %v5447 = vpop.f32.mrb[0].mxu0
        %v5448 = vadd.f32 %v5287, %v5447
        %v5449 = vpop.f32.mrb[0].mxu0
        %5450 = vmatprep.mubr.bf16.mxu0 0
        %5451 = vmatmul.mubr.bf16.gmra.mrb[0].mxu0 %v4993
        %v5452 = vpop.f32.mrb[0].mxu0
        %v5453 = vadd.f32 %v5292, %v5452
        %v5454 = vpop.f32.mrb[0].mxu0
        %v5455 = vpop.f32.mrb[0].mxu0
        %v5456 = vadd.f32 %v5295, %v5455
        %v5457 = vpop.f32.mrb[0].mxu0
        %5458 = vmatprep.mubr.bf16.mxu0 0
        %5459 = vmatmul.mubr.bf16.gmra.mrb[0].mxu0 %v4996
        %v5460 = vpop.f32.mrb[0].mxu0
        %v5461 = vadd.f32 %v5300, %v5460
        %v5462 = vpop.f32.mrb[0].mxu0
        %v5463 = vpop.f32.mrb[0].mxu0
        %v5464 = vadd.f32 %v5303, %v5463
        %v5465 = vpop.f32.mrb[0].mxu0
        %5466 = vmatprep.mubr.bf16.mxu0 0
        %5467 = vmatmul.mubr.bf16.gmra.mrb[0].mxu0 %v4999
        %v5468 = vpop.f32.mrb[0].mxu0
        %v5469 = vadd.f32 %v5308, %v5468
        %v5470 = vpop.f32.mrb[0].mxu0
        %v5471 = vpop.f32.mrb[0].mxu0
        %v5472 = vadd.f32 %v5311, %v5471
        %v5473 = vpop.f32.mrb[0].mxu0
        %5474 = vmatprep.mubr.bf16.mxu0 0
        %5475 = vmatmul.mubr.bf16.gmra.mrb[0].mxu0 %v5002
        %v5476 = vpop.f32.mrb[0].mxu0
        %v5477 = vadd.f32 %v5316, %v5476
        %v5478 = vpop.f32.mrb[0].mxu0
        %v5479 = vpop.f32.mrb[0].mxu0
        %v5480 = vadd.f32 %v5319, %v5479
        %v5481 = vpop.f32.mrb[0].mxu0
        %5482 = vmatprep.mubr.bf16.mxu0 0
        %5483 = vmatmul.mubr.bf16.gmra.mrb[0].mxu0 %v5005
        %v5484 = vpop.f32.mrb[0].mxu0
        %v5485 = vadd.f32 %v5324, %v5484
        %v5486 = vpop.f32.mrb[0].mxu0
        %v5487 = vpop.f32.mrb[0].mxu0
        %v5488 = vadd.f32 %v5327, %v5487
        %v5489 = vpop.f32.mrb[0].mxu0
        %5490 = vmatprep.mubr.bf16.mxu0 0
        %5491 = vmatmul.mubr.bf16.gmra.mrb[0].mxu0 %v5008
        %v5492 = vpop.f32.mrb[0].mxu0
        %v5493 = vadd.f32 %v5332, %v5492
        %v5494 = vpop.f32.mrb[0].mxu0
        %v5495 = vpop.f32.mrb[0].mxu0
        %v5496 = vadd.f32 %v5335, %v5495
        %v5497 = vpop.f32.mrb[0].mxu0
        %5498 = vmatprep.mubr.bf16.mxu0 0
        %5499 = vmatmul.mubr.bf16.gmra.mrb[0].mxu0 %v5011
        %v5500 = vpop.f32.mrb[0].mxu0
        %v5501 = vadd.f32 %v5340, %v5500
        %v5502 = vpop.f32.mrb[0].mxu0
        %v5503 = vpop.f32.mrb[0].mxu0
        %v5504 = vadd.f32 %v5343, %v5503
        %v5505 = vpop.f32.mrb[0].mxu0
        %5506 = vmatprep.mubr.bf16.mxu0 0
        %5507 = vmatmul.mubr.bf16.gmra.mrb[0].mxu0 %v5014
        %v5508 = vpop.f32.mrb[0].mxu0
        %v5509 = vadd.f32 %v5348, %v5508
        %v5510 = vpop.f32.mrb[0].mxu0
        %v5511 = vpop.f32.mrb[0].mxu0
        %v5512 = vadd.f32 %v5351, %v5511
        %v5513 = vpop.f32.mrb[0].mxu0
        %5514 = vmatprep.mubr.bf16.mxu0 0
        %5515 = vmatmul.mubr.bf16.gmra.mrb[0].mxu0 %v5017
        %v5516 = vpop.f32.mrb[0].mxu0
        %v5517 = vadd.f32 %v5356, %v5516
        %v5518 = vpop.f32.mrb[0].mxu0
        %v5519 = vpop.f32.mrb[0].mxu0
        %v5520 = vadd.f32 %v5359, %v5519
        %v5521 = vpop.f32.mrb[0].mxu0
        %5522 = vmatprep.mubr.bf16.mxu0 0
        %5523 = vmatmul.mubr.bf16.gmra.mrb[0].mxu0 %v5020
        %v5524 = vpop.f32.mrb[0].mxu0
        %v5525 = vadd.f32 %v5364, %v5524
        %v5526 = vpop.f32.mrb[0].mxu0
        %v5527 = vpop.f32.mrb[0].mxu0
        %v5528 = vadd.f32 %v5367, %v5527
        %v5529 = vpop.f32.mrb[0].mxu0
        %5530 = vmatprep.mubr.bf16.mxu0 0
        %5531 = vmatmul.mubr.bf16.gmra.mrb[0].mxu0 %v5023
        %v5532 = vpop.f32.mrb[0].mxu0
        %v5533 = vadd.f32 %v5372, %v5532
        %v5534 = vpop.f32.mrb[0].mxu0
        %v5535 = vpop.f32.mrb[0].mxu0
        %v5536 = vadd.f32 %v5375, %v5535
        %v5537 = vpop.f32.mrb[0].mxu0
        %5538 = vdwg.mxu0
        %v5539 = vadd.f32 %v4849, %v5413
        %v5540 = vadd.f32 %v4852, %v5416
        %v5541 = vadd.f32 %v4857, %v5421
        %v5542 = vadd.f32 %v4860, %v5424
        %v5543 = vadd.f32 %v4865, %v5429
        %v5544 = vadd.f32 %v4868, %v5432
        %v5545 = vadd.f32 %v4873, %v5437
        %v5546 = vadd.f32 %v4876, %v5440
        %v5547 = vadd.f32 %v4881, %v5445
        %v5548 = vadd.f32 %v4884, %v5448
        %v5549 = vadd.f32 %v4889, %v5453
        %v5550 = vadd.f32 %v4892, %v5456
        %v5551 = vadd.f32 %v4897, %v5461
        %v5552 = vadd.f32 %v4900, %v5464
        %v5553 = vadd.f32 %v4905, %v5469
        %v5554 = vadd.f32 %v4908, %v5472
        %v5555 = vadd.f32 %v4913, %v5477
        %v5556 = vadd.f32 %v4916, %v5480
        %v5557 = vadd.f32 %v4921, %v5485
        %v5558 = vadd.f32 %v4924, %v5488
        %v5559 = vadd.f32 %v4929, %v5493
        %v5560 = vadd.f32 %v4932, %v5496
        %v5561 = vadd.f32 %v4937, %v5501
        %v5562 = vadd.f32 %v4940, %v5504
        %v5563 = vadd.f32 %v4945, %v5509
        %v5564 = vadd.f32 %v4948, %v5512
        %v5565 = vadd.f32 %v4953, %v5517
        %v5566 = vadd.f32 %v4956, %v5520
        %v5567 = vadd.f32 %v4961, %v5525
        %v5568 = vadd.f32 %v4964, %v5528
        %v5569 = vadd.f32 %v4969, %v5533
        %v5570 = vadd.f32 %v4972, %v5536
        %v5571 = vld [vmem:[%s6] sm:$0x1]
        %v5573 = vlaneseq
        %v5574 = vshrl.u32 %v5573, 7
        %v5575 = vsub.s32 0, %v5574
        %v5576 = vrot.slane %v5571, %v5575
        %v5578 = vmul.f32 %v5539, %v5576
        %v5579 = vmul.f32 %v5540, %v5576
        %v5580 = vmul.f32 %v5541, %v5576
        %v5581 = vmul.f32 %v5542, %v5576
        %v5582 = vmul.f32 %v5543, %v5576
        %v5583 = vmul.f32 %v5544, %v5576
        %v5584 = vmul.f32 %v5545, %v5576
        %v5585 = vmul.f32 %v5546, %v5576
        %v5586 = vmul.f32 %v5547, %v5576
        %v5587 = vmul.f32 %v5548, %v5576
        %v5588 = vmul.f32 %v5549, %v5576
        %v5589 = vmul.f32 %v5550, %v5576
        %v5590 = vmul.f32 %v5551, %v5576
        %v5591 = vmul.f32 %v5552, %v5576
        %v5592 = vmul.f32 %v5553, %v5576
        %v5593 = vmul.f32 %v5554, %v5576
        %v5594 = vmul.f32 %v5555, %v5576
        %v5595 = vmul.f32 %v5556, %v5576
        %v5596 = vmul.f32 %v5557, %v5576
        %v5597 = vmul.f32 %v5558, %v5576
        %v5598 = vmul.f32 %v5559, %v5576
        %v5599 = vmul.f32 %v5560, %v5576
        %v5600 = vmul.f32 %v5561, %v5576
        %v5601 = vmul.f32 %v5562, %v5576
        %v5602 = vmul.f32 %v5563, %v5576
        %v5603 = vmul.f32 %v5564, %v5576
        %v5604 = vmul.f32 %v5565, %v5576
        %v5605 = vmul.f32 %v5566, %v5576
        %v5606 = vmul.f32 %v5567, %v5576
        %v5607 = vmul.f32 %v5568, %v5576
        %v5608 = vmul.f32 %v5569, %v5576
        %v5609 = vmul.f32 %v5570, %v5576
        %v5610 = vld [vmem:[%s7] sm:$0x1]
        %v5612 = vlaneseq
        %v5613 = vshrl.u32 %v5612, 7
        %v5614 = vsub.s32 0, %v5613
        %v5615 = vrot.slane %v5610, %v5614
        %v5617 = vadd.f32 %v5578, %v5615
        %v5618 = vadd.f32 %v5579, %v5615
        %v5619 = vadd.f32 %v5580, %v5615
        %v5620 = vadd.f32 %v5581, %v5615
        %v5621 = vadd.f32 %v5582, %v5615
        %v5622 = vadd.f32 %v5583, %v5615
        %v5623 = vadd.f32 %v5584, %v5615
        %v5624 = vadd.f32 %v5585, %v5615
        %v5625 = vadd.f32 %v5586, %v5615
        %v5626 = vadd.f32 %v5587, %v5615
        %v5627 = vadd.f32 %v5588, %v5615
        %v5628 = vadd.f32 %v5589, %v5615
        %v5629 = vadd.f32 %v5590, %v5615
        %v5630 = vadd.f32 %v5591, %v5615
        %v5631 = vadd.f32 %v5592, %v5615
        %v5632 = vadd.f32 %v5593, %v5615
        %v5633 = vadd.f32 %v5594, %v5615
        %v5634 = vadd.f32 %v5595, %v5615
        %v5635 = vadd.f32 %v5596, %v5615
        %v5636 = vadd.f32 %v5597, %v5615
        %v5637 = vadd.f32 %v5598, %v5615
        %v5638 = vadd.f32 %v5599, %v5615
        %v5639 = vadd.f32 %v5600, %v5615
        %v5640 = vadd.f32 %v5601, %v5615
        %v5641 = vadd.f32 %v5602, %v5615
        %v5642 = vadd.f32 %v5603, %v5615
        %v5643 = vadd.f32 %v5604, %v5615
        %v5644 = vadd.f32 %v5605, %v5615
        %v5645 = vadd.f32 %v5606, %v5615
        %v5646 = vadd.f32 %v5607, %v5615
        %v5647 = vadd.f32 %v5608, %v5615
        %v5648 = vadd.f32 %v5609, %v5615
        %s5649 = sadd.s32 %s336, 2
        %s5650 = smul.u32 %s5649, 3
        %s5651 = smul.addr %s5650, 4
        %s5652 = scalar_lea.vmem %s333, %s5651
        %v5653 = vld [vmem:[%s5652] sm:$0xf]
        %v5654 = vld [vmem:[%s5652 + $0x4] sm:$0xf]
        %v5655 = vld [vmem:[%s5652 + $0x8] sm:$0x1]
        %v5656 = vld [vmem:[%s5652 + $0xc] sm:$0xf]
        %v5657 = vld [vmem:[%s5652 + $0x10] sm:$0xf]
        %v5658 = vld [vmem:[%s5652 + $0x14] sm:$0x1]
        %v5659 = vld [vmem:[%s5652 + $0x18] sm:$0xf]
        %v5660 = vld [vmem:[%s5652 + $0x1c] sm:$0xf]
        %v5661 = vld [vmem:[%s5652 + $0x20] sm:$0x1]
        %v5662 = vld [vmem:[%s5652 + $0x24] sm:$0xf]
        %v5663 = vld [vmem:[%s5652 + $0x28] sm:$0xf]
        %v5664 = vld [vmem:[%s5652 + $0x2c] sm:$0x1]
        %v5665 = vld [vmem:[%s5652 + $0x30] sm:$0xf]
        %v5666 = vld [vmem:[%s5652 + $0x34] sm:$0xf]
        %v5667 = vld [vmem:[%s5652 + $0x38] sm:$0x1]
        %v5668 = vld [vmem:[%s5652 + $0x3c] sm:$0xf]
        %v5669 = vld [vmem:[%s5652 + $0x40] sm:$0xf]
        %v5670 = vld [vmem:[%s5652 + $0x44] sm:$0x1]
        %v5671 = vld [vmem:[%s5652 + $0x48] sm:$0xf]
        %v5672 = vld [vmem:[%s5652 + $0x4c] sm:$0xf]
        %v5673 = vld [vmem:[%s5652 + $0x50] sm:$0x1]
        %v5674 = vld [vmem:[%s5652 + $0x54] sm:$0xf]
        %v5675 = vld [vmem:[%s5652 + $0x58] sm:$0xf]
        %v5676 = vld [vmem:[%s5652 + $0x5c] sm:$0x1]
        %v5677 = vld [vmem:[%s5652 + $0x60] sm:$0xf]
        %v5678 = vld [vmem:[%s5652 + $0x64] sm:$0xf]
        %v5679 = vld [vmem:[%s5652 + $0x68] sm:$0x1]
        %v5680 = vld [vmem:[%s5652 + $0x6c] sm:$0xf]
        %v5681 = vld [vmem:[%s5652 + $0x70] sm:$0xf]
        %v5682 = vld [vmem:[%s5652 + $0x74] sm:$0x1]
        %v5683 = vld [vmem:[%s5652 + $0x78] sm:$0xf]
        %v5684 = vld [vmem:[%s5652 + $0x7c] sm:$0xf]
        %v5685 = vld [vmem:[%s5652 + $0x80] sm:$0x1]
        %v5686 = vld [vmem:[%s5652 + $0x84] sm:$0xf]
        %v5687 = vld [vmem:[%s5652 + $0x88] sm:$0xf]
        %v5688 = vld [vmem:[%s5652 + $0x8c] sm:$0x1]
        %v5689 = vld [vmem:[%s5652 + $0x90] sm:$0xf]
        %v5690 = vld [vmem:[%s5652 + $0x94] sm:$0xf]
        %v5691 = vld [vmem:[%s5652 + $0x98] sm:$0x1]
        %v5692 = vld [vmem:[%s5652 + $0x9c] sm:$0xf]
        %v5693 = vld [vmem:[%s5652 + $0xa0] sm:$0xf]
        %v5694 = vld [vmem:[%s5652 + $0xa4] sm:$0x1]
        %v5695 = vld [vmem:[%s5652 + $0xa8] sm:$0xf]
        %v5696 = vld [vmem:[%s5652 + $0xac] sm:$0xf]
        %v5697 = vld [vmem:[%s5652 + $0xb0] sm:$0x1]
        %v5698 = vld [vmem:[%s5652 + $0xb4] sm:$0xf]
        %v5699 = vld [vmem:[%s5652 + $0xb8] sm:$0xf]
        %v5700 = vld [vmem:[%s5652 + $0xbc] sm:$0x1]
        %v5701 = vunpack.c.l.bf16 %v5653
        %v5702 = vunpack.c.l.bf16 %v5654
        %v5703 = vunpack.c.l.bf16 %v5655
        %v5704 = vunpack.c.l.bf16 %v5656
        %v5705 = vunpack.c.l.bf16 %v5657
        %v5706 = vunpack.c.l.bf16 %v5658
        %v5707 = vunpack.c.l.bf16 %v5659
        %v5708 = vunpack.c.l.bf16 %v5660
        %v5709 = vunpack.c.l.bf16 %v5661
        %v5710 = vunpack.c.l.bf16 %v5662
        %v5711 = vunpack.c.l.bf16 %v5663
        %v5712 = vunpack.c.l.bf16 %v5664
        %v5713 = vunpack.c.l.bf16 %v5665
        %v5714 = vunpack.c.l.bf16 %v5666
        %v5715 = vunpack.c.l.bf16 %v5667
        %v5716 = vunpack.c.l.bf16 %v5668
        %v5717 = vunpack.c.l.bf16 %v5669
        %v5718 = vunpack.c.l.bf16 %v5670
        %v5719 = vunpack.c.l.bf16 %v5671
        %v5720 = vunpack.c.l.bf16 %v5672
        %v5721 = vunpack.c.l.bf16 %v5673
        %v5722 = vunpack.c.l.bf16 %v5674
        %v5723 = vunpack.c.l.bf16 %v5675
        %v5724 = vunpack.c.l.bf16 %v5676
        %v5725 = vunpack.c.l.bf16 %v5677
        %v5726 = vunpack.c.l.bf16 %v5678
        %v5727 = vunpack.c.l.bf16 %v5679
        %v5728 = vunpack.c.l.bf16 %v5680
        %v5729 = vunpack.c.l.bf16 %v5681
        %v5730 = vunpack.c.l.bf16 %v5682
        %v5731 = vunpack.c.l.bf16 %v5683
        %v5732 = vunpack.c.l.bf16 %v5684
        %v5733 = vunpack.c.l.bf16 %v5685
        %v5734 = vunpack.c.l.bf16 %v5686
        %v5735 = vunpack.c.l.bf16 %v5687
        %v5736 = vunpack.c.l.bf16 %v5688
        %v5737 = vunpack.c.l.bf16 %v5689
        %v5738 = vunpack.c.l.bf16 %v5690
        %v5739 = vunpack.c.l.bf16 %v5691
        %v5740 = vunpack.c.l.bf16 %v5692
        %v5741 = vunpack.c.l.bf16 %v5693
        %v5742 = vunpack.c.l.bf16 %v5694
        %v5743 = vunpack.c.l.bf16 %v5695
        %v5744 = vunpack.c.l.bf16 %v5696
        %v5745 = vunpack.c.l.bf16 %v5697
        %v5746 = vunpack.c.l.bf16 %v5698
        %v5747 = vunpack.c.l.bf16 %v5699
        %v5748 = vunpack.c.l.bf16 %v5700
        %vm5797 = vcmask 1046528
        %v5798 = vrot.slane %v5701, 1
        %v5799 = vrot.slane %v5702, 1
        %v5800 = vsel %vm5797, %v5798, %v5799
        %v5801 = vrot.slane %v5703, 1
        %v5802 = vsel %vm5797, %v5799, %v5801
        %v5803 = vrot.slane %v5704, 1
        %v5804 = vrot.slane %v5705, 1
        %v5805 = vsel %vm5797, %v5803, %v5804
        %v5806 = vrot.slane %v5706, 1
        %v5807 = vsel %vm5797, %v5804, %v5806
        %v5808 = vrot.slane %v5707, 1
        %v5809 = vrot.slane %v5708, 1
        %v5810 = vsel %vm5797, %v5808, %v5809
        %v5811 = vrot.slane %v5709, 1
        %v5812 = vsel %vm5797, %v5809, %v5811
        %v5813 = vrot.slane %v5710, 1
        %v5814 = vrot.slane %v5711, 1
        %v5815 = vsel %vm5797, %v5813, %v5814
        %v5816 = vrot.slane %v5712, 1
        %v5817 = vsel %vm5797, %v5814, %v5816
        %v5818 = vrot.slane %v5713, 1
        %v5819 = vrot.slane %v5714, 1
        %v5820 = vsel %vm5797, %v5818, %v5819
        %v5821 = vrot.slane %v5715, 1
        %v5822 = vsel %vm5797, %v5819, %v5821
        %v5823 = vrot.slane %v5716, 1
        %v5824 = vrot.slane %v5717, 1
        %v5825 = vsel %vm5797, %v5823, %v5824
        %v5826 = vrot.slane %v5718, 1
        %v5827 = vsel %vm5797, %v5824, %v5826
        %v5828 = vrot.slane %v5719, 1
        %v5829 = vrot.slane %v5720, 1
        %v5830 = vsel %vm5797, %v5828, %v5829
        %v5831 = vrot.slane %v5721, 1
        %v5832 = vsel %vm5797, %v5829, %v5831
        %v5833 = vrot.slane %v5722, 1
        %v5834 = vrot.slane %v5723, 1
        %v5835 = vsel %vm5797, %v5833, %v5834
        %v5836 = vrot.slane %v5724, 1
        %v5837 = vsel %vm5797, %v5834, %v5836
        %v5838 = vrot.slane %v5725, 1
        %v5839 = vrot.slane %v5726, 1
        %v5840 = vsel %vm5797, %v5838, %v5839
        %v5841 = vrot.slane %v5727, 1
        %v5842 = vsel %vm5797, %v5839, %v5841
        %v5843 = vrot.slane %v5728, 1
        %v5844 = vrot.slane %v5729, 1
        %v5845 = vsel %vm5797, %v5843, %v5844
        %v5846 = vrot.slane %v5730, 1
        %v5847 = vsel %vm5797, %v5844, %v5846
        %v5848 = vrot.slane %v5731, 1
        %v5849 = vrot.slane %v5732, 1
        %v5850 = vsel %vm5797, %v5848, %v5849
        %v5851 = vrot.slane %v5733, 1
        %v5852 = vsel %vm5797, %v5849, %v5851
        %v5853 = vrot.slane %v5734, 1
        %v5854 = vrot.slane %v5735, 1
        %v5855 = vsel %vm5797, %v5853, %v5854
        %v5856 = vrot.slane %v5736, 1
        %v5857 = vsel %vm5797, %v5854, %v5856
        %v5858 = vrot.slane %v5737, 1
        %v5859 = vrot.slane %v5738, 1
        %v5860 = vsel %vm5797, %v5858, %v5859
        %v5861 = vrot.slane %v5739, 1
        %v5862 = vsel %vm5797, %v5859, %v5861
        %v5863 = vrot.slane %v5740, 1
        %v5864 = vrot.slane %v5741, 1
        %v5865 = vsel %vm5797, %v5863, %v5864
        %v5866 = vrot.slane %v5742, 1
        %v5867 = vsel %vm5797, %v5864, %v5866
        %v5868 = vrot.slane %v5743, 1
        %v5869 = vrot.slane %v5744, 1
        %v5870 = vsel %vm5797, %v5868, %v5869
        %v5871 = vrot.slane %v5745, 1
        %v5872 = vsel %vm5797, %v5869, %v5871
        %v5873 = vrot.slane %v5746, 1
        %v5874 = vrot.slane %v5747, 1
        %v5875 = vsel %vm5797, %v5873, %v5874
        %v5876 = vrot.slane %v5748, 1
        %v5877 = vsel %vm5797, %v5874, %v5876
        %v5910 = vadd.f32 %v5617, %v5800
        %v5911 = vadd.f32 %v5618, %v5802
        %v5912 = vadd.f32 %v5619, %v5805
        %v5913 = vadd.f32 %v5620, %v5807
        %v5914 = vadd.f32 %v5621, %v5810
        %v5915 = vadd.f32 %v5622, %v5812
        %v5916 = vadd.f32 %v5623, %v5815
        %v5917 = vadd.f32 %v5624, %v5817
        %v5918 = vadd.f32 %v5625, %v5820
        %v5919 = vadd.f32 %v5626, %v5822
        %v5920 = vadd.f32 %v5627, %v5825
        %v5921 = vadd.f32 %v5628, %v5827
        %v5922 = vadd.f32 %v5629, %v5830
        %v5923 = vadd.f32 %v5630, %v5832
        %v5924 = vadd.f32 %v5631, %v5835
        %v5925 = vadd.f32 %v5632, %v5837
        %v5926 = vadd.f32 %v5633, %v5840
        %v5927 = vadd.f32 %v5634, %v5842
        %v5928 = vadd.f32 %v5635, %v5845
        %v5929 = vadd.f32 %v5636, %v5847
        %v5930 = vadd.f32 %v5637, %v5850
        %v5931 = vadd.f32 %v5638, %v5852
        %v5932 = vadd.f32 %v5639, %v5855
        %v5933 = vadd.f32 %v5640, %v5857
        %v5934 = vadd.f32 %v5641, %v5860
        %v5935 = vadd.f32 %v5642, %v5862
        %v5936 = vadd.f32 %v5643, %v5865
        %v5937 = vadd.f32 %v5644, %v5867
        %v5938 = vadd.f32 %v5645, %v5870
        %v5939 = vadd.f32 %v5646, %v5872
        %v5940 = vadd.f32 %v5647, %v5875
        %v5941 = vadd.f32 %v5648, %v5877
        %v5942 = vpack.c.bf16 %v5911, %v5910
        %v5943 = vpack.c.bf16 %v5913, %v5912
        %v5944 = vpack.c.bf16 %v5915, %v5914
        %v5945 = vpack.c.bf16 %v5917, %v5916
        %v5946 = vpack.c.bf16 %v5919, %v5918
        %v5947 = vpack.c.bf16 %v5921, %v5920
        %v5948 = vpack.c.bf16 %v5923, %v5922
        %v5949 = vpack.c.bf16 %v5925, %v5924
        %v5950 = vpack.c.bf16 %v5927, %v5926
        %v5951 = vpack.c.bf16 %v5929, %v5928
        %v5952 = vpack.c.bf16 %v5931, %v5930
        %v5953 = vpack.c.bf16 %v5933, %v5932
        %v5954 = vpack.c.bf16 %v5935, %v5934
        %v5955 = vpack.c.bf16 %v5937, %v5936
        %v5956 = vpack.c.bf16 %v5939, %v5938
        %v5957 = vpack.c.bf16 %v5941, %v5940
        %v5974 = vunpack.c.l.b16 %v5942
        %v5975 = vunpack.c.h.b16 %v5942
        %v5976 = vunpack.c.l.b16 %v5943
        %v5977 = vunpack.c.h.b16 %v5943
        %v5978 = vunpack.c.l.b16 %v5944
        %v5979 = vunpack.c.h.b16 %v5944
        %v5980 = vunpack.c.l.b16 %v5945
        %v5981 = vunpack.c.h.b16 %v5945
        %v5982 = vunpack.c.l.b16 %v5946
        %v5983 = vunpack.c.h.b16 %v5946
        %v5984 = vunpack.c.l.b16 %v5947
        %v5985 = vunpack.c.h.b16 %v5947
        %v5986 = vunpack.c.l.b16 %v5948
        %v5987 = vunpack.c.h.b16 %v5948
        %v5988 = vunpack.c.l.b16 %v5949
        %v5989 = vunpack.c.h.b16 %v5949
        %v5990 = vunpack.c.l.b16 %v5950
        %v5991 = vunpack.c.h.b16 %v5950
        %v5992 = vunpack.c.l.b16 %v5951
        %v5993 = vunpack.c.h.b16 %v5951
        %v5994 = vunpack.c.l.b16 %v5952
        %v5995 = vunpack.c.h.b16 %v5952
        %v5996 = vunpack.c.l.b16 %v5953
        %v5997 = vunpack.c.h.b16 %v5953
        %v5998 = vunpack.c.l.b16 %v5954
        %v5999 = vunpack.c.h.b16 %v5954
        %v6000 = vunpack.c.l.b16 %v5955
        %v6001 = vunpack.c.h.b16 %v5955
        %v6002 = vunpack.c.l.b16 %v5956
        %v6003 = vunpack.c.h.b16 %v5956
        %v6004 = vunpack.c.l.b16 %v5957
        %v6005 = vunpack.c.h.b16 %v5957
        %v6006 = vpack.c.b16 %v5974, %v5974
        %v6007 = vpack.c.b16 %v5975, %v5975
        %v6008 = vpack.c.b16 %v5976, %v5976
        %v6009 = vpack.c.b16 %v5977, %v5977
        %v6010 = vpack.c.b16 %v5978, %v5978
        %v6011 = vpack.c.b16 %v5979, %v5979
        %v6012 = vpack.c.b16 %v5980, %v5980
        %v6013 = vpack.c.b16 %v5981, %v5981
        %v6014 = vpack.c.b16 %v5982, %v5982
        %v6015 = vpack.c.b16 %v5983, %v5983
        %v6016 = vpack.c.b16 %v5984, %v5984
        %v6017 = vpack.c.b16 %v5985, %v5985
        %v6018 = vpack.c.b16 %v5986, %v5986
        %v6019 = vpack.c.b16 %v5987, %v5987
        %v6020 = vpack.c.b16 %v5988, %v5988
        %v6021 = vpack.c.b16 %v5989, %v5989
        %v6022 = vpack.c.b16 %v5990, %v5990
        %v6023 = vpack.c.b16 %v5991, %v5991
        %v6024 = vpack.c.b16 %v5992, %v5992
        %v6025 = vpack.c.b16 %v5993, %v5993
        %v6026 = vpack.c.b16 %v5994, %v5994
        %v6027 = vpack.c.b16 %v5995, %v5995
        %v6028 = vpack.c.b16 %v5996, %v5996
        %v6029 = vpack.c.b16 %v5997, %v5997
        %v6030 = vpack.c.b16 %v5998, %v5998
        %v6031 = vpack.c.b16 %v5999, %v5999
        %v6032 = vpack.c.b16 %v6000, %v6000
        %v6033 = vpack.c.b16 %v6001, %v6001
        %v6034 = vpack.c.b16 %v6002, %v6002
        %v6035 = vpack.c.b16 %v6003, %v6003
        %v6036 = vpack.c.b16 %v6004, %v6004
        %v6037 = vpack.c.b16 %v6005, %v6005
        %6070 = vst [vmem:[%s328] sm:$0xf] %v6006
        %6071 = vst [vmem:[%s328 + $0x4] sm:$0xf] %v6007
        %6072 = vst [vmem:[%s328 + $0x8] sm:$0xf] %v6008
        %6073 = vst [vmem:[%s328 + $0xc] sm:$0xf] %v6009
        %6074 = vst [vmem:[%s328 + $0x10] sm:$0xf] %v6010
        %6075 = vst [vmem:[%s328 + $0x14] sm:$0xf] %v6011
        %6076 = vst [vmem:[%s328 + $0x18] sm:$0xf] %v6012
        %6077 = vst [vmem:[%s328 + $0x1c] sm:$0xf] %v6013
        %6078 = vst [vmem:[%s328 + $0x20] sm:$0xf] %v6014
        %6079 = vst [vmem:[%s328 + $0x24] sm:$0xf] %v6015
        %6080 = vst [vmem:[%s328 + $0x28] sm:$0xf] %v6016
        %6081 = vst [vmem:[%s328 + $0x2c] sm:$0xf] %v6017
        %6082 = vst [vmem:[%s328 + $0x30] sm:$0xf] %v6018
        %6083 = vst [vmem:[%s328 + $0x34] sm:$0xf] %v6019
        %6084 = vst [vmem:[%s328 + $0x38] sm:$0xf] %v6020
        %6085 = vst [vmem:[%s328 + $0x3c] sm:$0xf] %v6021
        %6086 = vst [vmem:[%s328 + $0x40] sm:$0xf] %v6022
        %6087 = vst [vmem:[%s328 + $0x44] sm:$0xf] %v6023
        %6088 = vst [vmem:[%s328 + $0x48] sm:$0xf] %v6024
        %6089 = vst [vmem:[%s328 + $0x4c] sm:$0xf] %v6025
        %6090 = vst [vmem:[%s328 + $0x50] sm:$0xf] %v6026
        %6091 = vst [vmem:[%s328 + $0x54] sm:$0xf] %v6027
        %6092 = vst [vmem:[%s328 + $0x58] sm:$0xf] %v6028
        %6093 = vst [vmem:[%s328 + $0x5c] sm:$0xf] %v6029
        %6094 = vst [vmem:[%s328 + $0x60] sm:$0xf] %v6030
        %6095 = vst [vmem:[%s328 + $0x64] sm:$0xf] %v6031
        %6096 = vst [vmem:[%s328 + $0x68] sm:$0xf] %v6032
        %6097 = vst [vmem:[%s328 + $0x6c] sm:$0xf] %v6033
        %6098 = vst [vmem:[%s328 + $0x70] sm:$0xf] %v6034
        %6099 = vst [vmem:[%s328 + $0x74] sm:$0xf] %v6035
        %6100 = vst [vmem:[%s328 + $0x78] sm:$0xf] %v6036
        %6101 = vst [vmem:[%s328 + $0x7c] sm:$0xf] %v6037
        %s6102 = sand.u32 %s219, 1
        %s6103 = scalar_lea.sflag [#allocation7], %s6102
        %s6104 = sand.u32 %s219, 1
        %s6105 = smul.addr %s6104, 128
        %s6106 = scalar_lea.vmem [#allocation8], %s6105
        // Predicated region
        $region61: #{tpu_custom_call.1} parent=51 // pred_check
          %p6107 = pneg %p229
        $region62: #{tpu_custom_call.1} parent=51 // pred_check_branch
          %6109 = sbr.rel (%p6107) target = $region64
        $region63: #{tpu_custom_call.1} parent=51 // pred_region
          %s6110 = smul.u32 16, %s29
          %s6112 = ssub.s32 2048, 2048
          %6113 = vsyncadd %s6103, %s6112
          %s6114 = smul.addr %s6110, 2
          %s6115 = smul.addr %s28, 32
          %s6116 = sadd.s32 %s6114, %s6115
          %s6117 = smul.addr %s6116, 64
          %s6118 = scalar_lea.hbm %s8, %s6117
          %s6119 = sshll.u32 %s6106, 4
          %s6120 = int_to_ptr.vmem [resolvable:$true] %s6119
          %6125 = dma.vmem_to_hbm [thread:$0]  %s6120, 2048, %s6118, %s6103, 64, 64, 4
        $region64: #{tpu_custom_call.1} parent=51 // pred_fallthru
          _
      $region52: #{tpu_custom_call.1} parent=5 // pred_fallthru
        _
      %p6126 = scmp.le.s32.totalorder 2, %s19
      // Predicated region
      $region65: #{tpu_custom_call.1} parent=5 // pred_check
        %p6127 = pneg %p6126
      $region66: #{tpu_custom_call.1} parent=5 // pred_check_branch
        %6129 = sbr.rel (%p6127) target = $region68
      $region67: #{tpu_custom_call.1} parent=5 // pred_region
        %s6130 = ssub.s32 %s19, 2
        // Predicated region
        $region69: #{tpu_custom_call.1} parent=67 // pred_check
          %p6131 = pneg %p235
        $region70: #{tpu_custom_call.1} parent=67 // pred_check_branch
          %6133 = sbr.rel (%p6131) target = $region72
        $region71: #{tpu_custom_call.1} parent=67 // pred_region
          %s6134 = sand.u32 %s220, 1
          %s6135 = scalar_lea.sflag [#allocation7], %s6134
          %s6136 = sand.u32 %s220, 1
          %s6137 = smul.addr %s6136, 128
          %s6138 = scalar_lea.vmem [#allocation8], %s6137
          %6139 = dma.done %s6135, 2048
        $region72: #{tpu_custom_call.1} parent=67 // pred_fallthru
          _
      $region68: #{tpu_custom_call.1} parent=5 // pred_fallthru
        _
    $region6: #{tpu_custom_call.1} parent=1 // loop_footer
      %s23 = sadd.s32 1, %s19
    $region7: #{tpu_custom_call.1} parent=1 // loop_footer_branch
      %18 = sbr.rel target = $region3
    $region8: #{tpu_custom_call.1} parent=1 // loop_exit
      _
    %6140 = vsyncpa [#allocation6], 1
    %s6141 = scalar_lea.sflag [#allocation6], 1
    %6142 = vsyncpa %s6141, 1
    %6143 = vsyncpa [#allocation7], 1
    %s6144 = scalar_lea.sflag [#allocation7], 1
    %6145 = vsyncpa %s6144, 1

</llo_original>
